<compile_context>
chip_gen: v7x
topology: tpu7x:2x2x1
jax: 0.10.0
libtpu: 0.0.40
codegen_flags: <defaults>
</compile_context>

<pallas_src>
import functools

import jax
import jax.numpy as jnp
from jax.experimental import pallas as pl
from jax.experimental.pallas import tpu as pltpu

D_IN = 256     # input_dim
D_H = 256      # hidden 0
D_LAT = 128    # latent (hidden 1) — must be 128 for the netlayer
EPS = 1e-5
NEG_SLOPE = 0.2

# rows of the packed (8, 256) f32 bias/param buffer
ROW_BE1, ROW_BD1, ROW_BD2, ROW_BE2, ROW_BN, ROW_GAMMA, ROW_BETA = 0, 1, 2, 3, 4, 5, 6

VMEM_LIMIT = 32 * 1024 * 1024     # safe scoped limit on v5e/v6e/v7x
MAX_TILE = 2048


def _leaky_relu(x):
    return jnp.where(x > 0, x, NEG_SLOPE * x)


def _select_batch_tile(batch):
    """Largest multiple of 256 (capped at 2048) that keeps >= 2 grid steps,
    so the 'parallel' batch axis can still shard across v7x's 2 TensorCores."""
    tile = 256
    cand = 512
    while cand <= MAX_TILE and 2 * cand <= batch:
        tile = cand
        cand += 256
    return tile


def _round_up(a, m):
    return -(-a // m) * m


# --------------------------------------------------------------------------
# Kernel 1: encoder + decoder + netlayer Linear/LeakyReLU, tiled over batch.
# Weights (bf16) + packed biases (f32) are resident; x/out/lat/n tiles stream.
# Also emits per-tile masked partial BN statistics (sum, sum of squares).
# --------------------------------------------------------------------------
def encdec_net_kernel(x_ref, we1_ref, we2_ref, wd1_ref, wd2_ref, wn_ref,
                      bias_ref, out_ref, lat_ref, n_ref, stats_ref,
                      *, true_batch):
    tile = x_ref.shape[0]
    x = x_ref[...].astype(jnp.bfloat16)

    be1 = bias_ref[ROW_BE1:ROW_BE1 + 1, :]            # (1, 256)
    be2 = bias_ref[ROW_BE2:ROW_BE2 + 1, :D_LAT]       # (1, 128)
    bd1 = bias_ref[ROW_BD1:ROW_BD1 + 1, :]            # (1, 256)
    bd2 = bias_ref[ROW_BD2:ROW_BD2 + 1, :]            # (1, 256)
    bn_b = bias_ref[ROW_BN:ROW_BN + 1, :D_LAT]        # (1, 128)

    # ---- encoder ----
    h = jnp.dot(x, we1_ref[...], preferred_element_type=jnp.float32) + be1
    h = _leaky_relu(h)
    lat = jnp.dot(h.astype(jnp.bfloat16), we2_ref[...],
                  preferred_element_type=jnp.float32) + be2
    lat_ref[...] = lat
    lat_bf = lat.astype(jnp.bfloat16)

    # ---- decoder ----
    d = jnp.dot(lat_bf, wd1_ref[...], preferred_element_type=jnp.float32) + bd1
    d = _leaky_relu(d)
    d = jnp.dot(d.astype(jnp.bfloat16), wd2_ref[...],
                preferred_element_type=jnp.float32) + bd2
    out_ref[...] = _leaky_relu(d)

    # ---- netlayer Linear + LeakyReLU (BN applied in the second pass) ----
    n = jnp.dot(lat_bf, wn_ref[...], preferred_element_type=jnp.float32) + bn_b
    n = _leaky_relu(n)
    n_bf = n.astype(jnp.bfloat16)
    n_ref[...] = n_bf                                  # bf16: feeds only BN apply

    # ---- masked partial BN statistics (exclude zero-padded rows) ----
    row = (pl.program_id(0) * tile
           + jax.lax.broadcasted_iota(jnp.int32, (tile, 1), 0))
    valid = (row < true_batch).astype(jnp.float32)     # (tile, 1)
    n32 = n_bf.astype(jnp.float32) * valid             # stats match stored values
    s1 = jnp.sum(n32, axis=0, keepdims=True)           # (1, 128)  sum
    s2 = jnp.sum(n32 * n32, axis=0, keepdims=True)     # (1, 128)  sum of squares
    pad = jnp.zeros((6, D_LAT), jnp.float32)
    stats_ref[...] = jnp.concatenate([s1, s2, pad], axis=0)[None]   # (1, 8, 128)


# --------------------------------------------------------------------------
# Kernel 2: BatchNorm apply — trivially tileable elementwise pass.
# scale/shift (folded gamma*rsqrt(var+eps) and beta - scale*mean) are resident.
# --------------------------------------------------------------------------
def bn_apply_kernel(n_ref, ss_ref, net_ref):
    scale = ss_ref[0:1, :]                             # (1, 128)
    shift = ss_ref[1:2, :]                             # (1, 128)
    net_ref[...] = n_ref[...].astype(jnp.float32) * scale + shift


# --------------------------------------------------------------------------
# Wrapper
# --------------------------------------------------------------------------
def deepae_forward(x, params):
    we1, we2, wd1, wd2, wn, bias_pack = params
    B = x.shape[0]

    tile = _select_batch_tile(B)
    B_pad = _round_up(B, tile)
    n_tiles = B_pad // tile
    x_p = x if B_pad == B else jnp.pad(x, ((0, B_pad - B), (0, 0)))

    # ---- kernel 1: encoder/decoder/net-linear (tiled, parallel batch axis) --
    flops1 = 2 * B_pad * (D_IN * D_H + D_H * D_LAT + D_LAT * D_H
                          + D_H * D_IN + D_LAT * D_LAT)
    bytes1 = (B_pad * D_IN * 4                  # x (read)
              + B_pad * D_IN * 4                # output (write)
              + B_pad * D_LAT * 4               # latent (write)
              + B_pad * D_LAT * 2               # n, bf16 (write)
              + n_tiles * 8 * D_LAT * 4         # partial stats (write)
              + (we1.size + we2.size + wd1.size + wd2.size + wn.size) * 2
              + bias_pack.size * 4)             # resident params, counted once

    kernel1 = functools.partial(encdec_net_kernel, true_batch=B)
    output, latent, n_act, stats = pl.pallas_call(
        kernel1,
        out_shape=(
            jax.ShapeDtypeStruct((B_pad, D_IN), jnp.float32),
            jax.ShapeDtypeStruct((B_pad, D_LAT), jnp.float32),
            jax.ShapeDtypeStruct((B_pad, D_LAT), jnp.bfloat16),
            jax.ShapeDtypeStruct((n_tiles, 8, D_LAT), jnp.float32),
        ),
        grid=(n_tiles,),
        in_specs=[
            pl.BlockSpec((tile, D_IN), lambda i: (i, 0)),    # x: streamed
            pl.BlockSpec((D_IN, D_H), lambda i: (0, 0)),     # weights: resident
            pl.BlockSpec((D_H, D_LAT), lambda i: (0, 0)),
            pl.BlockSpec((D_LAT, D_H), lambda i: (0, 0)),
            pl.BlockSpec((D_H, D_IN), lambda i: (0, 0)),
            pl.BlockSpec((D_LAT, D_LAT), lambda i: (0, 0)),
            pl.BlockSpec((8, D_H), lambda i: (0, 0)),        # packed biases
        ],
        out_specs=(
            pl.BlockSpec((tile, D_IN), lambda i: (i, 0)),
            pl.BlockSpec((tile, D_LAT), lambda i: (i, 0)),
            pl.BlockSpec((tile, D_LAT), lambda i: (i, 0)),
            pl.BlockSpec((1, 8, D_LAT), lambda i: (i, 0, 0)),
        ),
        compiler_params=pltpu.CompilerParams(
            dimension_semantics=("parallel",),
            vmem_limit_bytes=VMEM_LIMIT,
        ),
        cost_estimate=pl.CostEstimate(
            flops=flops1, transcendentals=0, bytes_accessed=bytes1),
    )(x_p, we1, we2, wd1, wd2, wn, bias_pack)

    # ---- tiny reduction of the partial stats -> folded BN scale/shift -------
    s1 = jnp.sum(stats[:, 0, :], axis=0)               # (128,)
    s2 = jnp.sum(stats[:, 1, :], axis=0)               # (128,)
    mean = s1 / B
    var = jnp.maximum(s2 / B - mean * mean, 0.0)        # biased variance
    gamma = bias_pack[ROW_GAMMA, :D_LAT]
    beta = bias_pack[ROW_BETA, :D_LAT]
    scale = gamma * jax.lax.rsqrt(var + EPS)
    shift = beta - scale * mean
    ss = jnp.zeros((8, D_LAT), jnp.float32).at[0].set(scale).at[1].set(shift)

    # ---- kernel 2: BN apply (tiled, parallel batch axis) --------------------
    flops2 = 2 * B_pad * D_LAT
    bytes2 = B_pad * D_LAT * (2 + 4) + 8 * D_LAT * 4

    net = pl.pallas_call(
        bn_apply_kernel,
        out_shape=jax.ShapeDtypeStruct((B_pad, D_LAT), jnp.float32),
        grid=(n_tiles,),
        in_specs=[
            pl.BlockSpec((tile, D_LAT), lambda i: (i, 0)),
            pl.BlockSpec((8, D_LAT), lambda i: (0, 0)),
        ],
        out_specs=pl.BlockSpec((tile, D_LAT), lambda i: (i, 0)),
        compiler_params=pltpu.CompilerParams(
            dimension_semantics=("parallel",),
            vmem_limit_bytes=VMEM_LIMIT,
        ),
        cost_estimate=pl.CostEstimate(
            flops=flops2, transcendentals=0, bytes_accessed=bytes2),
    )(n_act, ss)

    if B_pad != B:
        output, latent, net = output[:B], latent[:B], net[:B]
    return output, latent, net


# --------------------------------------------------------------------------
# Parameter init (mimics PyTorch Linear default U[-1/sqrt(fan_in), +]),
# weights stored transposed (in, out) and cast to bf16; small params packed.
# --------------------------------------------------------------------------
def init_params(key):
    def linear(k, fan_in, fan_out):
        k1, k2 = jax.random.split(k)
        bound = 1.0 / (fan_in ** 0.5)
        w = jax.random.uniform(k1, (fan_in, fan_out), jnp.float32, -bound, bound)
        b = jax.random.uniform(k2, (fan_out,), jnp.float32, -bound, bound)
        return w, b

    keys = jax.random.split(key, 5)
    we1, be1 = linear(keys[0], D_IN, D_H)       # encoder L1
    we2, be2 = linear(keys[1], D_H, D_LAT)      # encoder L2
    wd1, bd1 = linear(keys[2], D_LAT, D_H)      # decoder L1
    wd2, bd2 = linear(keys[3], D_H, D_IN)       # decoder L2
    wn, bn_ = linear(keys[4], D_LAT, D_LAT)     # netlayer Linear
    gamma = jnp.ones((D_LAT,), jnp.float32)     # BatchNorm1d weight
    beta = jnp.zeros((D_LAT,), jnp.float32)     # BatchNorm1d bias

    bias_pack = jnp.zeros((8, D_H), jnp.float32)
    bias_pack = bias_pack.at[ROW_BE1, :D_H].set(be1)
    bias_pack = bias_pack.at[ROW_BD1, :D_H].set(bd1)
    bias_pack = bias_pack.at[ROW_BD2, :D_IN].set(bd2)
    bias_pack = bias_pack.at[ROW_BE2, :D_LAT].set(be2)
    bias_pack = bias_pack.at[ROW_BN, :D_LAT].set(bn_)
    bias_pack = bias_pack.at[ROW_GAMMA, :D_LAT].set(gamma)
    bias_pack = bias_pack.at[ROW_BETA, :D_LAT].set(beta)

    return (we1.astype(jnp.bfloat16), we2.astype(jnp.bfloat16),
            wd1.astype(jnp.bfloat16), wd2.astype(jnp.bfloat16),
            wn.astype(jnp.bfloat16), bias_pack)


# --------------------------------------------------------------------------
# Pure-JAX reference (mirrors the kernel's bf16 matmul inputs / f32 accum and
# the bf16 storage of the netlayer pre-BN activation).
# --------------------------------------------------------------------------
def _reference_forward(x, params):
    we1, we2, wd1, wd2, wn, bias = params
    be1 = bias[ROW_BE1, :D_H]
    be2 = bias[ROW_BE2, :D_LAT]
    bd1 = bias[ROW_BD1, :D_H]
    bd2 = bias[ROW_BD2, :D_IN]
    bn_ = bias[ROW_BN, :D_LAT]
    gamma = bias[ROW_GAMMA, :D_LAT]
    beta = bias[ROW_BETA, :D_LAT]

    lrelu = lambda v: jnp.where(v > 0, v, NEG_SLOPE * v)
    mm = lambda a, w: jnp.dot(a.astype(jnp.bfloat16), w,
                              preferred_element_type=jnp.float32)

    h = lrelu(mm(x, we1) + be1)
    latent = mm(h, we2) + be2
    d = lrelu(mm(latent, wd1) + bd1)
    output = lrelu(mm(d, wd2) + bd2)
    n = lrelu(mm(latent, wn) + bn_)
    n = n.astype(jnp.bfloat16).astype(jnp.float32)      # mirror bf16 n storage
    mean = jnp.mean(n, axis=0, keepdims=True)
    var = jnp.mean((n - mean) ** 2, axis=0, keepdims=True)
    net = gamma * (n - mean) / jnp.sqrt(var + EPS) + beta
    return output, latent, net


if __name__ == "__main__":
    # B=384 is not a multiple of 256 -> exercises padding, masked BN stats and
    # a 2-step parallel grid, while staying small.
    B = 384
    key = jax.random.PRNGKey(0)
    k_x, k_p = jax.random.split(key)
    x = jax.random.normal(k_x, (B, D_IN), jnp.float32)
    params = init_params(k_p)

    fwd = jax.jit(deepae_forward)
    output, latent, net = fwd(x, params)
    jax.block_until_ready((output, latent, net))

    assert output.shape == (B, D_IN)
    assert latent.shape == (B, D_LAT)
    assert net.shape == (B, D_LAT)

    ref_out, ref_lat, ref_net = _reference_forward(x, params)
    assert jnp.allclose(output, ref_out, atol=2e-2, rtol=2e-2)
    assert jnp.allclose(latent, ref_lat, atol=2e-2, rtol=2e-2)
    assert jnp.allclose(net, ref_net, atol=2e-2, rtol=2e-2)

    print("KERNEL_OK")
</pallas_src>

<mosaic_0001>
module attributes {stable_mosaic.version = 11 : i64} {
  func.func @encdec_net_kernel(%arg0: i32, %arg1: memref<256x256xf32, #tpu.memory_space<vmem>>, %arg2: memref<256x256xbf16, #tpu.memory_space<vmem>>, %arg3: memref<256x128xbf16, #tpu.memory_space<vmem>>, %arg4: memref<128x256xbf16, #tpu.memory_space<vmem>>, %arg5: memref<256x256xbf16, #tpu.memory_space<vmem>>, %arg6: memref<128x128xbf16, #tpu.memory_space<vmem>>, %arg7: memref<8x256xf32, #tpu.memory_space<vmem>>, %arg8: memref<256x256xf32, #tpu.memory_space<vmem>>, %arg9: memref<256x128xf32, #tpu.memory_space<vmem>>, %arg10: memref<256x128xbf16, #tpu.memory_space<vmem>>, %arg11: memref<1x8x128xf32, #tpu.memory_space<vmem>>) attributes {dimension_semantics = [#tpu.dimension_semantics<parallel>], iteration_bounds = array<i64: 2>, scalar_prefetch = 0 : i64, scratch_operands = 0 : i64, tpu.core_type = #tpu.core_type<tc>, window_params = [{transform_indices = @transform_0, window_bounds = array<i64: 256, 256>}, {pipeline_mode = #tpu.pipeline_mode<synchronous>, transform_indices = @transform_1, window_bounds = array<i64: 256, 256>}, {pipeline_mode = #tpu.pipeline_mode<synchronous>, transform_indices = @transform_2, window_bounds = array<i64: 256, 128>}, {pipeline_mode = #tpu.pipeline_mode<synchronous>, transform_indices = @transform_3, window_bounds = array<i64: 128, 256>}, {pipeline_mode = #tpu.pipeline_mode<synchronous>, transform_indices = @transform_4, window_bounds = array<i64: 256, 256>}, {pipeline_mode = #tpu.pipeline_mode<synchronous>, transform_indices = @transform_5, window_bounds = array<i64: 128, 128>}, {pipeline_mode = #tpu.pipeline_mode<synchronous>, transform_indices = @transform_6, window_bounds = array<i64: 8, 256>}, {transform_indices = @transform_7, window_bounds = array<i64: 256, 256>}, {transform_indices = @transform_8, window_bounds = array<i64: 256, 128>}, {transform_indices = @transform_9, window_bounds = array<i64: 256, 128>}, {transform_indices = @transform_10, window_bounds = array<i64: 1, 8, 128>}]} {
    %c0 = arith.constant 0 : index
    %c0_0 = arith.constant 0 : index
    %0 = vector.load %arg1[%c0, %c0_0] : memref<256x256xf32, #tpu.memory_space<vmem>>, vector<256x256xf32>
    %1 = arith.truncf %0 : vector<256x256xf32> to vector<256x256xbf16>
    %c0_1 = arith.constant 0 : index
    %c0_2 = arith.constant 0 : index
    %2 = vector.load %arg7[%c0_1, %c0_2] : memref<8x256xf32, #tpu.memory_space<vmem>>, vector<1x256xf32>
    %c3 = arith.constant 3 : index
    %c0_3 = arith.constant 0 : index
    %3 = vector.load %arg7[%c3, %c0_3] : memref<8x256xf32, #tpu.memory_space<vmem>>, vector<1x128xf32>
    %c1 = arith.constant 1 : index
    %c0_4 = arith.constant 0 : index
    %4 = vector.load %arg7[%c1, %c0_4] : memref<8x256xf32, #tpu.memory_space<vmem>>, vector<1x256xf32>
    %c2 = arith.constant 2 : index
    %c0_5 = arith.constant 0 : index
    %5 = vector.load %arg7[%c2, %c0_5] : memref<8x256xf32, #tpu.memory_space<vmem>>, vector<1x256xf32>
    %c4 = arith.constant 4 : index
    %c0_6 = arith.constant 0 : index
    %6 = vector.load %arg7[%c4, %c0_6] : memref<8x256xf32, #tpu.memory_space<vmem>>, vector<1x128xf32>
    %c0_7 = arith.constant 0 : index
    %c0_8 = arith.constant 0 : index
    %7 = vector.load %arg2[%c0_7, %c0_8] : memref<256x256xbf16, #tpu.memory_space<vmem>>, vector<256x256xbf16>
    %cst = arith.constant dense<0.000000e+00> : vector<256x256xf32>
    %8 = tpu.matmul %1, %7, %cst {dimension_numbers = #tpu.dot_dimension_numbers<[1], [0], [0], [1], [0, 0, 1, 1], [], []>} : vector<256x256xbf16>, vector<256x256xbf16>, vector<256x256xf32> -> vector<256x256xf32>
    %9 = vector.broadcast %2 : vector<1x256xf32> to vector<256x256xf32>
    %10 = arith.addf %8, %9 : vector<256x256xf32>
    %cst_9 = arith.constant 0.000000e+00 : f32
    %11 = vector.broadcast %cst_9 : f32 to vector<256x256xf32>
    %12 = arith.cmpf ogt, %10, %11 : vector<256x256xf32>
    %cst_10 = arith.constant 2.000000e-01 : f32
    %13 = vector.broadcast %cst_10 : f32 to vector<256x256xf32>
    %14 = arith.mulf %13, %10 : vector<256x256xf32>
    %15 = arith.select %12, %10, %14 : vector<256x256xi1>, vector<256x256xf32>
    %16 = arith.truncf %15 : vector<256x256xf32> to vector<256x256xbf16>
    %c0_11 = arith.constant 0 : index
    %c0_12 = arith.constant 0 : index
    %17 = vector.load %arg3[%c0_11, %c0_12] : memref<256x128xbf16, #tpu.memory_space<vmem>>, vector<256x128xbf16>
    %cst_13 = arith.constant dense<0.000000e+00> : vector<256x128xf32>
    %18 = tpu.matmul %16, %17, %cst_13 {dimension_numbers = #tpu.dot_dimension_numbers<[1], [0], [0], [1], [0, 0, 1, 1], [], []>} : vector<256x256xbf16>, vector<256x128xbf16>, vector<256x128xf32> -> vector<256x128xf32>
    %19 = vector.broadcast %3 : vector<1x128xf32> to vector<256x128xf32>
    %20 = arith.addf %18, %19 : vector<256x128xf32>
    %c0_14 = arith.constant 0 : index
    %c0_15 = arith.constant 0 : index
    %21 = vector.load %arg9[%c0_14, %c0_15] : memref<256x128xf32, #tpu.memory_space<vmem>>, vector<256x128xf32>
    tpu.vector_store %arg9[%c0_14, %c0_15], %20 {strides = array<i32>} : memref<256x128xf32, #tpu.memory_space<vmem>>, vector<256x128xf32>,
    %22 = arith.truncf %20 : vector<256x128xf32> to vector<256x128xbf16>
    %c0_16 = arith.constant 0 : index
    %c0_17 = arith.constant 0 : index
    %23 = vector.load %arg4[%c0_16, %c0_17] : memref<128x256xbf16, #tpu.memory_space<vmem>>, vector<128x256xbf16>
    %cst_18 = arith.constant dense<0.000000e+00> : vector<256x256xf32>
    %24 = tpu.matmul %22, %23, %cst_18 {dimension_numbers = #tpu.dot_dimension_numbers<[1], [0], [0], [1], [0, 0, 1, 1], [], []>} : vector<256x128xbf16>, vector<128x256xbf16>, vector<256x256xf32> -> vector<256x256xf32>
    %25 = vector.broadcast %4 : vector<1x256xf32> to vector<256x256xf32>
    %26 = arith.addf %24, %25 : vector<256x256xf32>
    %cst_19 = arith.constant 0.000000e+00 : f32
    %27 = vector.broadcast %cst_19 : f32 to vector<256x256xf32>
    %28 = arith.cmpf ogt, %26, %27 : vector<256x256xf32>
    %cst_20 = arith.constant 2.000000e-01 : f32
    %29 = vector.broadcast %cst_20 : f32 to vector<256x256xf32>
    %30 = arith.mulf %29, %26 : vector<256x256xf32>
    %31 = arith.select %28, %26, %30 : vector<256x256xi1>, vector<256x256xf32>
    %32 = arith.truncf %31 : vector<256x256xf32> to vector<256x256xbf16>
    %c0_21 = arith.constant 0 : index
    %c0_22 = arith.constant 0 : index
    %33 = vector.load %arg5[%c0_21, %c0_22] : memref<256x256xbf16, #tpu.memory_space<vmem>>, vector<256x256xbf16>
    %cst_23 = arith.constant dense<0.000000e+00> : vector<256x256xf32>
    %34 = tpu.matmul %32, %33, %cst_23 {dimension_numbers = #tpu.dot_dimension_numbers<[1], [0], [0], [1], [0, 0, 1, 1], [], []>} : vector<256x256xbf16>, vector<256x256xbf16>, vector<256x256xf32> -> vector<256x256xf32>
    %35 = vector.broadcast %5 : vector<1x256xf32> to vector<256x256xf32>
    %36 = arith.addf %34, %35 : vector<256x256xf32>
    %cst_24 = arith.constant 0.000000e+00 : f32
    %37 = vector.broadcast %cst_24 : f32 to vector<256x256xf32>
    %38 = arith.cmpf ogt, %36, %37 : vector<256x256xf32>
    %cst_25 = arith.constant 2.000000e-01 : f32
    %39 = vector.broadcast %cst_25 : f32 to vector<256x256xf32>
    %40 = arith.mulf %39, %36 : vector<256x256xf32>
    %41 = arith.select %38, %36, %40 : vector<256x256xi1>, vector<256x256xf32>
    %c0_26 = arith.constant 0 : index
    %c0_27 = arith.constant 0 : index
    %42 = vector.load %arg8[%c0_26, %c0_27] : memref<256x256xf32, #tpu.memory_space<vmem>>, vector<256x256xf32>
    tpu.vector_store %arg8[%c0_26, %c0_27], %41 {strides = array<i32>} : memref<256x256xf32, #tpu.memory_space<vmem>>, vector<256x256xf32>,
    %c0_28 = arith.constant 0 : index
    %c0_29 = arith.constant 0 : index
    %43 = vector.load %arg6[%c0_28, %c0_29] : memref<128x128xbf16, #tpu.memory_space<vmem>>, vector<128x128xbf16>
    %cst_30 = arith.constant dense<0.000000e+00> : vector<256x128xf32>
    %44 = tpu.matmul %22, %43, %cst_30 {dimension_numbers = #tpu.dot_dimension_numbers<[1], [0], [0], [1], [0, 0, 1, 1], [], []>} : vector<256x128xbf16>, vector<128x128xbf16>, vector<256x128xf32> -> vector<256x128xf32>
    %45 = vector.broadcast %6 : vector<1x128xf32> to vector<256x128xf32>
    %46 = arith.addf %44, %45 : vector<256x128xf32>
    %cst_31 = arith.constant 0.000000e+00 : f32
    %47 = vector.broadcast %cst_31 : f32 to vector<256x128xf32>
    %48 = arith.cmpf ogt, %46, %47 : vector<256x128xf32>
    %cst_32 = arith.constant 2.000000e-01 : f32
    %49 = vector.broadcast %cst_32 : f32 to vector<256x128xf32>
    %50 = arith.mulf %49, %46 : vector<256x128xf32>
    %51 = arith.select %48, %46, %50 : vector<256x128xi1>, vector<256x128xf32>
    %52 = arith.truncf %51 : vector<256x128xf32> to vector<256x128xbf16>
    %c0_33 = arith.constant 0 : index
    %c0_34 = arith.constant 0 : index
    %53 = vector.load %arg10[%c0_33, %c0_34] : memref<256x128xbf16, #tpu.memory_space<vmem>>, vector<256x128xbf16>
    tpu.vector_store %arg10[%c0_33, %c0_34], %52 {strides = array<i32>} : memref<256x128xbf16, #tpu.memory_space<vmem>>, vector<256x128xbf16>,
    %c256_i32 = arith.constant 256 : i32
    %54 = arith.muli %arg0, %c256_i32 : i32
    %55 = tpu.iota {dimensions = array<i32: 0>} : vector<256x1xi32>
    %56 = vector.broadcast %54 : i32 to vector<256x1xi32>
    %57 = arith.addi %56, %55 : vector<256x1xi32>
    %c384_i32 = arith.constant 384 : i32
    %58 = vector.broadcast %c384_i32 : i32 to vector<256x1xi32>
    %59 = arith.cmpi slt, %57, %58 : vector<256x1xi32>
    %60 = arith.extui %59 : vector<256x1xi1> to vector<256x1xi32>
    %61 = arith.sitofp %60 : vector<256x1xi32> to vector<256x1xf32>
    %62 = arith.extf %52 : vector<256x128xbf16> to vector<256x128xf32>
    %63 = vector.broadcast %61 : vector<256x1xf32> to vector<256x128xf32>
    %64 = arith.mulf %62, %63 : vector<256x128xf32>
    %cst_35 = arith.constant dense<0.000000e+00> : vector<128xf32>
    %65 = vector.multi_reduction <add>, %64, %cst_35 [0] : vector<256x128xf32> to vector<128xf32>
    %66 = vector.shape_cast %65 : vector<128xf32> to vector<1x128xf32>
    %67 = arith.mulf %64, %64 : vector<256x128xf32>
    %cst_36 = arith.constant dense<0.000000e+00> : vector<128xf32>
    %68 = vector.multi_reduction <add>, %67, %cst_36 [0] : vector<256x128xf32> to vector<128xf32>
    %69 = vector.shape_cast %68 : vector<128xf32> to vector<1x128xf32>
    %cst_37 = arith.constant 0.000000e+00 : f32
    %70 = vector.broadcast %cst_37 : f32 to vector<6x128xf32>
    %71 = tpu.concatenate %66, %69, %70 in 0 : vector<1x128xf32>, vector<1x128xf32>, vector<6x128xf32> -> vector<8x128xf32>
    %72 = vector.shape_cast %71 : vector<8x128xf32> to vector<1x8x128xf32>
    %c0_38 = arith.constant 0 : index
    %c0_39 = arith.constant 0 : index
    %c0_40 = arith.constant 0 : index
    %73 = vector.load %arg11[%c0_38, %c0_39, %c0_40] : memref<1x8x128xf32, #tpu.memory_space<vmem>>, vector<1x8x128xf32>
    tpu.vector_store %arg11[%c0_38, %c0_39, %c0_40], %72 {strides = array<i32>} : memref<1x8x128xf32, #tpu.memory_space<vmem>>, vector<1x8x128xf32>,
    return
  }
  func.func @transform_0(%arg0: i32) -> (i32, i32) {
    %c0_i32 = arith.constant 0 : i32
    %c0_i32_0 = arith.constant 0 : i32
    return %arg0, %c0_i32 : i32, i32
  }
  func.func @transform_1(%arg0: i32) -> (i32, i32) {
    %c0_i32 = arith.constant 0 : i32
    %c0_i32_0 = arith.constant 0 : i32
    %c0_i32_1 = arith.constant 0 : i32
    return %c0_i32, %c0_i32_0 : i32, i32
  }
  func.func @transform_2(%arg0: i32) -> (i32, i32) {
    %c0_i32 = arith.constant 0 : i32
    %c0_i32_0 = arith.constant 0 : i32
    %c0_i32_1 = arith.constant 0 : i32
    return %c0_i32, %c0_i32_0 : i32, i32
  }
  func.func @transform_3(%arg0: i32) -> (i32, i32) {
    %c0_i32 = arith.constant 0 : i32
    %c0_i32_0 = arith.constant 0 : i32
    %c0_i32_1 = arith.constant 0 : i32
    return %c0_i32, %c0_i32_0 : i32, i32
  }
  func.func @transform_4(%arg0: i32) -> (i32, i32) {
    %c0_i32 = arith.constant 0 : i32
    %c0_i32_0 = arith.constant 0 : i32
    %c0_i32_1 = arith.constant 0 : i32
    return %c0_i32, %c0_i32_0 : i32, i32
  }
  func.func @transform_5(%arg0: i32) -> (i32, i32) {
    %c0_i32 = arith.constant 0 : i32
    %c0_i32_0 = arith.constant 0 : i32
    %c0_i32_1 = arith.constant 0 : i32
    return %c0_i32, %c0_i32_0 : i32, i32
  }
  func.func @transform_6(%arg0: i32) -> (i32, i32) {
    %c0_i32 = arith.constant 0 : i32
    %c0_i32_0 = arith.constant 0 : i32
    %c0_i32_1 = arith.constant 0 : i32
    return %c0_i32, %c0_i32_0 : i32, i32
  }
  func.func @transform_7(%arg0: i32) -> (i32, i32) {
    %c0_i32 = arith.constant 0 : i32
    %c0_i32_0 = arith.constant 0 : i32
    return %arg0, %c0_i32 : i32, i32
  }
  func.func @transform_8(%arg0: i32) -> (i32, i32) {
    %c0_i32 = arith.constant 0 : i32
    %c0_i32_0 = arith.constant 0 : i32
    return %arg0, %c0_i32 : i32, i32
  }
  func.func @transform_9(%arg0: i32) -> (i32, i32) {
    %c0_i32 = arith.constant 0 : i32
    %c0_i32_0 = arith.constant 0 : i32
    return %arg0, %c0_i32 : i32, i32
  }
  func.func @transform_10(%arg0: i32) -> (i32, i32, i32) {
    %c0_i32 = arith.constant 0 : i32
    %c0_i32_0 = arith.constant 0 : i32
    %c0_i32_1 = arith.constant 0 : i32
    return %arg0, %c0_i32, %c0_i32_0 : i32, i32, i32
  }
}

module attributes {stable_mosaic.version = 11 : i64} {
  func.func @bn_apply_kernel(%arg0: i32, %arg1: memref<256x128xbf16, #tpu.memory_space<vmem>>, %arg2: memref<8x128xf32, #tpu.memory_space<vmem>>, %arg3: memref<256x128xf32, #tpu.memory_space<vmem>>) attributes {dimension_semantics = [#tpu.dimension_semantics<parallel>], iteration_bounds = array<i64: 2>, scalar_prefetch = 0 : i64, scratch_operands = 0 : i64, tpu.core_type = #tpu.core_type<tc>, window_params = [{transform_indices = @transform_0, window_bounds = array<i64: 256, 128>}, {pipeline_mode = #tpu.pipeline_mode<synchronous>, transform_indices = @transform_1, window_bounds = array<i64: 8, 128>}, {transform_indices = @transform_2, window_bounds = array<i64: 256, 128>}]} {
    %c0 = arith.constant 0 : index
    %c0_0 = arith.constant 0 : index
    %0 = vector.load %arg2[%c0, %c0_0] : memref<8x128xf32, #tpu.memory_space<vmem>>, vector<1x128xf32>
    %c1 = arith.constant 1 : index
    %c0_1 = arith.constant 0 : index
    %1 = vector.load %arg2[%c1, %c0_1] : memref<8x128xf32, #tpu.memory_space<vmem>>, vector<1x128xf32>
    %c0_2 = arith.constant 0 : index
    %c0_3 = arith.constant 0 : index
    %2 = vector.load %arg1[%c0_2, %c0_3] : memref<256x128xbf16, #tpu.memory_space<vmem>>, vector<256x128xbf16>
    %3 = arith.extf %2 : vector<256x128xbf16> to vector<256x128xf32>
    %4 = vector.broadcast %0 : vector<1x128xf32> to vector<256x128xf32>
    %5 = arith.mulf %3, %4 : vector<256x128xf32>
    %6 = vector.broadcast %1 : vector<1x128xf32> to vector<256x128xf32>
    %7 = arith.addf %5, %6 : vector<256x128xf32>
    %c0_4 = arith.constant 0 : index
    %c0_5 = arith.constant 0 : index
    %8 = vector.load %arg3[%c0_4, %c0_5] : memref<256x128xf32, #tpu.memory_space<vmem>>, vector<256x128xf32>
    tpu.vector_store %arg3[%c0_4, %c0_5], %7 {strides = array<i32>} : memref<256x128xf32, #tpu.memory_space<vmem>>, vector<256x128xf32>,
    return
  }
  func.func @transform_0(%arg0: i32) -> (i32, i32) {
    %c0_i32 = arith.constant 0 : i32
    %c0_i32_0 = arith.constant 0 : i32
    return %arg0, %c0_i32 : i32, i32
  }
  func.func @transform_1(%arg0: i32) -> (i32, i32) {
    %c0_i32 = arith.constant 0 : i32
    %c0_i32_0 = arith.constant 0 : i32
    %c0_i32_1 = arith.constant 0 : i32
    return %c0_i32, %c0_i32_0 : i32, i32
  }
  func.func @transform_2(%arg0: i32) -> (i32, i32) {
    %c0_i32 = arith.constant 0 : i32
    %c0_i32_0 = arith.constant 0 : i32
    return %arg0, %c0_i32 : i32, i32
  }
}

</mosaic_0001>

<llo_original>
// kernel: deepae_forward.3
$region0: #{deepae_forward.3}
  #allocation0 [shape = 'u32[]', space=smem, size = 0x4, offset = 0x4, fixed_abs, tag = 'smem constant byte address 0x4 - core index']
  #allocation1 [shape = 'u32[144,128]{1,0:T(1,128)}', space=vmem, size = 0x12000, scoped, tag = 'internal scratch']
  %s0 = inlined_call_operand.vmem [shape: bf16[512,128], index: 0, kind: input, shape index: {}]
  %s1 = inlined_call_operand.vmem [shape: f32[8,128], index: 1, kind: input, shape index: {}]
  %s2 = inlined_call_operand.vmem [shape: f32[512,128], index: 2, kind: output, shape index: {}]
  %s3 = sld [smem:[#allocation0]]
  $region41: #{deepae_forward.3} parent=0
    _
  %s5 = ssub.s32 1, %s3
  %s6 = scalar_select 0, %s5, %s3
  loop: start=0, step=1, limit=4
  $region2: #{deepae_forward.3} parent=0 // loop_pre_header
    _
  $region3: #{deepae_forward.3} parent=0 // loop_header
    %s8 = sphi 0, %s12
    %p9 = scmp.ge.s32.totalorder %s8, 4
    %s18 = sphi 0, %s20
    %s21 = sphi 0, %s18
    %s22 = sphi 0, %s21
    %s38 = sphi 0, %s22
    %s42 = sphi 0, %s42
    %s44 = sphi 0, %s42
    %s45 = sphi 0, %s44
    %s59 = sphi 0, %s45
    %s65 = sphi 0, %s67
    %s68 = sphi 0, %s65
    %s69 = sphi 0, %s68
    %s85 = sphi 0, %s69
  $region4: #{deepae_forward.3} parent=0 // loop_header_branch
    %11 = sbr.rel (%p9) target = $region8
  $region5: #{deepae_forward.3} parent=0 // loop_body
    %s13 = ssub.s32 %s8, 1
    %s14 = ssub.s32 %s8, 2
    %s15 = sadd.s32 %s8, 1
    %s16 = ssub.s32 %s8, %s15
    %p17 = scmp.eq.s32.totalorder %s16, 0
    %s19 = sadd.s32 %s18, 1
    %s20 = scalar_select %p17, %s18, %s19
    %p23 = pneg %p17
    %p24 = scmp.eq.s32.totalorder %s8, 1
    %p25 = por %p23, %p24
    %p26 = scmp.ne.s32.totalorder %s18, %s21
    %p27 = scmp.eq.s32.totalorder %s8, 0
    %p28 = por %p26, %p27
    %p29 = scmp.ne.s32.totalorder %s18, %s21
    %p30 = scmp.eq.s32.totalorder %s13, 1
    %p31 = por %p29, %p30
    %p32 = scmp.ne.s32.totalorder %s21, %s22
    %p33 = scmp.eq.s32.totalorder %s13, 0
    %p34 = por %p32, %p33
    %p35 = scmp.ne.s32.totalorder %s21, %s22
    %p36 = scmp.eq.s32.totalorder %s14, 1
    %p37 = por %p35, %p36
    %p39 = scmp.ne.s32.totalorder %s22, %s38
    %p40 = scmp.eq.s32.totalorder %s14, 0
    %p41 = por %p39, %p40
    %s43 = sadd.s32 %s42, 1
    %p46 = scmp.eq.s32.totalorder %s8, 1
    %p47 = scmp.ne.s32.totalorder %s42, %s44
    %p48 = scmp.eq.s32.totalorder %s8, 0
    %p49 = por %p47, %p48
    %p50 = scmp.ne.s32.totalorder %s42, %s44
    %p51 = scmp.eq.s32.totalorder %s13, 1
    %p52 = por %p50, %p51
    %p53 = scmp.ne.s32.totalorder %s44, %s45
    %p54 = scmp.eq.s32.totalorder %s13, 0
    %p55 = por %p53, %p54
    %p56 = scmp.ne.s32.totalorder %s44, %s45
    %p57 = scmp.eq.s32.totalorder %s14, 1
    %p58 = por %p56, %p57
    %p60 = scmp.ne.s32.totalorder %s45, %s59
    %p61 = scmp.eq.s32.totalorder %s14, 0
    %p62 = por %p60, %p61
    %s63 = ssub.s32 %s8, %s15
    %p64 = scmp.eq.s32.totalorder %s63, 0
    %s66 = sadd.s32 %s65, 1
    %s67 = scalar_select %p64, %s65, %s66
    %p70 = pneg %p64
    %p71 = scmp.eq.s32.totalorder %s8, 1
    %p72 = por %p70, %p71
    %p73 = scmp.ne.s32.totalorder %s65, %s68
    %p74 = scmp.eq.s32.totalorder %s8, 0
    %p75 = por %p73, %p74
    %p76 = scmp.ne.s32.totalorder %s65, %s68
    %p77 = scmp.eq.s32.totalorder %s13, 1
    %p78 = por %p76, %p77
    %p79 = scmp.ne.s32.totalorder %s68, %s69
    %p80 = scmp.eq.s32.totalorder %s13, 0
    %p81 = por %p79, %p80
    %p82 = scmp.ne.s32.totalorder %s68, %s69
    %p83 = scmp.eq.s32.totalorder %s14, 1
    %p84 = por %p82, %p83
    %p86 = scmp.ne.s32.totalorder %s69, %s85
    %p87 = scmp.eq.s32.totalorder %s14, 0
    %p88 = por %p86, %p87
    %p89 = scmp.le.s32.totalorder 1, %s8
    %p90 = scmp.lt.s32.totalorder %s8, 3
    %p91 = pnand %p89, %p90
    %p92 = pneg %p91
    // Predicated region
    $region9: #{deepae_forward.3} parent=5 // pred_check
      _
    $region10: #{deepae_forward.3} parent=5 // pred_check_branch
      %94 = sbr.rel (%p91) target = $region12
    $region11: #{deepae_forward.3} parent=5 // pred_region
      %s95 = ssub.s32 %s8, 1
      // Predicated region
      $region13: #{deepae_forward.3} parent=11 // pred_check
        %p96 = pneg %p55
      $region14: #{deepae_forward.3} parent=11 // pred_check_branch
        %98 = sbr.rel (%p96) target = $region16
      $region15: #{deepae_forward.3} parent=11 // pred_region
        _
      $region16: #{deepae_forward.3} parent=11 // pred_fallthru
        _
    $region12: #{deepae_forward.3} parent=5 // pred_fallthru
      _
    %p99 = scmp.lt.s32.totalorder %s8, 2
    // Predicated region
    $region17: #{deepae_forward.3} parent=5 // pred_check
      %p100 = pneg %p99
    $region18: #{deepae_forward.3} parent=5 // pred_check_branch
      %102 = sbr.rel (%p100) target = $region20
    $region19: #{deepae_forward.3} parent=5 // pred_region
      // Predicated region
      $region21: #{deepae_forward.3} parent=19 // pred_check
        %p103 = pneg %p28
      $region22: #{deepae_forward.3} parent=19 // pred_check_branch
        %105 = sbr.rel (%p103) target = $region24
      $region23: #{deepae_forward.3} parent=19 // pred_region
        %s106 = smul.u32 32, %s8
        %p107 = scmp.lt.s32.totalorder %s106, 63
        %s108 = scalar_select %p107, %s106, 63
        %s109 = smul.addr %s108, 4
        %s110 = scalar_lea.vmem %s0, %s109
        %s111 = smul.u32 32, %s8
      $region24: #{deepae_forward.3} parent=19 // pred_fallthru
        _
    $region20: #{deepae_forward.3} parent=5 // pred_fallthru
      _
    %p112 = scmp.le.s32.totalorder 1, %s8
    %p113 = scmp.lt.s32.totalorder %s8, 3
    %p114 = pnand %p112, %p113
    %p115 = pneg %p114
    // Predicated region
    $region25: #{deepae_forward.3} parent=5 // pred_check
      _
    $region26: #{deepae_forward.3} parent=5 // pred_check_branch
      %117 = sbr.rel (%p114) target = $region28
    $region27: #{deepae_forward.3} parent=5 // pred_region
      %s118 = ssub.s32 %s8, 1
      %s119 = smul.u32 32, %s13
      %p120 = scmp.lt.s32.totalorder %s119, 63
      %s121 = scalar_select %p120, %s119, 63
      %s122 = smul.addr %s121, 4
      %s123 = scalar_lea.vmem %s0, %s122
      %p124 = pneg %p34
      %p125 = pneg %p31
      %p126 = pneg %p55
      %p127 = pneg %p52
      %p128 = pneg %p81
      %p129 = pneg %p78
      %s130 = smul.u32 32, %s13
      %p131 = scmp.lt.s32.totalorder %s130, 63
      %s132 = scalar_select %p131, %s130, 63
      %s133 = smul.addr %s132, 8
      %s134 = scalar_lea.vmem %s2, %s133
      %s135 = smul.u32 32, %s13
      %p136 = scmp.lt.s32.totalorder %s135, 63
      %s137 = scalar_select %p136, %s135, 63
      %s138 = smul.addr %s137, 4
      %s139 = scalar_lea.vmem %s0, %s138
      %s140 = smul.u32 32, %s13
      %s141 = smul.u32 32, %s13
      %p142 = scmp.lt.s32.totalorder %s141, 63
      %s143 = scalar_select %p142, %s141, 63
      %s144 = smul.addr %s143, 8
      %s145 = scalar_lea.vmem %s2, %s144
      %s146 = smul.u32 32, %s13
      %v147 = vld [vmem:[%s1] sm:$0x1]
      %v148 = vld [vmem:[%s1 + $0x1] sm:$0x1]
      %v149 = vld [vmem:[%s139] sm:$0xf]
      %v150 = vld [vmem:[%s139 + $0x4] sm:$0xf]
      %v151 = vld [vmem:[%s139 + $0x8] sm:$0xf]
      %v152 = vld [vmem:[%s139 + $0xc] sm:$0xf]
      %v153 = vld [vmem:[%s139 + $0x10] sm:$0xf]
      %v154 = vld [vmem:[%s139 + $0x14] sm:$0xf]
      %v155 = vld [vmem:[%s139 + $0x18] sm:$0xf]
      %v156 = vld [vmem:[%s139 + $0x1c] sm:$0xf]
      %v157 = vld [vmem:[%s139 + $0x20] sm:$0xf]
      %v158 = vld [vmem:[%s139 + $0x24] sm:$0xf]
      %v159 = vld [vmem:[%s139 + $0x28] sm:$0xf]
      %v160 = vld [vmem:[%s139 + $0x2c] sm:$0xf]
      %v161 = vld [vmem:[%s139 + $0x30] sm:$0xf]
      %v162 = vld [vmem:[%s139 + $0x34] sm:$0xf]
      %v163 = vld [vmem:[%s139 + $0x38] sm:$0xf]
      %v164 = vld [vmem:[%s139 + $0x3c] sm:$0xf]
      %v165 = vld [vmem:[%s139 + $0x40] sm:$0xf]
      %v166 = vld [vmem:[%s139 + $0x44] sm:$0xf]
      %v167 = vld [vmem:[%s139 + $0x48] sm:$0xf]
      %v168 = vld [vmem:[%s139 + $0x4c] sm:$0xf]
      %v169 = vld [vmem:[%s139 + $0x50] sm:$0xf]
      %v170 = vld [vmem:[%s139 + $0x54] sm:$0xf]
      %v171 = vld [vmem:[%s139 + $0x58] sm:$0xf]
      %v172 = vld [vmem:[%s139 + $0x5c] sm:$0xf]
      %v173 = vld [vmem:[%s139 + $0x60] sm:$0xf]
      %v174 = vld [vmem:[%s139 + $0x64] sm:$0xf]
      %v175 = vld [vmem:[%s139 + $0x68] sm:$0xf]
      %v176 = vld [vmem:[%s139 + $0x6c] sm:$0xf]
      %v177 = vld [vmem:[%s139 + $0x70] sm:$0xf]
      %v178 = vld [vmem:[%s139 + $0x74] sm:$0xf]
      %v179 = vld [vmem:[%s139 + $0x78] sm:$0xf]
      %v180 = vld [vmem:[%s139 + $0x7c] sm:$0xf]
      %v181 = vunpack.c.l.bf16 %v149
      %v182 = vunpack.c.l.bf16 %v150
      %v183 = vunpack.c.l.bf16 %v151
      %v184 = vunpack.c.l.bf16 %v152
      %v185 = vunpack.c.l.bf16 %v153
      %v186 = vunpack.c.l.bf16 %v154
      %v187 = vunpack.c.l.bf16 %v155
      %v188 = vunpack.c.l.bf16 %v156
      %v189 = vunpack.c.l.bf16 %v157
      %v190 = vunpack.c.l.bf16 %v158
      %v191 = vunpack.c.l.bf16 %v159
      %v192 = vunpack.c.l.bf16 %v160
      %v193 = vunpack.c.l.bf16 %v161
      %v194 = vunpack.c.l.bf16 %v162
      %v195 = vunpack.c.l.bf16 %v163
      %v196 = vunpack.c.l.bf16 %v164
      %v197 = vunpack.c.l.bf16 %v165
      %v198 = vunpack.c.l.bf16 %v166
      %v199 = vunpack.c.l.bf16 %v167
      %v200 = vunpack.c.l.bf16 %v168
      %v201 = vunpack.c.l.bf16 %v169
      %v202 = vunpack.c.l.bf16 %v170
      %v203 = vunpack.c.l.bf16 %v171
      %v204 = vunpack.c.l.bf16 %v172
      %v205 = vunpack.c.l.bf16 %v173
      %v206 = vunpack.c.l.bf16 %v174
      %v207 = vunpack.c.l.bf16 %v175
      %v208 = vunpack.c.l.bf16 %v176
      %v209 = vunpack.c.l.bf16 %v177
      %v210 = vunpack.c.l.bf16 %v178
      %v211 = vunpack.c.l.bf16 %v179
      %v212 = vunpack.c.l.bf16 %v180
      %v213 = vlaneseq
      %v214 = vshrl.u32 %v213, 7
      %v215 = vsub.s32 0, %v214
      %v216 = vrot.slane %v147, %v215
      %v217 = vmul.f32 %v181, %v216
      %v218 = vmul.f32 %v182, %v216
      %v219 = vmul.f32 %v183, %v216
      %v220 = vmul.f32 %v184, %v216
      %v221 = vmul.f32 %v185, %v216
      %v222 = vmul.f32 %v186, %v216
      %v223 = vmul.f32 %v187, %v216
      %v224 = vmul.f32 %v188, %v216
      %v225 = vmul.f32 %v189, %v216
      %v226 = vmul.f32 %v190, %v216
      %v227 = vmul.f32 %v191, %v216
      %v228 = vmul.f32 %v192, %v216
      %v229 = vmul.f32 %v193, %v216
      %v230 = vmul.f32 %v194, %v216
      %v231 = vmul.f32 %v195, %v216
      %v232 = vmul.f32 %v196, %v216
      %v233 = vmul.f32 %v197, %v216
      %v234 = vmul.f32 %v198, %v216
      %v235 = vmul.f32 %v199, %v216
      %v236 = vmul.f32 %v200, %v216
      %v237 = vmul.f32 %v201, %v216
      %v238 = vmul.f32 %v202, %v216
      %v239 = vmul.f32 %v203, %v216
      %v240 = vmul.f32 %v204, %v216
      %v241 = vmul.f32 %v205, %v216
      %v242 = vmul.f32 %v206, %v216
      %v243 = vmul.f32 %v207, %v216
      %v244 = vmul.f32 %v208, %v216
      %v245 = vmul.f32 %v209, %v216
      %v246 = vmul.f32 %v210, %v216
      %v247 = vmul.f32 %v211, %v216
      %v248 = vmul.f32 %v212, %v216
      %v249 = vlaneseq
      %v250 = vshrl.u32 %v249, 7
      %v251 = vsub.s32 0, %v250
      %v252 = vrot.slane %v148, %v251
      %v253 = vadd.f32 %v217, %v252
      %v254 = vadd.f32 %v218, %v252
      %v255 = vadd.f32 %v219, %v252
      %v256 = vadd.f32 %v220, %v252
      %v257 = vadd.f32 %v221, %v252
      %v258 = vadd.f32 %v222, %v252
      %v259 = vadd.f32 %v223, %v252
      %v260 = vadd.f32 %v224, %v252
      %v261 = vadd.f32 %v225, %v252
      %v262 = vadd.f32 %v226, %v252
      %v263 = vadd.f32 %v227, %v252
      %v264 = vadd.f32 %v228, %v252
      %v265 = vadd.f32 %v229, %v252
      %v266 = vadd.f32 %v230, %v252
      %v267 = vadd.f32 %v231, %v252
      %v268 = vadd.f32 %v232, %v252
      %v269 = vadd.f32 %v233, %v252
      %v270 = vadd.f32 %v234, %v252
      %v271 = vadd.f32 %v235, %v252
      %v272 = vadd.f32 %v236, %v252
      %v273 = vadd.f32 %v237, %v252
      %v274 = vadd.f32 %v238, %v252
      %v275 = vadd.f32 %v239, %v252
      %v276 = vadd.f32 %v240, %v252
      %v277 = vadd.f32 %v241, %v252
      %v278 = vadd.f32 %v242, %v252
      %v279 = vadd.f32 %v243, %v252
      %v280 = vadd.f32 %v244, %v252
      %v281 = vadd.f32 %v245, %v252
      %v282 = vadd.f32 %v246, %v252
      %v283 = vadd.f32 %v247, %v252
      %v284 = vadd.f32 %v248, %v252
      %285 = vst [vmem:[%s145] sm:$0xff] %v253
      %286 = vst [vmem:[%s145 + $0x8] sm:$0xff] %v254
      %287 = vst [vmem:[%s145 + $0x10] sm:$0xff] %v255
      %288 = vst [vmem:[%s145 + $0x18] sm:$0xff] %v256
      %289 = vst [vmem:[%s145 + $0x20] sm:$0xff] %v257
      %290 = vst [vmem:[%s145 + $0x28] sm:$0xff] %v258
      %291 = vst [vmem:[%s145 + $0x30] sm:$0xff] %v259
      %292 = vst [vmem:[%s145 + $0x38] sm:$0xff] %v260
      %293 = vst [vmem:[%s145 + $0x40] sm:$0xff] %v261
      %294 = vst [vmem:[%s145 + $0x48] sm:$0xff] %v262
      %295 = vst [vmem:[%s145 + $0x50] sm:$0xff] %v263
      %296 = vst [vmem:[%s145 + $0x58] sm:$0xff] %v264
      %297 = vst [vmem:[%s145 + $0x60] sm:$0xff] %v265
      %298 = vst [vmem:[%s145 + $0x68] sm:$0xff] %v266
      %299 = vst [vmem:[%s145 + $0x70] sm:$0xff] %v267
      %300 = vst [vmem:[%s145 + $0x78] sm:$0xff] %v268
      %301 = vst [vmem:[%s145 + $0x80] sm:$0xff] %v269
      %302 = vst [vmem:[%s145 + $0x88] sm:$0xff] %v270
      %303 = vst [vmem:[%s145 + $0x90] sm:$0xff] %v271
      %304 = vst [vmem:[%s145 + $0x98] sm:$0xff] %v272
      %305 = vst [vmem:[%s145 + $0xa0] sm:$0xff] %v273
      %306 = vst [vmem:[%s145 + $0xa8] sm:$0xff] %v274
      %307 = vst [vmem:[%s145 + $0xb0] sm:$0xff] %v275
      %308 = vst [vmem:[%s145 + $0xb8] sm:$0xff] %v276
      %309 = vst [vmem:[%s145 + $0xc0] sm:$0xff] %v277
      %310 = vst [vmem:[%s145 + $0xc8] sm:$0xff] %v278
      %311 = vst [vmem:[%s145 + $0xd0] sm:$0xff] %v279
      %312 = vst [vmem:[%s145 + $0xd8] sm:$0xff] %v280
      %313 = vst [vmem:[%s145 + $0xe0] sm:$0xff] %v281
      %314 = vst [vmem:[%s145 + $0xe8] sm:$0xff] %v282
      %315 = vst [vmem:[%s145 + $0xf0] sm:$0xff] %v283
      %316 = vst [vmem:[%s145 + $0xf8] sm:$0xff] %v284
      %s317 = smul.u32 32, %s13
      %p318 = scmp.lt.s32.totalorder %s317, 63
      %s319 = scalar_select %p318, %s317, 63
      %s320 = smul.addr %s319, 8
      %s321 = scalar_lea.vmem %s2, %s320
      // Predicated region
      $region29: #{deepae_forward.3} parent=27 // pred_check
        %p322 = pneg %p78
      $region30: #{deepae_forward.3} parent=27 // pred_check_branch
        %324 = sbr.rel (%p322) target = $region32
      $region31: #{deepae_forward.3} parent=27 // pred_region
        %s325 = smul.u32 32, %s13
      $region32: #{deepae_forward.3} parent=27 // pred_fallthru
        _
    $region28: #{deepae_forward.3} parent=5 // pred_fallthru
      _
    %p326 = scmp.le.s32.totalorder 2, %s8
    // Predicated region
    $region33: #{deepae_forward.3} parent=5 // pred_check
      %p327 = pneg %p326
    $region34: #{deepae_forward.3} parent=5 // pred_check_branch
      %329 = sbr.rel (%p327) target = $region36
    $region35: #{deepae_forward.3} parent=5 // pred_region
      %s330 = ssub.s32 %s8, 2
      // Predicated region
      $region37: #{deepae_forward.3} parent=35 // pred_check
        %p331 = pneg %p84
      $region38: #{deepae_forward.3} parent=35 // pred_check_branch
        %333 = sbr.rel (%p331) target = $region40
      $region39: #{deepae_forward.3} parent=35 // pred_region
        %s334 = smul.u32 32, %s14
        %p335 = scmp.lt.s32.totalorder %s334, 63
        %s336 = scalar_select %p335, %s334, 63
        %s337 = smul.addr %s336, 8
        %s338 = scalar_lea.vmem %s2, %s337
      $region40: #{deepae_forward.3} parent=35 // pred_fallthru
        _
    $region36: #{deepae_forward.3} parent=5 // pred_fallthru
      _
  $region6: #{deepae_forward.3} parent=0 // loop_footer
    %s12 = sadd.s32 1, %s8
  $region7: #{deepae_forward.3} parent=0 // loop_footer_branch
    %7 = sbr.rel target = $region3
  $region8: #{deepae_forward.3} parent=0 // loop_exit
    _

// kernel: deepae_forward.2
$region0: #{deepae_forward.2}
  #allocation0 [shape = 'u32[]', space=smem, size = 0x4, offset = 0x4, fixed_abs, tag = 'smem constant byte address 0x4 - core index']
  #allocation1 [shape = 'u32[144,128]{1,0:T(1,128)}', space=vmem, size = 0x12000, scoped, tag = 'internal scratch']
  %s0 = inlined_call_operand.vmem [shape: f32[512,256], index: 0, kind: input, shape index: {}]
  %s1 = inlined_call_operand.vmem [shape: bf16[256,256], index: 1, kind: input, shape index: {}]
  %s2 = inlined_call_operand.vmem [shape: bf16[256,128], index: 2, kind: input, shape index: {}]
  %s3 = inlined_call_operand.vmem [shape: bf16[128,256], index: 3, kind: input, shape index: {}]
  %s4 = inlined_call_operand.vmem [shape: bf16[256,256], index: 4, kind: input, shape index: {}]
  %s5 = inlined_call_operand.vmem [shape: bf16[128,128], index: 5, kind: input, shape index: {}]
  %s6 = inlined_call_operand.vmem [shape: f32[8,256], index: 6, kind: input, shape index: {}]
  %s7 = inlined_call_operand.vmem [shape: f32[512,256], index: 7, kind: output, shape index: {0}]
  %s8 = inlined_call_operand.vmem [shape: f32[512,128], index: 8, kind: output, shape index: {1}]
  %s9 = inlined_call_operand.vmem [shape: bf16[512,128], index: 9, kind: output, shape index: {2}]
  %s10 = inlined_call_operand.vmem [shape: f32[2,8,128], index: 10, kind: output, shape index: {3}]
  %11 = xla_tuple %s7, %s8, %s9, %s10
  %s12 = sld [smem:[#allocation0]]
  $region85: #{deepae_forward.2} parent=0
    _
  %s14 = ssub.s32 1, %s12
  %s15 = scalar_select 0, %s14, %s12
  loop: start=0, step=1, limit=4
  $region2: #{deepae_forward.2} parent=0 // loop_pre_header
    _
  $region3: #{deepae_forward.2} parent=0 // loop_header
    %s17 = sphi 0, %s21
    %p18 = scmp.ge.s32.totalorder %s17, 4
    %s27 = sphi 0, %s29
    %s30 = sphi 0, %s27
    %s31 = sphi 0, %s30
    %s47 = sphi 0, %s31
    %s51 = sphi 0, %s51
    %s53 = sphi 0, %s51
    %s54 = sphi 0, %s53
    %s68 = sphi 0, %s54
    %s72 = sphi 0, %s72
    %s74 = sphi 0, %s72
    %s75 = sphi 0, %s74
    %s89 = sphi 0, %s75
    %s93 = sphi 0, %s93
    %s95 = sphi 0, %s93
    %s96 = sphi 0, %s95
    %s110 = sphi 0, %s96
    %s114 = sphi 0, %s114
    %s116 = sphi 0, %s114
    %s117 = sphi 0, %s116
    %s131 = sphi 0, %s117
    %s135 = sphi 0, %s135
    %s137 = sphi 0, %s135
    %s138 = sphi 0, %s137
    %s152 = sphi 0, %s138
    %s156 = sphi 0, %s156
    %s158 = sphi 0, %s156
    %s159 = sphi 0, %s158
    %s173 = sphi 0, %s159
    %s179 = sphi 0, %s181
    %s182 = sphi 0, %s179
    %s183 = sphi 0, %s182
    %s199 = sphi 0, %s183
    %s205 = sphi 0, %s207
    %s208 = sphi 0, %s205
    %s209 = sphi 0, %s208
    %s225 = sphi 0, %s209
    %s231 = sphi 0, %s233
    %s234 = sphi 0, %s231
    %s235 = sphi 0, %s234
    %s251 = sphi 0, %s235
    %s257 = sphi 0, %s259
    %s260 = sphi 0, %s257
    %s261 = sphi 0, %s260
    %s277 = sphi 0, %s261
  $region4: #{deepae_forward.2} parent=0 // loop_header_branch
    %20 = sbr.rel (%p18) target = $region8
  $region5: #{deepae_forward.2} parent=0 // loop_body
    %s22 = ssub.s32 %s17, 1
    %s23 = ssub.s32 %s17, 2
    %s24 = sadd.s32 %s17, 1
    %s25 = ssub.s32 %s17, %s24
    %p26 = scmp.eq.s32.totalorder %s25, 0
    %s28 = sadd.s32 %s27, 1
    %s29 = scalar_select %p26, %s27, %s28
    %p32 = pneg %p26
    %p33 = scmp.eq.s32.totalorder %s17, 1
    %p34 = por %p32, %p33
    %p35 = scmp.ne.s32.totalorder %s27, %s30
    %p36 = scmp.eq.s32.totalorder %s17, 0
    %p37 = por %p35, %p36
    %p38 = scmp.ne.s32.totalorder %s27, %s30
    %p39 = scmp.eq.s32.totalorder %s22, 1
    %p40 = por %p38, %p39
    %p41 = scmp.ne.s32.totalorder %s30, %s31
    %p42 = scmp.eq.s32.totalorder %s22, 0
    %p43 = por %p41, %p42
    %p44 = scmp.ne.s32.totalorder %s30, %s31
    %p45 = scmp.eq.s32.totalorder %s23, 1
    %p46 = por %p44, %p45
    %p48 = scmp.ne.s32.totalorder %s31, %s47
    %p49 = scmp.eq.s32.totalorder %s23, 0
    %p50 = por %p48, %p49
    %s52 = sadd.s32 %s51, 1
    %p55 = scmp.eq.s32.totalorder %s17, 1
    %p56 = scmp.ne.s32.totalorder %s51, %s53
    %p57 = scmp.eq.s32.totalorder %s17, 0
    %p58 = por %p56, %p57
    %p59 = scmp.ne.s32.totalorder %s51, %s53
    %p60 = scmp.eq.s32.totalorder %s22, 1
    %p61 = por %p59, %p60
    %p62 = scmp.ne.s32.totalorder %s53, %s54
    %p63 = scmp.eq.s32.totalorder %s22, 0
    %p64 = por %p62, %p63
    %p65 = scmp.ne.s32.totalorder %s53, %s54
    %p66 = scmp.eq.s32.totalorder %s23, 1
    %p67 = por %p65, %p66
    %p69 = scmp.ne.s32.totalorder %s54, %s68
    %p70 = scmp.eq.s32.totalorder %s23, 0
    %p71 = por %p69, %p70
    %s73 = sadd.s32 %s72, 1
    %p76 = scmp.eq.s32.totalorder %s17, 1
    %p77 = scmp.ne.s32.totalorder %s72, %s74
    %p78 = scmp.eq.s32.totalorder %s17, 0
    %p79 = por %p77, %p78
    %p80 = scmp.ne.s32.totalorder %s72, %s74
    %p81 = scmp.eq.s32.totalorder %s22, 1
    %p82 = por %p80, %p81
    %p83 = scmp.ne.s32.totalorder %s74, %s75
    %p84 = scmp.eq.s32.totalorder %s22, 0
    %p85 = por %p83, %p84
    %p86 = scmp.ne.s32.totalorder %s74, %s75
    %p87 = scmp.eq.s32.totalorder %s23, 1
    %p88 = por %p86, %p87
    %p90 = scmp.ne.s32.totalorder %s75, %s89
    %p91 = scmp.eq.s32.totalorder %s23, 0
    %p92 = por %p90, %p91
    %s94 = sadd.s32 %s93, 1
    %p97 = scmp.eq.s32.totalorder %s17, 1
    %p98 = scmp.ne.s32.totalorder %s93, %s95
    %p99 = scmp.eq.s32.totalorder %s17, 0
    %p100 = por %p98, %p99
    %p101 = scmp.ne.s32.totalorder %s93, %s95
    %p102 = scmp.eq.s32.totalorder %s22, 1
    %p103 = por %p101, %p102
    %p104 = scmp.ne.s32.totalorder %s95, %s96
    %p105 = scmp.eq.s32.totalorder %s22, 0
    %p106 = por %p104, %p105
    %p107 = scmp.ne.s32.totalorder %s95, %s96
    %p108 = scmp.eq.s32.totalorder %s23, 1
    %p109 = por %p107, %p108
    %p111 = scmp.ne.s32.totalorder %s96, %s110
    %p112 = scmp.eq.s32.totalorder %s23, 0
    %p113 = por %p111, %p112
    %s115 = sadd.s32 %s114, 1
    %p118 = scmp.eq.s32.totalorder %s17, 1
    %p119 = scmp.ne.s32.totalorder %s114, %s116
    %p120 = scmp.eq.s32.totalorder %s17, 0
    %p121 = por %p119, %p120
    %p122 = scmp.ne.s32.totalorder %s114, %s116
    %p123 = scmp.eq.s32.totalorder %s22, 1
    %p124 = por %p122, %p123
    %p125 = scmp.ne.s32.totalorder %s116, %s117
    %p126 = scmp.eq.s32.totalorder %s22, 0
    %p127 = por %p125, %p126
    %p128 = scmp.ne.s32.totalorder %s116, %s117
    %p129 = scmp.eq.s32.totalorder %s23, 1
    %p130 = por %p128, %p129
    %p132 = scmp.ne.s32.totalorder %s117, %s131
    %p133 = scmp.eq.s32.totalorder %s23, 0
    %p134 = por %p132, %p133
    %s136 = sadd.s32 %s135, 1
    %p139 = scmp.eq.s32.totalorder %s17, 1
    %p140 = scmp.ne.s32.totalorder %s135, %s137
    %p141 = scmp.eq.s32.totalorder %s17, 0
    %p142 = por %p140, %p141
    %p143 = scmp.ne.s32.totalorder %s135, %s137
    %p144 = scmp.eq.s32.totalorder %s22, 1
    %p145 = por %p143, %p144
    %p146 = scmp.ne.s32.totalorder %s137, %s138
    %p147 = scmp.eq.s32.totalorder %s22, 0
    %p148 = por %p146, %p147
    %p149 = scmp.ne.s32.totalorder %s137, %s138
    %p150 = scmp.eq.s32.totalorder %s23, 1
    %p151 = por %p149, %p150
    %p153 = scmp.ne.s32.totalorder %s138, %s152
    %p154 = scmp.eq.s32.totalorder %s23, 0
    %p155 = por %p153, %p154
    %s157 = sadd.s32 %s156, 1
    %p160 = scmp.eq.s32.totalorder %s17, 1
    %p161 = scmp.ne.s32.totalorder %s156, %s158
    %p162 = scmp.eq.s32.totalorder %s17, 0
    %p163 = por %p161, %p162
    %p164 = scmp.ne.s32.totalorder %s156, %s158
    %p165 = scmp.eq.s32.totalorder %s22, 1
    %p166 = por %p164, %p165
    %p167 = scmp.ne.s32.totalorder %s158, %s159
    %p168 = scmp.eq.s32.totalorder %s22, 0
    %p169 = por %p167, %p168
    %p170 = scmp.ne.s32.totalorder %s158, %s159
    %p171 = scmp.eq.s32.totalorder %s23, 1
    %p172 = por %p170, %p171
    %p174 = scmp.ne.s32.totalorder %s159, %s173
    %p175 = scmp.eq.s32.totalorder %s23, 0
    %p176 = por %p174, %p175
    %s177 = ssub.s32 %s17, %s24
    %p178 = scmp.eq.s32.totalorder %s177, 0
    %s180 = sadd.s32 %s179, 1
    %s181 = scalar_select %p178, %s179, %s180
    %p184 = pneg %p178
    %p185 = scmp.eq.s32.totalorder %s17, 1
    %p186 = por %p184, %p185
    %p187 = scmp.ne.s32.totalorder %s179, %s182
    %p188 = scmp.eq.s32.totalorder %s17, 0
    %p189 = por %p187, %p188
    %p190 = scmp.ne.s32.totalorder %s179, %s182
    %p191 = scmp.eq.s32.totalorder %s22, 1
    %p192 = por %p190, %p191
    %p193 = scmp.ne.s32.totalorder %s182, %s183
    %p194 = scmp.eq.s32.totalorder %s22, 0
    %p195 = por %p193, %p194
    %p196 = scmp.ne.s32.totalorder %s182, %s183
    %p197 = scmp.eq.s32.totalorder %s23, 1
    %p198 = por %p196, %p197
    %p200 = scmp.ne.s32.totalorder %s183, %s199
    %p201 = scmp.eq.s32.totalorder %s23, 0
    %p202 = por %p200, %p201
    %s203 = ssub.s32 %s17, %s24
    %p204 = scmp.eq.s32.totalorder %s203, 0
    %s206 = sadd.s32 %s205, 1
    %s207 = scalar_select %p204, %s205, %s206
    %p210 = pneg %p204
    %p211 = scmp.eq.s32.totalorder %s17, 1
    %p212 = por %p210, %p211
    %p213 = scmp.ne.s32.totalorder %s205, %s208
    %p214 = scmp.eq.s32.totalorder %s17, 0
    %p215 = por %p213, %p214
    %p216 = scmp.ne.s32.totalorder %s205, %s208
    %p217 = scmp.eq.s32.totalorder %s22, 1
    %p218 = por %p216, %p217
    %p219 = scmp.ne.s32.totalorder %s208, %s209
    %p220 = scmp.eq.s32.totalorder %s22, 0
    %p221 = por %p219, %p220
    %p222 = scmp.ne.s32.totalorder %s208, %s209
    %p223 = scmp.eq.s32.totalorder %s23, 1
    %p224 = por %p222, %p223
    %p226 = scmp.ne.s32.totalorder %s209, %s225
    %p227 = scmp.eq.s32.totalorder %s23, 0
    %p228 = por %p226, %p227
    %s229 = ssub.s32 %s17, %s24
    %p230 = scmp.eq.s32.totalorder %s229, 0
    %s232 = sadd.s32 %s231, 1
    %s233 = scalar_select %p230, %s231, %s232
    %p236 = pneg %p230
    %p237 = scmp.eq.s32.totalorder %s17, 1
    %p238 = por %p236, %p237
    %p239 = scmp.ne.s32.totalorder %s231, %s234
    %p240 = scmp.eq.s32.totalorder %s17, 0
    %p241 = por %p239, %p240
    %p242 = scmp.ne.s32.totalorder %s231, %s234
    %p243 = scmp.eq.s32.totalorder %s22, 1
    %p244 = por %p242, %p243
    %p245 = scmp.ne.s32.totalorder %s234, %s235
    %p246 = scmp.eq.s32.totalorder %s22, 0
    %p247 = por %p245, %p246
    %p248 = scmp.ne.s32.totalorder %s234, %s235
    %p249 = scmp.eq.s32.totalorder %s23, 1
    %p250 = por %p248, %p249
    %p252 = scmp.ne.s32.totalorder %s235, %s251
    %p253 = scmp.eq.s32.totalorder %s23, 0
    %p254 = por %p252, %p253
    %s255 = ssub.s32 %s17, %s24
    %p256 = scmp.eq.s32.totalorder %s255, 0
    %s258 = sadd.s32 %s257, 1
    %s259 = scalar_select %p256, %s257, %s258
    %p262 = pneg %p256
    %p263 = scmp.eq.s32.totalorder %s17, 1
    %p264 = por %p262, %p263
    %p265 = scmp.ne.s32.totalorder %s257, %s260
    %p266 = scmp.eq.s32.totalorder %s17, 0
    %p267 = por %p265, %p266
    %p268 = scmp.ne.s32.totalorder %s257, %s260
    %p269 = scmp.eq.s32.totalorder %s22, 1
    %p270 = por %p268, %p269
    %p271 = scmp.ne.s32.totalorder %s260, %s261
    %p272 = scmp.eq.s32.totalorder %s22, 0
    %p273 = por %p271, %p272
    %p274 = scmp.ne.s32.totalorder %s260, %s261
    %p275 = scmp.eq.s32.totalorder %s23, 1
    %p276 = por %p274, %p275
    %p278 = scmp.ne.s32.totalorder %s261, %s277
    %p279 = scmp.eq.s32.totalorder %s23, 0
    %p280 = por %p278, %p279
    %p281 = scmp.le.s32.totalorder 1, %s17
    %p282 = scmp.lt.s32.totalorder %s17, 3
    %p283 = pnand %p281, %p282
    %p284 = pneg %p283
    // Predicated region
    $region9: #{deepae_forward.2} parent=5 // pred_check
      _
    $region10: #{deepae_forward.2} parent=5 // pred_check_branch
      %286 = sbr.rel (%p283) target = $region12
    $region11: #{deepae_forward.2} parent=5 // pred_region
      %s287 = ssub.s32 %s17, 1
      // Predicated region
      $region13: #{deepae_forward.2} parent=11 // pred_check
        %p288 = pneg %p64
      $region14: #{deepae_forward.2} parent=11 // pred_check_branch
        %290 = sbr.rel (%p288) target = $region16
      $region15: #{deepae_forward.2} parent=11 // pred_region
        _
      $region16: #{deepae_forward.2} parent=11 // pred_fallthru
        _
      // Predicated region
      $region17: #{deepae_forward.2} parent=11 // pred_check
        %p291 = pneg %p85
      $region18: #{deepae_forward.2} parent=11 // pred_check_branch
        %293 = sbr.rel (%p291) target = $region20
      $region19: #{deepae_forward.2} parent=11 // pred_region
        _
      $region20: #{deepae_forward.2} parent=11 // pred_fallthru
        _
      // Predicated region
      $region21: #{deepae_forward.2} parent=11 // pred_check
        %p294 = pneg %p106
      $region22: #{deepae_forward.2} parent=11 // pred_check_branch
        %296 = sbr.rel (%p294) target = $region24
      $region23: #{deepae_forward.2} parent=11 // pred_region
        _
      $region24: #{deepae_forward.2} parent=11 // pred_fallthru
        _
      // Predicated region
      $region25: #{deepae_forward.2} parent=11 // pred_check
        %p297 = pneg %p127
      $region26: #{deepae_forward.2} parent=11 // pred_check_branch
        %299 = sbr.rel (%p297) target = $region28
      $region27: #{deepae_forward.2} parent=11 // pred_region
        _
      $region28: #{deepae_forward.2} parent=11 // pred_fallthru
        _
      // Predicated region
      $region29: #{deepae_forward.2} parent=11 // pred_check
        %p300 = pneg %p148
      $region30: #{deepae_forward.2} parent=11 // pred_check_branch
        %302 = sbr.rel (%p300) target = $region32
      $region31: #{deepae_forward.2} parent=11 // pred_region
        _
      $region32: #{deepae_forward.2} parent=11 // pred_fallthru
        _
      // Predicated region
      $region33: #{deepae_forward.2} parent=11 // pred_check
        %p303 = pneg %p169
      $region34: #{deepae_forward.2} parent=11 // pred_check_branch
        %305 = sbr.rel (%p303) target = $region36
      $region35: #{deepae_forward.2} parent=11 // pred_region
        _
      $region36: #{deepae_forward.2} parent=11 // pred_fallthru
        _
    $region12: #{deepae_forward.2} parent=5 // pred_fallthru
      _
    %p306 = scmp.lt.s32.totalorder %s17, 2
    // Predicated region
    $region37: #{deepae_forward.2} parent=5 // pred_check
      %p307 = pneg %p306
    $region38: #{deepae_forward.2} parent=5 // pred_check_branch
      %309 = sbr.rel (%p307) target = $region40
    $region39: #{deepae_forward.2} parent=5 // pred_region
      // Predicated region
      $region41: #{deepae_forward.2} parent=39 // pred_check
        %p310 = pneg %p37
      $region42: #{deepae_forward.2} parent=39 // pred_check_branch
        %312 = sbr.rel (%p310) target = $region44
      $region43: #{deepae_forward.2} parent=39 // pred_region
        %s313 = smul.u32 32, %s17
        %p314 = scmp.lt.s32.totalorder %s313, 63
        %s315 = scalar_select %p314, %s313, 63
        %s316 = smul.addr %s315, 2
        %s317 = smul.addr %s316, 8
        %s318 = scalar_lea.vmem %s0, %s317
        %s319 = smul.u32 32, %s17
      $region44: #{deepae_forward.2} parent=39 // pred_fallthru
        _
    $region40: #{deepae_forward.2} parent=5 // pred_fallthru
      _
    %p320 = scmp.le.s32.totalorder 1, %s17
    %p321 = scmp.lt.s32.totalorder %s17, 3
    %p322 = pnand %p320, %p321
    %p323 = pneg %p322
    // Predicated region
    $region45: #{deepae_forward.2} parent=5 // pred_check
      _
    $region46: #{deepae_forward.2} parent=5 // pred_check_branch
      %325 = sbr.rel (%p322) target = $region48
    $region47: #{deepae_forward.2} parent=5 // pred_region
      %s326 = ssub.s32 %s17, 1
      %s327 = smul.u32 32, %s22
      %p328 = scmp.lt.s32.totalorder %s327, 63
      %s329 = scalar_select %p328, %s327, 63
      %s330 = smul.addr %s329, 2
      %s331 = smul.addr %s330, 8
      %s332 = scalar_lea.vmem %s0, %s331
      %p333 = pneg %p43
      %p334 = pneg %p40
      %p335 = pneg %p64
      %p336 = pneg %p61
      %p337 = pneg %p85
      %p338 = pneg %p82
      %p339 = pneg %p106
      %p340 = pneg %p103
      %p341 = pneg %p127
      %p342 = pneg %p124
      %p343 = pneg %p148
      %p344 = pneg %p145
      %p345 = pneg %p169
      %p346 = pneg %p166
      %p347 = pneg %p195
      %p348 = pneg %p192
      %s349 = smul.u32 32, %s22
      %p350 = scmp.lt.s32.totalorder %s349, 63
      %s351 = scalar_select %p350, %s349, 63
      %s352 = smul.addr %s351, 2
      %s353 = smul.addr %s352, 8
      %s354 = scalar_lea.vmem %s7, %s353
      %p355 = pneg %p221
      %p356 = pneg %p218
      %s357 = smul.u32 32, %s22
      %p358 = scmp.lt.s32.totalorder %s357, 63
      %s359 = scalar_select %p358, %s357, 63
      %s360 = smul.addr %s359, 8
      %s361 = scalar_lea.vmem %s8, %s360
      %p362 = pneg %p247
      %p363 = pneg %p244
      %s364 = smul.u32 32, %s22
      %p365 = scmp.lt.s32.totalorder %s364, 63
      %s366 = scalar_select %p365, %s364, 63
      %s367 = smul.addr %s366, 4
      %s368 = scalar_lea.vmem %s9, %s367
      %p369 = pneg %p273
      %p370 = pneg %p270
      %p371 = scmp.lt.s32.totalorder %s22, 1
      %s372 = scalar_select %p371, %s22, 1
      %s373 = smul.addr %s372, 8
      %s374 = scalar_lea.vmem %s10, %s373
      %s375 = smul.u32 32, %s22
      %p376 = scmp.lt.s32.totalorder %s375, 63
      %s377 = scalar_select %p376, %s375, 63
      %s378 = smul.addr %s377, 2
      %s379 = smul.addr %s378, 8
      %s380 = scalar_lea.vmem %s0, %s379
      %s381 = smul.u32 32, %s22
      %s382 = smul.u32 32, %s22
      %p383 = scmp.lt.s32.totalorder %s382, 63
      %s384 = scalar_select %p383, %s382, 63
      %s385 = smul.addr %s384, 2
      %s386 = smul.addr %s385, 8
      %s387 = scalar_lea.vmem %s7, %s386
      %s388 = smul.u32 32, %s22
      %s389 = smul.u32 32, %s22
      %p390 = scmp.lt.s32.totalorder %s389, 63
      %s391 = scalar_select %p390, %s389, 63
      %s392 = smul.addr %s391, 8
      %s393 = scalar_lea.vmem %s8, %s392
      %s394 = smul.u32 32, %s22
      %s395 = smul.u32 32, %s22
      %p396 = scmp.lt.s32.totalorder %s395, 63
      %s397 = scalar_select %p396, %s395, 63
      %s398 = smul.addr %s397, 4
      %s399 = scalar_lea.vmem %s9, %s398
      %s400 = smul.u32 32, %s22
      %p401 = scmp.lt.s32.totalorder %s22, 1
      %s402 = scalar_select %p401, %s22, 1
      %s403 = smul.addr %s402, 8
      %s404 = scalar_lea.vmem %s10, %s403
      %v406 = vld [vmem:[%s380] sm:$0xff]
      %v407 = vld [vmem:[%s380 + $0x8] sm:$0xff]
      %v408 = vld [vmem:[%s380 + $0x10] sm:$0xff]
      %v409 = vld [vmem:[%s380 + $0x18] sm:$0xff]
      %v410 = vld [vmem:[%s380 + $0x20] sm:$0xff]
      %v411 = vld [vmem:[%s380 + $0x28] sm:$0xff]
      %v412 = vld [vmem:[%s380 + $0x30] sm:$0xff]
      %v413 = vld [vmem:[%s380 + $0x38] sm:$0xff]
      %v414 = vld [vmem:[%s380 + $0x40] sm:$0xff]
      %v415 = vld [vmem:[%s380 + $0x48] sm:$0xff]
      %v416 = vld [vmem:[%s380 + $0x50] sm:$0xff]
      %v417 = vld [vmem:[%s380 + $0x58] sm:$0xff]
      %v418 = vld [vmem:[%s380 + $0x60] sm:$0xff]
      %v419 = vld [vmem:[%s380 + $0x68] sm:$0xff]
      %v420 = vld [vmem:[%s380 + $0x70] sm:$0xff]
      %v421 = vld [vmem:[%s380 + $0x78] sm:$0xff]
      %v422 = vld [vmem:[%s380 + $0x80] sm:$0xff]
      %v423 = vld [vmem:[%s380 + $0x88] sm:$0xff]
      %v424 = vld [vmem:[%s380 + $0x90] sm:$0xff]
      %v425 = vld [vmem:[%s380 + $0x98] sm:$0xff]
      %v426 = vld [vmem:[%s380 + $0xa0] sm:$0xff]
      %v427 = vld [vmem:[%s380 + $0xa8] sm:$0xff]
      %v428 = vld [vmem:[%s380 + $0xb0] sm:$0xff]
      %v429 = vld [vmem:[%s380 + $0xb8] sm:$0xff]
      %v430 = vld [vmem:[%s380 + $0xc0] sm:$0xff]
      %v431 = vld [vmem:[%s380 + $0xc8] sm:$0xff]
      %v432 = vld [vmem:[%s380 + $0xd0] sm:$0xff]
      %v433 = vld [vmem:[%s380 + $0xd8] sm:$0xff]
      %v434 = vld [vmem:[%s380 + $0xe0] sm:$0xff]
      %v435 = vld [vmem:[%s380 + $0xe8] sm:$0xff]
      %v436 = vld [vmem:[%s380 + $0xf0] sm:$0xff]
      %v437 = vld [vmem:[%s380 + $0xf8] sm:$0xff]
      %v438 = vld [vmem:[%s380 + $0x100] sm:$0xff]
      %v439 = vld [vmem:[%s380 + $0x108] sm:$0xff]
      %v440 = vld [vmem:[%s380 + $0x110] sm:$0xff]
      %v441 = vld [vmem:[%s380 + $0x118] sm:$0xff]
      %v442 = vld [vmem:[%s380 + $0x120] sm:$0xff]
      %v443 = vld [vmem:[%s380 + $0x128] sm:$0xff]
      %v444 = vld [vmem:[%s380 + $0x130] sm:$0xff]
      %v445 = vld [vmem:[%s380 + $0x138] sm:$0xff]
      %v446 = vld [vmem:[%s380 + $0x140] sm:$0xff]
      %v447 = vld [vmem:[%s380 + $0x148] sm:$0xff]
      %v448 = vld [vmem:[%s380 + $0x150] sm:$0xff]
      %v449 = vld [vmem:[%s380 + $0x158] sm:$0xff]
      %v450 = vld [vmem:[%s380 + $0x160] sm:$0xff]
      %v451 = vld [vmem:[%s380 + $0x168] sm:$0xff]
      %v452 = vld [vmem:[%s380 + $0x170] sm:$0xff]
      %v453 = vld [vmem:[%s380 + $0x178] sm:$0xff]
      %v454 = vld [vmem:[%s380 + $0x180] sm:$0xff]
      %v455 = vld [vmem:[%s380 + $0x188] sm:$0xff]
      %v456 = vld [vmem:[%s380 + $0x190] sm:$0xff]
      %v457 = vld [vmem:[%s380 + $0x198] sm:$0xff]
      %v458 = vld [vmem:[%s380 + $0x1a0] sm:$0xff]
      %v459 = vld [vmem:[%s380 + $0x1a8] sm:$0xff]
      %v460 = vld [vmem:[%s380 + $0x1b0] sm:$0xff]
      %v461 = vld [vmem:[%s380 + $0x1b8] sm:$0xff]
      %v462 = vld [vmem:[%s380 + $0x1c0] sm:$0xff]
      %v463 = vld [vmem:[%s380 + $0x1c8] sm:$0xff]
      %v464 = vld [vmem:[%s380 + $0x1d0] sm:$0xff]
      %v465 = vld [vmem:[%s380 + $0x1d8] sm:$0xff]
      %v466 = vld [vmem:[%s380 + $0x1e0] sm:$0xff]
      %v467 = vld [vmem:[%s380 + $0x1e8] sm:$0xff]
      %v468 = vld [vmem:[%s380 + $0x1f0] sm:$0xff]
      %v469 = vld [vmem:[%s380 + $0x1f8] sm:$0xff]
      %v470 = vpack.c.bf16 %v408, %v406
      %v471 = vpack.c.bf16 %v409, %v407
      %v472 = vpack.c.bf16 %v412, %v410
      %v473 = vpack.c.bf16 %v413, %v411
      %v474 = vpack.c.bf16 %v416, %v414
      %v475 = vpack.c.bf16 %v417, %v415
      %v476 = vpack.c.bf16 %v420, %v418
      %v477 = vpack.c.bf16 %v421, %v419
      %v478 = vpack.c.bf16 %v424, %v422
      %v479 = vpack.c.bf16 %v425, %v423
      %v480 = vpack.c.bf16 %v428, %v426
      %v481 = vpack.c.bf16 %v429, %v427
      %v482 = vpack.c.bf16 %v432, %v430
      %v483 = vpack.c.bf16 %v433, %v431
      %v484 = vpack.c.bf16 %v436, %v434
      %v485 = vpack.c.bf16 %v437, %v435
      %v486 = vpack.c.bf16 %v440, %v438
      %v487 = vpack.c.bf16 %v441, %v439
      %v488 = vpack.c.bf16 %v444, %v442
      %v489 = vpack.c.bf16 %v445, %v443
      %v490 = vpack.c.bf16 %v448, %v446
      %v491 = vpack.c.bf16 %v449, %v447
      %v492 = vpack.c.bf16 %v452, %v450
      %v493 = vpack.c.bf16 %v453, %v451
      %v494 = vpack.c.bf16 %v456, %v454
      %v495 = vpack.c.bf16 %v457, %v455
      %v496 = vpack.c.bf16 %v460, %v458
      %v497 = vpack.c.bf16 %v461, %v459
      %v498 = vpack.c.bf16 %v464, %v462
      %v499 = vpack.c.bf16 %v465, %v463
      %v500 = vpack.c.bf16 %v468, %v466
      %v501 = vpack.c.bf16 %v469, %v467
      %v502 = vld [vmem:[%s6] ss:$8 sm:$0x3]
      %v503 = vld [vmem:[%s6 + $0x3] ss:$0 sm:$0xff]
      %s504 = scalar_lea.vmem %s6, 1
      %v505 = vld [vmem:[%s504] ss:$8 sm:$0x3]
      %s506 = scalar_lea.vmem %s6, 2
      %v507 = vld [vmem:[%s506] ss:$8 sm:$0x3]
      %v508 = vld [vmem:[%s6 + $0x4] ss:$0 sm:$0xff]
      %v509 = vld [vmem:[%s1] sm:$0xff]
      %v510 = vld [vmem:[%s1 + $0x8] sm:$0xff]
      %v511 = vld [vmem:[%s1 + $0x10] sm:$0xff]
      %v512 = vld [vmem:[%s1 + $0x18] sm:$0xff]
      %v513 = vld [vmem:[%s1 + $0x20] sm:$0xff]
      %v514 = vld [vmem:[%s1 + $0x28] sm:$0xff]
      %v515 = vld [vmem:[%s1 + $0x30] sm:$0xff]
      %v516 = vld [vmem:[%s1 + $0x38] sm:$0xff]
      %v517 = vld [vmem:[%s1 + $0x40] sm:$0xff]
      %v518 = vld [vmem:[%s1 + $0x48] sm:$0xff]
      %v519 = vld [vmem:[%s1 + $0x50] sm:$0xff]
      %v520 = vld [vmem:[%s1 + $0x58] sm:$0xff]
      %v521 = vld [vmem:[%s1 + $0x60] sm:$0xff]
      %v522 = vld [vmem:[%s1 + $0x68] sm:$0xff]
      %v523 = vld [vmem:[%s1 + $0x70] sm:$0xff]
      %v524 = vld [vmem:[%s1 + $0x78] sm:$0xff]
      %v525 = vld [vmem:[%s1 + $0x80] sm:$0xff]
      %v526 = vld [vmem:[%s1 + $0x88] sm:$0xff]
      %v527 = vld [vmem:[%s1 + $0x90] sm:$0xff]
      %v528 = vld [vmem:[%s1 + $0x98] sm:$0xff]
      %v529 = vld [vmem:[%s1 + $0xa0] sm:$0xff]
      %v530 = vld [vmem:[%s1 + $0xa8] sm:$0xff]
      %v531 = vld [vmem:[%s1 + $0xb0] sm:$0xff]
      %v532 = vld [vmem:[%s1 + $0xb8] sm:$0xff]
      %v533 = vld [vmem:[%s1 + $0xc0] sm:$0xff]
      %v534 = vld [vmem:[%s1 + $0xc8] sm:$0xff]
      %v535 = vld [vmem:[%s1 + $0xd0] sm:$0xff]
      %v536 = vld [vmem:[%s1 + $0xd8] sm:$0xff]
      %v537 = vld [vmem:[%s1 + $0xe0] sm:$0xff]
      %v538 = vld [vmem:[%s1 + $0xe8] sm:$0xff]
      %v539 = vld [vmem:[%s1 + $0xf0] sm:$0xff]
      %v540 = vld [vmem:[%s1 + $0xf8] sm:$0xff]
      %v542 = vlaneseq
      %v543 = vshrl.u32 %v542, 7
      %v544 = vsub.s32 0, %v543
      %v545 = vrot.slane %v502, %v544
      %v546 = vlaneseq
      %v547 = vshrl.u32 %v546, 7
      %v548 = vsub.s32 1, %v547
      %v549 = vrot.slane %v502, %v548
      %v584 = vunpack.c.l.b16 %v509
      %v585 = vunpack.c.h.b16 %v509
      %v586 = vunpack.c.l.b16 %v510
      %v587 = vunpack.c.h.b16 %v510
      %v588 = vunpack.c.l.b16 %v511
      %v589 = vunpack.c.h.b16 %v511
      %v590 = vunpack.c.l.b16 %v512
      %v591 = vunpack.c.h.b16 %v512
      %v592 = vunpack.c.l.b16 %v513
      %v593 = vunpack.c.h.b16 %v513
      %v594 = vunpack.c.l.b16 %v514
      %v595 = vunpack.c.h.b16 %v514
      %v596 = vunpack.c.l.b16 %v515
      %v597 = vunpack.c.h.b16 %v515
      %v598 = vunpack.c.l.b16 %v516
      %v599 = vunpack.c.h.b16 %v516
      %v600 = vunpack.c.l.b16 %v517
      %v601 = vunpack.c.h.b16 %v517
      %v602 = vunpack.c.l.b16 %v518
      %v603 = vunpack.c.h.b16 %v518
      %v604 = vunpack.c.l.b16 %v519
      %v605 = vunpack.c.h.b16 %v519
      %v606 = vunpack.c.l.b16 %v520
      %v607 = vunpack.c.h.b16 %v520
      %v608 = vunpack.c.l.b16 %v521
      %v609 = vunpack.c.h.b16 %v521
      %v610 = vunpack.c.l.b16 %v522
      %v611 = vunpack.c.h.b16 %v522
      %v612 = vunpack.c.l.b16 %v523
      %v613 = vunpack.c.h.b16 %v523
      %v614 = vunpack.c.l.b16 %v524
      %v615 = vunpack.c.h.b16 %v524
      %v616 = vunpack.c.l.b16 %v525
      %v617 = vunpack.c.h.b16 %v525
      %v618 = vunpack.c.l.b16 %v526
      %v619 = vunpack.c.h.b16 %v526
      %v620 = vunpack.c.l.b16 %v527
      %v621 = vunpack.c.h.b16 %v527
      %v622 = vunpack.c.l.b16 %v528
      %v623 = vunpack.c.h.b16 %v528
      %v624 = vunpack.c.l.b16 %v529
      %v625 = vunpack.c.h.b16 %v529
      %v626 = vunpack.c.l.b16 %v530
      %v627 = vunpack.c.h.b16 %v530
      %v628 = vunpack.c.l.b16 %v531
      %v629 = vunpack.c.h.b16 %v531
      %v630 = vunpack.c.l.b16 %v532
      %v631 = vunpack.c.h.b16 %v532
      %v632 = vunpack.c.l.b16 %v533
      %v633 = vunpack.c.h.b16 %v533
      %v634 = vunpack.c.l.b16 %v534
      %v635 = vunpack.c.h.b16 %v534
      %v636 = vunpack.c.l.b16 %v535
      %v637 = vunpack.c.h.b16 %v535
      %v638 = vunpack.c.l.b16 %v536
      %v639 = vunpack.c.h.b16 %v536
      %v640 = vunpack.c.l.b16 %v537
      %v641 = vunpack.c.h.b16 %v537
      %v642 = vunpack.c.l.b16 %v538
      %v643 = vunpack.c.h.b16 %v538
      %v644 = vunpack.c.l.b16 %v539
      %v645 = vunpack.c.h.b16 %v539
      %v646 = vunpack.c.l.b16 %v540
      %v647 = vunpack.c.h.b16 %v540
      %v648 = vpack.c.b16 %v586, %v584
      %v649 = vpack.c.b16 %v587, %v585
      %v650 = vpack.c.b16 %v590, %v588
      %v651 = vpack.c.b16 %v591, %v589
      %v652 = vpack.c.b16 %v594, %v592
      %v653 = vpack.c.b16 %v595, %v593
      %v654 = vpack.c.b16 %v598, %v596
      %v655 = vpack.c.b16 %v599, %v597
      %v656 = vpack.c.b16 %v602, %v600
      %v657 = vpack.c.b16 %v603, %v601
      %v658 = vpack.c.b16 %v606, %v604
      %v659 = vpack.c.b16 %v607, %v605
      %v660 = vpack.c.b16 %v610, %v608
      %v661 = vpack.c.b16 %v611, %v609
      %v662 = vpack.c.b16 %v614, %v612
      %v663 = vpack.c.b16 %v615, %v613
      %v664 = vpack.c.b16 %v618, %v616
      %v665 = vpack.c.b16 %v619, %v617
      %v666 = vpack.c.b16 %v622, %v620
      %v667 = vpack.c.b16 %v623, %v621
      %v668 = vpack.c.b16 %v626, %v624
      %v669 = vpack.c.b16 %v627, %v625
      %v670 = vpack.c.b16 %v630, %v628
      %v671 = vpack.c.b16 %v631, %v629
      %v672 = vpack.c.b16 %v634, %v632
      %v673 = vpack.c.b16 %v635, %v633
      %v674 = vpack.c.b16 %v638, %v636
      %v675 = vpack.c.b16 %v639, %v637
      %v676 = vpack.c.b16 %v642, %v640
      %v677 = vpack.c.b16 %v643, %v641
      %v678 = vpack.c.b16 %v646, %v644
      %v679 = vpack.c.b16 %v647, %v645
      %712 = vmatprep.subr.bf16.mxu0 %v649
      %713 = vmatpush1.bf16.msra.mxu0 %v648
      %714 = vmatprep.subr.bf16.mxu0 %v651
      %715 = vmatpush1.bf16.msra.mxu0 %v650
      %716 = vmatprep.subr.bf16.mxu0 %v653
      %717 = vmatpush1.bf16.msra.mxu0 %v652
      %718 = vmatprep.subr.bf16.mxu0 %v655
      %719 = vmatpush1.bf16.msra.mxu0 %v654
      %720 = vmatprep.subr.bf16.mxu0 %v657
      %721 = vmatpush1.bf16.msra.mxu0 %v656
      %722 = vmatprep.subr.bf16.mxu0 %v659
      %723 = vmatpush1.bf16.msra.mxu0 %v658
      %724 = vmatprep.subr.bf16.mxu0 %v661
      %725 = vmatpush1.bf16.msra.mxu0 %v660
      %726 = vmatprep.subr.bf16.mxu0 %v663
      %727 = vmatpush1.bf16.msra.mxu0 %v662
      %728 = vmatprep.subr.bf16.mxu0 %v665
      %729 = vmatpush1.bf16.msra.mxu0 %v664
      %730 = vmatprep.subr.bf16.mxu0 %v667
      %731 = vmatpush1.bf16.msra.mxu0 %v666
      %732 = vmatprep.subr.bf16.mxu0 %v669
      %733 = vmatpush1.bf16.msra.mxu0 %v668
      %734 = vmatprep.subr.bf16.mxu0 %v671
      %735 = vmatpush1.bf16.msra.mxu0 %v670
      %736 = vmatprep.subr.bf16.mxu0 %v673
      %737 = vmatpush1.bf16.msra.mxu0 %v672
      %738 = vmatprep.subr.bf16.mxu0 %v675
      %739 = vmatpush1.bf16.msra.mxu0 %v674
      %740 = vmatprep.subr.bf16.mxu0 %v677
      %741 = vmatpush1.bf16.msra.mxu0 %v676
      %742 = vmatprep.subr.bf16.mxu0 %v679
      %743 = vmatpush1.bf16.msra.mxu0 %v678
      %744 = vmatprep.mubr.bf16.mxu0 %v471
      %745 = vmatmul.mubr.bf16.gmra.mrb[0].mxu0 %v470
      %v746 = vpop.f32.mrb[0].mxu0
      %v747 = vadd.f32 %v545, %v746
      %v748 = vpop.f32.mrb[0].mxu0
      %v749 = vadd.f32 %v549, %v748
      %v750 = vpop.f32.mrb[0].mxu0
      %v751 = vadd.f32 %v545, %v750
      %v752 = vpop.f32.mrb[0].mxu0
      %v753 = vadd.f32 %v549, %v752
      %754 = vmatprep.mubr.bf16.mxu0 %v473
      %755 = vmatmul.mubr.bf16.gmra.mrb[0].mxu0 %v472
      %v756 = vpop.f32.mrb[0].mxu0
      %v757 = vadd.f32 %v545, %v756
      %v758 = vpop.f32.mrb[0].mxu0
      %v759 = vadd.f32 %v549, %v758
      %v760 = vpop.f32.mrb[0].mxu0
      %v761 = vadd.f32 %v545, %v760
      %v762 = vpop.f32.mrb[0].mxu0
      %v763 = vadd.f32 %v549, %v762
      %764 = vmatprep.mubr.bf16.mxu0 %v475
      %765 = vmatmul.mubr.bf16.gmra.mrb[0].mxu0 %v474
      %v766 = vpop.f32.mrb[0].mxu0
      %v767 = vadd.f32 %v545, %v766
      %v768 = vpop.f32.mrb[0].mxu0
      %v769 = vadd.f32 %v549, %v768
      %v770 = vpop.f32.mrb[0].mxu0
      %v771 = vadd.f32 %v545, %v770
      %v772 = vpop.f32.mrb[0].mxu0
      %v773 = vadd.f32 %v549, %v772
      %774 = vmatprep.mubr.bf16.mxu0 %v477
      %775 = vmatmul.mubr.bf16.gmra.mrb[0].mxu0 %v476
      %v776 = vpop.f32.mrb[0].mxu0
      %v777 = vadd.f32 %v545, %v776
      %v778 = vpop.f32.mrb[0].mxu0
      %v779 = vadd.f32 %v549, %v778
      %v780 = vpop.f32.mrb[0].mxu0
      %v781 = vadd.f32 %v545, %v780
      %v782 = vpop.f32.mrb[0].mxu0
      %v783 = vadd.f32 %v549, %v782
      %784 = vmatprep.mubr.bf16.mxu0 %v479
      %785 = vmatmul.mubr.bf16.gmra.mrb[0].mxu0 %v478
      %v786 = vpop.f32.mrb[0].mxu0
      %v787 = vadd.f32 %v545, %v786
      %v788 = vpop.f32.mrb[0].mxu0
      %v789 = vadd.f32 %v549, %v788
      %v790 = vpop.f32.mrb[0].mxu0
      %v791 = vadd.f32 %v545, %v790
      %v792 = vpop.f32.mrb[0].mxu0
      %v793 = vadd.f32 %v549, %v792
      %794 = vmatprep.mubr.bf16.mxu0 %v481
      %795 = vmatmul.mubr.bf16.gmra.mrb[0].mxu0 %v480
      %v796 = vpop.f32.mrb[0].mxu0
      %v797 = vadd.f32 %v545, %v796
      %v798 = vpop.f32.mrb[0].mxu0
      %v799 = vadd.f32 %v549, %v798
      %v800 = vpop.f32.mrb[0].mxu0
      %v801 = vadd.f32 %v545, %v800
      %v802 = vpop.f32.mrb[0].mxu0
      %v803 = vadd.f32 %v549, %v802
      %804 = vmatprep.mubr.bf16.mxu0 %v483
      %805 = vmatmul.mubr.bf16.gmra.mrb[0].mxu0 %v482
      %v806 = vpop.f32.mrb[0].mxu0
      %v807 = vadd.f32 %v545, %v806
      %v808 = vpop.f32.mrb[0].mxu0
      %v809 = vadd.f32 %v549, %v808
      %v810 = vpop.f32.mrb[0].mxu0
      %v811 = vadd.f32 %v545, %v810
      %v812 = vpop.f32.mrb[0].mxu0
      %v813 = vadd.f32 %v549, %v812
      %814 = vmatprep.mubr.bf16.mxu0 %v485
      %815 = vmatmul.mubr.bf16.gmra.mrb[0].mxu0 %v484
      %v816 = vpop.f32.mrb[0].mxu0
      %v817 = vadd.f32 %v545, %v816
      %v818 = vpop.f32.mrb[0].mxu0
      %v819 = vadd.f32 %v549, %v818
      %v820 = vpop.f32.mrb[0].mxu0
      %v821 = vadd.f32 %v545, %v820
      %v822 = vpop.f32.mrb[0].mxu0
      %v823 = vadd.f32 %v549, %v822
      %824 = vmatprep.mubr.bf16.mxu0 %v487
      %825 = vmatmul.mubr.bf16.gmra.mrb[0].mxu0 %v486
      %v826 = vpop.f32.mrb[0].mxu0
      %v827 = vadd.f32 %v545, %v826
      %v828 = vpop.f32.mrb[0].mxu0
      %v829 = vadd.f32 %v549, %v828
      %v830 = vpop.f32.mrb[0].mxu0
      %v831 = vadd.f32 %v545, %v830
      %v832 = vpop.f32.mrb[0].mxu0
      %v833 = vadd.f32 %v549, %v832
      %834 = vmatprep.mubr.bf16.mxu0 %v489
      %835 = vmatmul.mubr.bf16.gmra.mrb[0].mxu0 %v488
      %v836 = vpop.f32.mrb[0].mxu0
      %v837 = vadd.f32 %v545, %v836
      %v838 = vpop.f32.mrb[0].mxu0
      %v839 = vadd.f32 %v549, %v838
      %v840 = vpop.f32.mrb[0].mxu0
      %v841 = vadd.f32 %v545, %v840
      %v842 = vpop.f32.mrb[0].mxu0
      %v843 = vadd.f32 %v549, %v842
      %844 = vmatprep.mubr.bf16.mxu0 %v491
      %845 = vmatmul.mubr.bf16.gmra.mrb[0].mxu0 %v490
      %v846 = vpop.f32.mrb[0].mxu0
      %v847 = vadd.f32 %v545, %v846
      %v848 = vpop.f32.mrb[0].mxu0
      %v849 = vadd.f32 %v549, %v848
      %v850 = vpop.f32.mrb[0].mxu0
      %v851 = vadd.f32 %v545, %v850
      %v852 = vpop.f32.mrb[0].mxu0
      %v853 = vadd.f32 %v549, %v852
      %854 = vmatprep.mubr.bf16.mxu0 %v493
      %855 = vmatmul.mubr.bf16.gmra.mrb[0].mxu0 %v492
      %v856 = vpop.f32.mrb[0].mxu0
      %v857 = vadd.f32 %v545, %v856
      %v858 = vpop.f32.mrb[0].mxu0
      %v859 = vadd.f32 %v549, %v858
      %v860 = vpop.f32.mrb[0].mxu0
      %v861 = vadd.f32 %v545, %v860
      %v862 = vpop.f32.mrb[0].mxu0
      %v863 = vadd.f32 %v549, %v862
      %864 = vmatprep.mubr.bf16.mxu0 %v495
      %865 = vmatmul.mubr.bf16.gmra.mrb[0].mxu0 %v494
      %v866 = vpop.f32.mrb[0].mxu0
      %v867 = vadd.f32 %v545, %v866
      %v868 = vpop.f32.mrb[0].mxu0
      %v869 = vadd.f32 %v549, %v868
      %v870 = vpop.f32.mrb[0].mxu0
      %v871 = vadd.f32 %v545, %v870
      %v872 = vpop.f32.mrb[0].mxu0
      %v873 = vadd.f32 %v549, %v872
      %874 = vmatprep.mubr.bf16.mxu0 %v497
      %875 = vmatmul.mubr.bf16.gmra.mrb[0].mxu0 %v496
      %v876 = vpop.f32.mrb[0].mxu0
      %v877 = vadd.f32 %v545, %v876
      %v878 = vpop.f32.mrb[0].mxu0
      %v879 = vadd.f32 %v549, %v878
      %v880 = vpop.f32.mrb[0].mxu0
      %v881 = vadd.f32 %v545, %v880
      %v882 = vpop.f32.mrb[0].mxu0
      %v883 = vadd.f32 %v549, %v882
      %884 = vmatprep.mubr.bf16.mxu0 %v499
      %885 = vmatmul.mubr.bf16.gmra.mrb[0].mxu0 %v498
      %v886 = vpop.f32.mrb[0].mxu0
      %v887 = vadd.f32 %v545, %v886
      %v888 = vpop.f32.mrb[0].mxu0
      %v889 = vadd.f32 %v549, %v888
      %v890 = vpop.f32.mrb[0].mxu0
      %v891 = vadd.f32 %v545, %v890
      %v892 = vpop.f32.mrb[0].mxu0
      %v893 = vadd.f32 %v549, %v892
      %894 = vmatprep.mubr.bf16.mxu0 %v501
      %895 = vmatmul.mubr.bf16.gmra.mrb[0].mxu0 %v500
      %v896 = vpop.f32.mrb[0].mxu0
      %v897 = vadd.f32 %v545, %v896
      %v898 = vpop.f32.mrb[0].mxu0
      %v899 = vadd.f32 %v549, %v898
      %v900 = vpop.f32.mrb[0].mxu0
      %v901 = vadd.f32 %v545, %v900
      %v902 = vpop.f32.mrb[0].mxu0
      %v903 = vadd.f32 %v549, %v902
      %904 = vdwg.mxu0
      %vm905 = vcmp.gt.f32.partialorder %v747, 0.0
      %vm906 = vcmp.gt.f32.partialorder %v749, 0.0
      %vm907 = vcmp.gt.f32.partialorder %v751, 0.0
      %vm908 = vcmp.gt.f32.partialorder %v753, 0.0
      %vm909 = vcmp.gt.f32.partialorder %v757, 0.0
      %vm910 = vcmp.gt.f32.partialorder %v759, 0.0
      %vm911 = vcmp.gt.f32.partialorder %v761, 0.0
      %vm912 = vcmp.gt.f32.partialorder %v763, 0.0
      %vm913 = vcmp.gt.f32.partialorder %v767, 0.0
      %vm914 = vcmp.gt.f32.partialorder %v769, 0.0
      %vm915 = vcmp.gt.f32.partialorder %v771, 0.0
      %vm916 = vcmp.gt.f32.partialorder %v773, 0.0
      %vm917 = vcmp.gt.f32.partialorder %v777, 0.0
      %vm918 = vcmp.gt.f32.partialorder %v779, 0.0
      %vm919 = vcmp.gt.f32.partialorder %v781, 0.0
      %vm920 = vcmp.gt.f32.partialorder %v783, 0.0
      %vm921 = vcmp.gt.f32.partialorder %v787, 0.0
      %vm922 = vcmp.gt.f32.partialorder %v789, 0.0
      %vm923 = vcmp.gt.f32.partialorder %v791, 0.0
      %vm924 = vcmp.gt.f32.partialorder %v793, 0.0
      %vm925 = vcmp.gt.f32.partialorder %v797, 0.0
      %vm926 = vcmp.gt.f32.partialorder %v799, 0.0
      %vm927 = vcmp.gt.f32.partialorder %v801, 0.0
      %vm928 = vcmp.gt.f32.partialorder %v803, 0.0
      %vm929 = vcmp.gt.f32.partialorder %v807, 0.0
      %vm930 = vcmp.gt.f32.partialorder %v809, 0.0
      %vm931 = vcmp.gt.f32.partialorder %v811, 0.0
      %vm932 = vcmp.gt.f32.partialorder %v813, 0.0
      %vm933 = vcmp.gt.f32.partialorder %v817, 0.0
      %vm934 = vcmp.gt.f32.partialorder %v819, 0.0
      %vm935 = vcmp.gt.f32.partialorder %v821, 0.0
      %vm936 = vcmp.gt.f32.partialorder %v823, 0.0
      %vm937 = vcmp.gt.f32.partialorder %v827, 0.0
      %vm938 = vcmp.gt.f32.partialorder %v829, 0.0
      %vm939 = vcmp.gt.f32.partialorder %v831, 0.0
      %vm940 = vcmp.gt.f32.partialorder %v833, 0.0
      %vm941 = vcmp.gt.f32.partialorder %v837, 0.0
      %vm942 = vcmp.gt.f32.partialorder %v839, 0.0
      %vm943 = vcmp.gt.f32.partialorder %v841, 0.0
      %vm944 = vcmp.gt.f32.partialorder %v843, 0.0
      %vm945 = vcmp.gt.f32.partialorder %v847, 0.0
      %vm946 = vcmp.gt.f32.partialorder %v849, 0.0
      %vm947 = vcmp.gt.f32.partialorder %v851, 0.0
      %vm948 = vcmp.gt.f32.partialorder %v853, 0.0
      %vm949 = vcmp.gt.f32.partialorder %v857, 0.0
      %vm950 = vcmp.gt.f32.partialorder %v859, 0.0
      %vm951 = vcmp.gt.f32.partialorder %v861, 0.0
      %vm952 = vcmp.gt.f32.partialorder %v863, 0.0
      %vm953 = vcmp.gt.f32.partialorder %v867, 0.0
      %vm954 = vcmp.gt.f32.partialorder %v869, 0.0
      %vm955 = vcmp.gt.f32.partialorder %v871, 0.0
      %vm956 = vcmp.gt.f32.partialorder %v873, 0.0
      %vm957 = vcmp.gt.f32.partialorder %v877, 0.0
      %vm958 = vcmp.gt.f32.partialorder %v879, 0.0
      %vm959 = vcmp.gt.f32.partialorder %v881, 0.0
      %vm960 = vcmp.gt.f32.partialorder %v883, 0.0
      %vm961 = vcmp.gt.f32.partialorder %v887, 0.0
      %vm962 = vcmp.gt.f32.partialorder %v889, 0.0
      %vm963 = vcmp.gt.f32.partialorder %v891, 0.0
      %vm964 = vcmp.gt.f32.partialorder %v893, 0.0
      %vm965 = vcmp.gt.f32.partialorder %v897, 0.0
      %vm966 = vcmp.gt.f32.partialorder %v899, 0.0
      %vm967 = vcmp.gt.f32.partialorder %v901, 0.0
      %vm968 = vcmp.gt.f32.partialorder %v903, 0.0
      %v969 = vmul.f32 %v747, 0.2
      %v970 = vmul.f32 %v749, 0.2
      %v971 = vmul.f32 %v751, 0.2
      %v972 = vmul.f32 %v753, 0.2
      %v973 = vmul.f32 %v757, 0.2
      %v974 = vmul.f32 %v759, 0.2
      %v975 = vmul.f32 %v761, 0.2
      %v976 = vmul.f32 %v763, 0.2
      %v977 = vmul.f32 %v767, 0.2
      %v978 = vmul.f32 %v769, 0.2
      %v979 = vmul.f32 %v771, 0.2
      %v980 = vmul.f32 %v773, 0.2
      %v981 = vmul.f32 %v777, 0.2
      %v982 = vmul.f32 %v779, 0.2
      %v983 = vmul.f32 %v781, 0.2
      %v984 = vmul.f32 %v783, 0.2
      %v985 = vmul.f32 %v787, 0.2
      %v986 = vmul.f32 %v789, 0.2
      %v987 = vmul.f32 %v791, 0.2
      %v988 = vmul.f32 %v793, 0.2
      %v989 = vmul.f32 %v797, 0.2
      %v990 = vmul.f32 %v799, 0.2
      %v991 = vmul.f32 %v801, 0.2
      %v992 = vmul.f32 %v803, 0.2
      %v993 = vmul.f32 %v807, 0.2
      %v994 = vmul.f32 %v809, 0.2
      %v995 = vmul.f32 %v811, 0.2
      %v996 = vmul.f32 %v813, 0.2
      %v997 = vmul.f32 %v817, 0.2
      %v998 = vmul.f32 %v819, 0.2
      %v999 = vmul.f32 %v821, 0.2
      %v1000 = vmul.f32 %v823, 0.2
      %v1001 = vmul.f32 %v827, 0.2
      %v1002 = vmul.f32 %v829, 0.2
      %v1003 = vmul.f32 %v831, 0.2
      %v1004 = vmul.f32 %v833, 0.2
      %v1005 = vmul.f32 %v837, 0.2
      %v1006 = vmul.f32 %v839, 0.2
      %v1007 = vmul.f32 %v841, 0.2
      %v1008 = vmul.f32 %v843, 0.2
      %v1009 = vmul.f32 %v847, 0.2
      %v1010 = vmul.f32 %v849, 0.2
      %v1011 = vmul.f32 %v851, 0.2
      %v1012 = vmul.f32 %v853, 0.2
      %v1013 = vmul.f32 %v857, 0.2
      %v1014 = vmul.f32 %v859, 0.2
      %v1015 = vmul.f32 %v861, 0.2
      %v1016 = vmul.f32 %v863, 0.2
      %v1017 = vmul.f32 %v867, 0.2
      %v1018 = vmul.f32 %v869, 0.2
      %v1019 = vmul.f32 %v871, 0.2
      %v1020 = vmul.f32 %v873, 0.2
      %v1021 = vmul.f32 %v877, 0.2
      %v1022 = vmul.f32 %v879, 0.2
      %v1023 = vmul.f32 %v881, 0.2
      %v1024 = vmul.f32 %v883, 0.2
      %v1025 = vmul.f32 %v887, 0.2
      %v1026 = vmul.f32 %v889, 0.2
      %v1027 = vmul.f32 %v891, 0.2
      %v1028 = vmul.f32 %v893, 0.2
      %v1029 = vmul.f32 %v897, 0.2
      %v1030 = vmul.f32 %v899, 0.2
      %v1031 = vmul.f32 %v901, 0.2
      %v1032 = vmul.f32 %v903, 0.2
      %v1033 = vsel %vm905, %v747, %v969
      %v1034 = vsel %vm906, %v749, %v970
      %v1035 = vsel %vm907, %v751, %v971
      %v1036 = vsel %vm908, %v753, %v972
      %v1037 = vsel %vm909, %v757, %v973
      %v1038 = vsel %vm910, %v759, %v974
      %v1039 = vsel %vm911, %v761, %v975
      %v1040 = vsel %vm912, %v763, %v976
      %v1041 = vsel %vm913, %v767, %v977
      %v1042 = vsel %vm914, %v769, %v978
      %v1043 = vsel %vm915, %v771, %v979
      %v1044 = vsel %vm916, %v773, %v980
      %v1045 = vsel %vm917, %v777, %v981
      %v1046 = vsel %vm918, %v779, %v982
      %v1047 = vsel %vm919, %v781, %v983
      %v1048 = vsel %vm920, %v783, %v984
      %v1049 = vsel %vm921, %v787, %v985
      %v1050 = vsel %vm922, %v789, %v986
      %v1051 = vsel %vm923, %v791, %v987
      %v1052 = vsel %vm924, %v793, %v988
      %v1053 = vsel %vm925, %v797, %v989
      %v1054 = vsel %vm926, %v799, %v990
      %v1055 = vsel %vm927, %v801, %v991
      %v1056 = vsel %vm928, %v803, %v992
      %v1057 = vsel %vm929, %v807, %v993
      %v1058 = vsel %vm930, %v809, %v994
      %v1059 = vsel %vm931, %v811, %v995
      %v1060 = vsel %vm932, %v813, %v996
      %v1061 = vsel %vm933, %v817, %v997
      %v1062 = vsel %vm934, %v819, %v998
      %v1063 = vsel %vm935, %v821, %v999
      %v1064 = vsel %vm936, %v823, %v1000
      %v1065 = vsel %vm937, %v827, %v1001
      %v1066 = vsel %vm938, %v829, %v1002
      %v1067 = vsel %vm939, %v831, %v1003
      %v1068 = vsel %vm940, %v833, %v1004
      %v1069 = vsel %vm941, %v837, %v1005
      %v1070 = vsel %vm942, %v839, %v1006
      %v1071 = vsel %vm943, %v841, %v1007
      %v1072 = vsel %vm944, %v843, %v1008
      %v1073 = vsel %vm945, %v847, %v1009
      %v1074 = vsel %vm946, %v849, %v1010
      %v1075 = vsel %vm947, %v851, %v1011
      %v1076 = vsel %vm948, %v853, %v1012
      %v1077 = vsel %vm949, %v857, %v1013
      %v1078 = vsel %vm950, %v859, %v1014
      %v1079 = vsel %vm951, %v861, %v1015
      %v1080 = vsel %vm952, %v863, %v1016
      %v1081 = vsel %vm953, %v867, %v1017
      %v1082 = vsel %vm954, %v869, %v1018
      %v1083 = vsel %vm955, %v871, %v1019
      %v1084 = vsel %vm956, %v873, %v1020
      %v1085 = vsel %vm957, %v877, %v1021
      %v1086 = vsel %vm958, %v879, %v1022
      %v1087 = vsel %vm959, %v881, %v1023
      %v1088 = vsel %vm960, %v883, %v1024
      %v1089 = vsel %vm961, %v887, %v1025
      %v1090 = vsel %vm962, %v889, %v1026
      %v1091 = vsel %vm963, %v891, %v1027
      %v1092 = vsel %vm964, %v893, %v1028
      %v1093 = vsel %vm965, %v897, %v1029
      %v1094 = vsel %vm966, %v899, %v1030
      %v1095 = vsel %vm967, %v901, %v1031
      %v1096 = vsel %vm968, %v903, %v1032
      %v1097 = vpack.c.bf16 %v1035, %v1033
      %v1098 = vpack.c.bf16 %v1036, %v1034
      %v1099 = vpack.c.bf16 %v1039, %v1037
      %v1100 = vpack.c.bf16 %v1040, %v1038
      %v1101 = vpack.c.bf16 %v1043, %v1041
      %v1102 = vpack.c.bf16 %v1044, %v1042
      %v1103 = vpack.c.bf16 %v1047, %v1045
      %v1104 = vpack.c.bf16 %v1048, %v1046
      %v1105 = vpack.c.bf16 %v1051, %v1049
      %v1106 = vpack.c.bf16 %v1052, %v1050
      %v1107 = vpack.c.bf16 %v1055, %v1053
      %v1108 = vpack.c.bf16 %v1056, %v1054
      %v1109 = vpack.c.bf16 %v1059, %v1057
      %v1110 = vpack.c.bf16 %v1060, %v1058
      %v1111 = vpack.c.bf16 %v1063, %v1061
      %v1112 = vpack.c.bf16 %v1064, %v1062
      %v1113 = vpack.c.bf16 %v1067, %v1065
      %v1114 = vpack.c.bf16 %v1068, %v1066
      %v1115 = vpack.c.bf16 %v1071, %v1069
      %v1116 = vpack.c.bf16 %v1072, %v1070
      %v1117 = vpack.c.bf16 %v1075, %v1073
      %v1118 = vpack.c.bf16 %v1076, %v1074
      %v1119 = vpack.c.bf16 %v1079, %v1077
      %v1120 = vpack.c.bf16 %v1080, %v1078
      %v1121 = vpack.c.bf16 %v1083, %v1081
      %v1122 = vpack.c.bf16 %v1084, %v1082
      %v1123 = vpack.c.bf16 %v1087, %v1085
      %v1124 = vpack.c.bf16 %v1088, %v1086
      %v1125 = vpack.c.bf16 %v1091, %v1089
      %v1126 = vpack.c.bf16 %v1092, %v1090
      %v1127 = vpack.c.bf16 %v1095, %v1093
      %v1128 = vpack.c.bf16 %v1096, %v1094
      %v1129 = vld [vmem:[%s2] sm:$0xf]
      %v1130 = vld [vmem:[%s2 + $0x4] sm:$0xf]
      %v1131 = vld [vmem:[%s2 + $0x8] sm:$0xf]
      %v1132 = vld [vmem:[%s2 + $0xc] sm:$0xf]
      %v1133 = vld [vmem:[%s2 + $0x10] sm:$0xf]
      %v1134 = vld [vmem:[%s2 + $0x14] sm:$0xf]
      %v1135 = vld [vmem:[%s2 + $0x18] sm:$0xf]
      %v1136 = vld [vmem:[%s2 + $0x1c] sm:$0xf]
      %v1137 = vld [vmem:[%s2 + $0x20] sm:$0xf]
      %v1138 = vld [vmem:[%s2 + $0x24] sm:$0xf]
      %v1139 = vld [vmem:[%s2 + $0x28] sm:$0xf]
      %v1140 = vld [vmem:[%s2 + $0x2c] sm:$0xf]
      %v1141 = vld [vmem:[%s2 + $0x30] sm:$0xf]
      %v1142 = vld [vmem:[%s2 + $0x34] sm:$0xf]
      %v1143 = vld [vmem:[%s2 + $0x38] sm:$0xf]
      %v1144 = vld [vmem:[%s2 + $0x3c] sm:$0xf]
      %v1145 = vld [vmem:[%s2 + $0x40] sm:$0xf]
      %v1146 = vld [vmem:[%s2 + $0x44] sm:$0xf]
      %v1147 = vld [vmem:[%s2 + $0x48] sm:$0xf]
      %v1148 = vld [vmem:[%s2 + $0x4c] sm:$0xf]
      %v1149 = vld [vmem:[%s2 + $0x50] sm:$0xf]
      %v1150 = vld [vmem:[%s2 + $0x54] sm:$0xf]
      %v1151 = vld [vmem:[%s2 + $0x58] sm:$0xf]
      %v1152 = vld [vmem:[%s2 + $0x5c] sm:$0xf]
      %v1153 = vld [vmem:[%s2 + $0x60] sm:$0xf]
      %v1154 = vld [vmem:[%s2 + $0x64] sm:$0xf]
      %v1155 = vld [vmem:[%s2 + $0x68] sm:$0xf]
      %v1156 = vld [vmem:[%s2 + $0x6c] sm:$0xf]
      %v1157 = vld [vmem:[%s2 + $0x70] sm:$0xf]
      %v1158 = vld [vmem:[%s2 + $0x74] sm:$0xf]
      %v1159 = vld [vmem:[%s2 + $0x78] sm:$0xf]
      %v1160 = vld [vmem:[%s2 + $0x7c] sm:$0xf]
      %v1193 = vunpack.c.l.b16 %v1129
      %v1194 = vunpack.c.l.b16 %v1130
      %v1195 = vunpack.c.l.b16 %v1131
      %v1196 = vunpack.c.l.b16 %v1132
      %v1197 = vunpack.c.l.b16 %v1133
      %v1198 = vunpack.c.l.b16 %v1134
      %v1199 = vunpack.c.l.b16 %v1135
      %v1200 = vunpack.c.l.b16 %v1136
      %v1201 = vunpack.c.l.b16 %v1137
      %v1202 = vunpack.c.l.b16 %v1138
      %v1203 = vunpack.c.l.b16 %v1139
      %v1204 = vunpack.c.l.b16 %v1140
      %v1205 = vunpack.c.l.b16 %v1141
      %v1206 = vunpack.c.l.b16 %v1142
      %v1207 = vunpack.c.l.b16 %v1143
      %v1208 = vunpack.c.l.b16 %v1144
      %v1209 = vunpack.c.l.b16 %v1145
      %v1210 = vunpack.c.l.b16 %v1146
      %v1211 = vunpack.c.l.b16 %v1147
      %v1212 = vunpack.c.l.b16 %v1148
      %v1213 = vunpack.c.l.b16 %v1149
      %v1214 = vunpack.c.l.b16 %v1150
      %v1215 = vunpack.c.l.b16 %v1151
      %v1216 = vunpack.c.l.b16 %v1152
      %v1217 = vunpack.c.l.b16 %v1153
      %v1218 = vunpack.c.l.b16 %v1154
      %v1219 = vunpack.c.l.b16 %v1155
      %v1220 = vunpack.c.l.b16 %v1156
      %v1221 = vunpack.c.l.b16 %v1157
      %v1222 = vunpack.c.l.b16 %v1158
      %v1223 = vunpack.c.l.b16 %v1159
      %v1224 = vunpack.c.l.b16 %v1160
      %v1225 = vpack.c.b16 %v1194, %v1193
      %v1226 = vpack.c.b16 %v1196, %v1195
      %v1227 = vpack.c.b16 %v1198, %v1197
      %v1228 = vpack.c.b16 %v1200, %v1199
      %v1229 = vpack.c.b16 %v1202, %v1201
      %v1230 = vpack.c.b16 %v1204, %v1203
      %v1231 = vpack.c.b16 %v1206, %v1205
      %v1232 = vpack.c.b16 %v1208, %v1207
      %v1233 = vpack.c.b16 %v1210, %v1209
      %v1234 = vpack.c.b16 %v1212, %v1211
      %v1235 = vpack.c.b16 %v1214, %v1213
      %v1236 = vpack.c.b16 %v1216, %v1215
      %v1237 = vpack.c.b16 %v1218, %v1217
      %v1238 = vpack.c.b16 %v1220, %v1219
      %v1239 = vpack.c.b16 %v1222, %v1221
      %v1240 = vpack.c.b16 %v1224, %v1223
      %1257 = vmatprep.subr.bf16.mxu0 0
      %1258 = vmatpush1.bf16.msra.mxu0 %v1225
      %1259 = vmatprep.subr.bf16.mxu0 0
      %1260 = vmatpush1.bf16.msra.mxu0 %v1226
      %1261 = vmatprep.subr.bf16.mxu0 0
      %1262 = vmatpush1.bf16.msra.mxu0 %v1227
      %1263 = vmatprep.subr.bf16.mxu0 0
      %1264 = vmatpush1.bf16.msra.mxu0 %v1228
      %1265 = vmatprep.subr.bf16.mxu0 0
      %1266 = vmatpush1.bf16.msra.mxu0 %v1229
      %1267 = vmatprep.subr.bf16.mxu0 0
      %1268 = vmatpush1.bf16.msra.mxu0 %v1230
      %1269 = vmatprep.subr.bf16.mxu0 0
      %1270 = vmatpush1.bf16.msra.mxu0 %v1231
      %1271 = vmatprep.subr.bf16.mxu0 0
      %1272 = vmatpush1.bf16.msra.mxu0 %v1232
      %1273 = vmatprep.subr.bf16.mxu0 0
      %1274 = vmatpush1.bf16.msra.mxu0 %v1233
      %1275 = vmatprep.subr.bf16.mxu0 0
      %1276 = vmatpush1.bf16.msra.mxu0 %v1234
      %1277 = vmatprep.subr.bf16.mxu0 0
      %1278 = vmatpush1.bf16.msra.mxu0 %v1235
      %1279 = vmatprep.subr.bf16.mxu0 0
      %1280 = vmatpush1.bf16.msra.mxu0 %v1236
      %1281 = vmatprep.subr.bf16.mxu0 0
      %1282 = vmatpush1.bf16.msra.mxu0 %v1237
      %1283 = vmatprep.subr.bf16.mxu0 0
      %1284 = vmatpush1.bf16.msra.mxu0 %v1238
      %1285 = vmatprep.subr.bf16.mxu0 0
      %1286 = vmatpush1.bf16.msra.mxu0 %v1239
      %1287 = vmatprep.subr.bf16.mxu0 0
      %1288 = vmatpush1.bf16.msra.mxu0 %v1240
      %1289 = vmatprep.mubr.bf16.mxu0 %v1098
      %1290 = vmatmul.mubr.bf16.gmra.mrb[0].mxu0 %v1097
      %v1291 = vpop.f32.mrb[0].mxu0
      %v1292 = vadd.f32 %v503, %v1291
      %v1293 = vpop.f32.mrb[0].mxu0
      %v1294 = vpop.f32.mrb[0].mxu0
      %v1295 = vadd.f32 %v503, %v1294
      %v1296 = vpop.f32.mrb[0].mxu0
      %1297 = vmatprep.mubr.bf16.mxu0 %v1100
      %1298 = vmatmul.mubr.bf16.gmra.mrb[0].mxu0 %v1099
      %v1299 = vpop.f32.mrb[0].mxu0
      %v1300 = vadd.f32 %v503, %v1299
      %v1301 = vpop.f32.mrb[0].mxu0
      %v1302 = vpop.f32.mrb[0].mxu0
      %v1303 = vadd.f32 %v503, %v1302
      %v1304 = vpop.f32.mrb[0].mxu0
      %1305 = vmatprep.mubr.bf16.mxu0 %v1102
      %1306 = vmatmul.mubr.bf16.gmra.mrb[0].mxu0 %v1101
      %v1307 = vpop.f32.mrb[0].mxu0
      %v1308 = vadd.f32 %v503, %v1307
      %v1309 = vpop.f32.mrb[0].mxu0
      %v1310 = vpop.f32.mrb[0].mxu0
      %v1311 = vadd.f32 %v503, %v1310
      %v1312 = vpop.f32.mrb[0].mxu0
      %1313 = vmatprep.mubr.bf16.mxu0 %v1104
      %1314 = vmatmul.mubr.bf16.gmra.mrb[0].mxu0 %v1103
      %v1315 = vpop.f32.mrb[0].mxu0
      %v1316 = vadd.f32 %v503, %v1315
      %v1317 = vpop.f32.mrb[0].mxu0
      %v1318 = vpop.f32.mrb[0].mxu0
      %v1319 = vadd.f32 %v503, %v1318
      %v1320 = vpop.f32.mrb[0].mxu0
      %1321 = vmatprep.mubr.bf16.mxu0 %v1106
      %1322 = vmatmul.mubr.bf16.gmra.mrb[0].mxu0 %v1105
      %v1323 = vpop.f32.mrb[0].mxu0
      %v1324 = vadd.f32 %v503, %v1323
      %v1325 = vpop.f32.mrb[0].mxu0
      %v1326 = vpop.f32.mrb[0].mxu0
      %v1327 = vadd.f32 %v503, %v1326
      %v1328 = vpop.f32.mrb[0].mxu0
      %1329 = vmatprep.mubr.bf16.mxu0 %v1108
      %1330 = vmatmul.mubr.bf16.gmra.mrb[0].mxu0 %v1107
      %v1331 = vpop.f32.mrb[0].mxu0
      %v1332 = vadd.f32 %v503, %v1331
      %v1333 = vpop.f32.mrb[0].mxu0
      %v1334 = vpop.f32.mrb[0].mxu0
      %v1335 = vadd.f32 %v503, %v1334
      %v1336 = vpop.f32.mrb[0].mxu0
      %1337 = vmatprep.mubr.bf16.mxu0 %v1110
      %1338 = vmatmul.mubr.bf16.gmra.mrb[0].mxu0 %v1109
      %v1339 = vpop.f32.mrb[0].mxu0
      %v1340 = vadd.f32 %v503, %v1339
      %v1341 = vpop.f32.mrb[0].mxu0
      %v1342 = vpop.f32.mrb[0].mxu0
      %v1343 = vadd.f32 %v503, %v1342
      %v1344 = vpop.f32.mrb[0].mxu0
      %1345 = vmatprep.mubr.bf16.mxu0 %v1112
      %1346 = vmatmul.mubr.bf16.gmra.mrb[0].mxu0 %v1111
      %v1347 = vpop.f32.mrb[0].mxu0
      %v1348 = vadd.f32 %v503, %v1347
      %v1349 = vpop.f32.mrb[0].mxu0
      %v1350 = vpop.f32.mrb[0].mxu0
      %v1351 = vadd.f32 %v503, %v1350
      %v1352 = vpop.f32.mrb[0].mxu0
      %1353 = vmatprep.mubr.bf16.mxu0 %v1114
      %1354 = vmatmul.mubr.bf16.gmra.mrb[0].mxu0 %v1113
      %v1355 = vpop.f32.mrb[0].mxu0
      %v1356 = vadd.f32 %v503, %v1355
      %v1357 = vpop.f32.mrb[0].mxu0
      %v1358 = vpop.f32.mrb[0].mxu0
      %v1359 = vadd.f32 %v503, %v1358
      %v1360 = vpop.f32.mrb[0].mxu0
      %1361 = vmatprep.mubr.bf16.mxu0 %v1116
      %1362 = vmatmul.mubr.bf16.gmra.mrb[0].mxu0 %v1115
      %v1363 = vpop.f32.mrb[0].mxu0
      %v1364 = vadd.f32 %v503, %v1363
      %v1365 = vpop.f32.mrb[0].mxu0
      %v1366 = vpop.f32.mrb[0].mxu0
      %v1367 = vadd.f32 %v503, %v1366
      %v1368 = vpop.f32.mrb[0].mxu0
      %1369 = vmatprep.mubr.bf16.mxu0 %v1118
      %1370 = vmatmul.mubr.bf16.gmra.mrb[0].mxu0 %v1117
      %v1371 = vpop.f32.mrb[0].mxu0
      %v1372 = vadd.f32 %v503, %v1371
      %v1373 = vpop.f32.mrb[0].mxu0
      %v1374 = vpop.f32.mrb[0].mxu0
      %v1375 = vadd.f32 %v503, %v1374
      %v1376 = vpop.f32.mrb[0].mxu0
      %1377 = vmatprep.mubr.bf16.mxu0 %v1120
      %1378 = vmatmul.mubr.bf16.gmra.mrb[0].mxu0 %v1119
      %v1379 = vpop.f32.mrb[0].mxu0
      %v1380 = vadd.f32 %v503, %v1379
      %v1381 = vpop.f32.mrb[0].mxu0
      %v1382 = vpop.f32.mrb[0].mxu0
      %v1383 = vadd.f32 %v503, %v1382
      %v1384 = vpop.f32.mrb[0].mxu0
      %1385 = vmatprep.mubr.bf16.mxu0 %v1122
      %1386 = vmatmul.mubr.bf16.gmra.mrb[0].mxu0 %v1121
      %v1387 = vpop.f32.mrb[0].mxu0
      %v1388 = vadd.f32 %v503, %v1387
      %v1389 = vpop.f32.mrb[0].mxu0
      %v1390 = vpop.f32.mrb[0].mxu0
      %v1391 = vadd.f32 %v503, %v1390
      %v1392 = vpop.f32.mrb[0].mxu0
      %1393 = vmatprep.mubr.bf16.mxu0 %v1124
      %1394 = vmatmul.mubr.bf16.gmra.mrb[0].mxu0 %v1123
      %v1395 = vpop.f32.mrb[0].mxu0
      %v1396 = vadd.f32 %v503, %v1395
      %v1397 = vpop.f32.mrb[0].mxu0
      %v1398 = vpop.f32.mrb[0].mxu0
      %v1399 = vadd.f32 %v503, %v1398
      %v1400 = vpop.f32.mrb[0].mxu0
      %1401 = vmatprep.mubr.bf16.mxu0 %v1126
      %1402 = vmatmul.mubr.bf16.gmra.mrb[0].mxu0 %v1125
      %v1403 = vpop.f32.mrb[0].mxu0
      %v1404 = vadd.f32 %v503, %v1403
      %v1405 = vpop.f32.mrb[0].mxu0
      %v1406 = vpop.f32.mrb[0].mxu0
      %v1407 = vadd.f32 %v503, %v1406
      %v1408 = vpop.f32.mrb[0].mxu0
      %1409 = vmatprep.mubr.bf16.mxu0 %v1128
      %1410 = vmatmul.mubr.bf16.gmra.mrb[0].mxu0 %v1127
      %v1411 = vpop.f32.mrb[0].mxu0
      %v1412 = vadd.f32 %v503, %v1411
      %v1413 = vpop.f32.mrb[0].mxu0
      %v1414 = vpop.f32.mrb[0].mxu0
      %v1415 = vadd.f32 %v503, %v1414
      %v1416 = vpop.f32.mrb[0].mxu0
      %1417 = vdwg.mxu0
      %1418 = vst [vmem:[%s393] sm:$0xff] %v1292
      %1419 = vst [vmem:[%s393 + $0x8] sm:$0xff] %v1295
      %1420 = vst [vmem:[%s393 + $0x10] sm:$0xff] %v1300
      %1421 = vst [vmem:[%s393 + $0x18] sm:$0xff] %v1303
      %1422 = vst [vmem:[%s393 + $0x20] sm:$0xff] %v1308
      %1423 = vst [vmem:[%s393 + $0x28] sm:$0xff] %v1311
      %1424 = vst [vmem:[%s393 + $0x30] sm:$0xff] %v1316
      %1425 = vst [vmem:[%s393 + $0x38] sm:$0xff] %v1319
      %1426 = vst [vmem:[%s393 + $0x40] sm:$0xff] %v1324
      %1427 = vst [vmem:[%s393 + $0x48] sm:$0xff] %v1327
      %1428 = vst [vmem:[%s393 + $0x50] sm:$0xff] %v1332
      %1429 = vst [vmem:[%s393 + $0x58] sm:$0xff] %v1335
      %1430 = vst [vmem:[%s393 + $0x60] sm:$0xff] %v1340
      %1431 = vst [vmem:[%s393 + $0x68] sm:$0xff] %v1343
      %1432 = vst [vmem:[%s393 + $0x70] sm:$0xff] %v1348
      %1433 = vst [vmem:[%s393 + $0x78] sm:$0xff] %v1351
      %1434 = vst [vmem:[%s393 + $0x80] sm:$0xff] %v1356
      %1435 = vst [vmem:[%s393 + $0x88] sm:$0xff] %v1359
      %1436 = vst [vmem:[%s393 + $0x90] sm:$0xff] %v1364
      %1437 = vst [vmem:[%s393 + $0x98] sm:$0xff] %v1367
      %1438 = vst [vmem:[%s393 + $0xa0] sm:$0xff] %v1372
      %1439 = vst [vmem:[%s393 + $0xa8] sm:$0xff] %v1375
      %1440 = vst [vmem:[%s393 + $0xb0] sm:$0xff] %v1380
      %1441 = vst [vmem:[%s393 + $0xb8] sm:$0xff] %v1383
      %1442 = vst [vmem:[%s393 + $0xc0] sm:$0xff] %v1388
      %1443 = vst [vmem:[%s393 + $0xc8] sm:$0xff] %v1391
      %1444 = vst [vmem:[%s393 + $0xd0] sm:$0xff] %v1396
      %1445 = vst [vmem:[%s393 + $0xd8] sm:$0xff] %v1399
      %1446 = vst [vmem:[%s393 + $0xe0] sm:$0xff] %v1404
      %1447 = vst [vmem:[%s393 + $0xe8] sm:$0xff] %v1407
      %1448 = vst [vmem:[%s393 + $0xf0] sm:$0xff] %v1412
      %1449 = vst [vmem:[%s393 + $0xf8] sm:$0xff] %v1415
      %v1450 = vpack.c.bf16 %v1295, %v1292
      %v1451 = vpack.c.bf16 %v1303, %v1300
      %v1452 = vpack.c.bf16 %v1311, %v1308
      %v1453 = vpack.c.bf16 %v1319, %v1316
      %v1454 = vpack.c.bf16 %v1327, %v1324
      %v1455 = vpack.c.bf16 %v1335, %v1332
      %v1456 = vpack.c.bf16 %v1343, %v1340
      %v1457 = vpack.c.bf16 %v1351, %v1348
      %v1458 = vpack.c.bf16 %v1359, %v1356
      %v1459 = vpack.c.bf16 %v1367, %v1364
      %v1460 = vpack.c.bf16 %v1375, %v1372
      %v1461 = vpack.c.bf16 %v1383, %v1380
      %v1462 = vpack.c.bf16 %v1391, %v1388
      %v1463 = vpack.c.bf16 %v1399, %v1396
      %v1464 = vpack.c.bf16 %v1407, %v1404
      %v1465 = vpack.c.bf16 %v1415, %v1412
      %v1466 = vld [vmem:[%s3] sm:$0xff]
      %v1467 = vld [vmem:[%s3 + $0x8] sm:$0xff]
      %v1468 = vld [vmem:[%s3 + $0x10] sm:$0xff]
      %v1469 = vld [vmem:[%s3 + $0x18] sm:$0xff]
      %v1470 = vld [vmem:[%s3 + $0x20] sm:$0xff]
      %v1471 = vld [vmem:[%s3 + $0x28] sm:$0xff]
      %v1472 = vld [vmem:[%s3 + $0x30] sm:$0xff]
      %v1473 = vld [vmem:[%s3 + $0x38] sm:$0xff]
      %v1474 = vld [vmem:[%s3 + $0x40] sm:$0xff]
      %v1475 = vld [vmem:[%s3 + $0x48] sm:$0xff]
      %v1476 = vld [vmem:[%s3 + $0x50] sm:$0xff]
      %v1477 = vld [vmem:[%s3 + $0x58] sm:$0xff]
      %v1478 = vld [vmem:[%s3 + $0x60] sm:$0xff]
      %v1479 = vld [vmem:[%s3 + $0x68] sm:$0xff]
      %v1480 = vld [vmem:[%s3 + $0x70] sm:$0xff]
      %v1481 = vld [vmem:[%s3 + $0x78] sm:$0xff]
      %v1483 = vlaneseq
      %v1484 = vshrl.u32 %v1483, 7
      %v1485 = vsub.s32 0, %v1484
      %v1486 = vrot.slane %v505, %v1485
      %v1487 = vlaneseq
      %v1488 = vshrl.u32 %v1487, 7
      %v1489 = vsub.s32 1, %v1488
      %v1490 = vrot.slane %v505, %v1489
      %v1509 = vunpack.c.l.b16 %v1466
      %v1510 = vunpack.c.h.b16 %v1466
      %v1511 = vunpack.c.l.b16 %v1467
      %v1512 = vunpack.c.h.b16 %v1467
      %v1513 = vunpack.c.l.b16 %v1468
      %v1514 = vunpack.c.h.b16 %v1468
      %v1515 = vunpack.c.l.b16 %v1469
      %v1516 = vunpack.c.h.b16 %v1469
      %v1517 = vunpack.c.l.b16 %v1470
      %v1518 = vunpack.c.h.b16 %v1470
      %v1519 = vunpack.c.l.b16 %v1471
      %v1520 = vunpack.c.h.b16 %v1471
      %v1521 = vunpack.c.l.b16 %v1472
      %v1522 = vunpack.c.h.b16 %v1472
      %v1523 = vunpack.c.l.b16 %v1473
      %v1524 = vunpack.c.h.b16 %v1473
      %v1525 = vunpack.c.l.b16 %v1474
      %v1526 = vunpack.c.h.b16 %v1474
      %v1527 = vunpack.c.l.b16 %v1475
      %v1528 = vunpack.c.h.b16 %v1475
      %v1529 = vunpack.c.l.b16 %v1476
      %v1530 = vunpack.c.h.b16 %v1476
      %v1531 = vunpack.c.l.b16 %v1477
      %v1532 = vunpack.c.h.b16 %v1477
      %v1533 = vunpack.c.l.b16 %v1478
      %v1534 = vunpack.c.h.b16 %v1478
      %v1535 = vunpack.c.l.b16 %v1479
      %v1536 = vunpack.c.h.b16 %v1479
      %v1537 = vunpack.c.l.b16 %v1480
      %v1538 = vunpack.c.h.b16 %v1480
      %v1539 = vunpack.c.l.b16 %v1481
      %v1540 = vunpack.c.h.b16 %v1481
      %v1541 = vpack.c.b16 %v1511, %v1509
      %v1542 = vpack.c.b16 %v1512, %v1510
      %v1543 = vpack.c.b16 %v1515, %v1513
      %v1544 = vpack.c.b16 %v1516, %v1514
      %v1545 = vpack.c.b16 %v1519, %v1517
      %v1546 = vpack.c.b16 %v1520, %v1518
      %v1547 = vpack.c.b16 %v1523, %v1521
      %v1548 = vpack.c.b16 %v1524, %v1522
      %v1549 = vpack.c.b16 %v1527, %v1525
      %v1550 = vpack.c.b16 %v1528, %v1526
      %v1551 = vpack.c.b16 %v1531, %v1529
      %v1552 = vpack.c.b16 %v1532, %v1530
      %v1553 = vpack.c.b16 %v1535, %v1533
      %v1554 = vpack.c.b16 %v1536, %v1534
      %v1555 = vpack.c.b16 %v1539, %v1537
      %v1556 = vpack.c.b16 %v1540, %v1538
      %1573 = vmatprep.subr.bf16.mxu0 %v1542
      %1574 = vmatpush1.bf16.msra.mxu0 %v1541
      %1575 = vmatprep.subr.bf16.mxu0 %v1544
      %1576 = vmatpush1.bf16.msra.mxu0 %v1543
      %1577 = vmatprep.subr.bf16.mxu0 %v1546
      %1578 = vmatpush1.bf16.msra.mxu0 %v1545
      %1579 = vmatprep.subr.bf16.mxu0 %v1548
      %1580 = vmatpush1.bf16.msra.mxu0 %v1547
      %1581 = vmatprep.subr.bf16.mxu0 %v1550
      %1582 = vmatpush1.bf16.msra.mxu0 %v1549
      %1583 = vmatprep.subr.bf16.mxu0 %v1552
      %1584 = vmatpush1.bf16.msra.mxu0 %v1551
      %1585 = vmatprep.subr.bf16.mxu0 %v1554
      %1586 = vmatpush1.bf16.msra.mxu0 %v1553
      %1587 = vmatprep.subr.bf16.mxu0 %v1556
      %1588 = vmatpush1.bf16.msra.mxu0 %v1555
      %1589 = vmatprep.subr.bf16.mxu0 0
      %1590 = vmatpush1.bf16.msra.mxu0 0
      %1591 = vmatprep.subr.bf16.mxu0 0
      %1592 = vmatpush1.bf16.msra.mxu0 0
      %1593 = vmatprep.subr.bf16.mxu0 0
      %1594 = vmatpush1.bf16.msra.mxu0 0
      %1595 = vmatprep.subr.bf16.mxu0 0
      %1596 = vmatpush1.bf16.msra.mxu0 0
      %1597 = vmatprep.subr.bf16.mxu0 0
      %1598 = vmatpush1.bf16.msra.mxu0 0
      %1599 = vmatprep.subr.bf16.mxu0 0
      %1600 = vmatpush1.bf16.msra.mxu0 0
      %1601 = vmatprep.subr.bf16.mxu0 0
      %1602 = vmatpush1.bf16.msra.mxu0 0
      %1603 = vmatprep.subr.bf16.mxu0 0
      %1604 = vmatpush1.bf16.msra.mxu0 0
      %1605 = vmatprep.mubr.bf16.mxu0 0
      %1606 = vmatmul.mubr.bf16.gmra.mrb[0].mxu0 %v1450
      %v1607 = vpop.f32.mrb[0].mxu0
      %v1608 = vadd.f32 %v1486, %v1607
      %v1609 = vpop.f32.mrb[0].mxu0
      %v1610 = vadd.f32 %v1490, %v1609
      %v1611 = vpop.f32.mrb[0].mxu0
      %v1612 = vadd.f32 %v1486, %v1611
      %v1613 = vpop.f32.mrb[0].mxu0
      %v1614 = vadd.f32 %v1490, %v1613
      %1615 = vmatprep.mubr.bf16.mxu0 0
      %1616 = vmatmul.mubr.bf16.gmra.mrb[0].mxu0 %v1451
      %v1617 = vpop.f32.mrb[0].mxu0
      %v1618 = vadd.f32 %v1486, %v1617
      %v1619 = vpop.f32.mrb[0].mxu0
      %v1620 = vadd.f32 %v1490, %v1619
      %v1621 = vpop.f32.mrb[0].mxu0
      %v1622 = vadd.f32 %v1486, %v1621
      %v1623 = vpop.f32.mrb[0].mxu0
      %v1624 = vadd.f32 %v1490, %v1623
      %1625 = vmatprep.mubr.bf16.mxu0 0
      %1626 = vmatmul.mubr.bf16.gmra.mrb[0].mxu0 %v1452
      %v1627 = vpop.f32.mrb[0].mxu0
      %v1628 = vadd.f32 %v1486, %v1627
      %v1629 = vpop.f32.mrb[0].mxu0
      %v1630 = vadd.f32 %v1490, %v1629
      %v1631 = vpop.f32.mrb[0].mxu0
      %v1632 = vadd.f32 %v1486, %v1631
      %v1633 = vpop.f32.mrb[0].mxu0
      %v1634 = vadd.f32 %v1490, %v1633
      %1635 = vmatprep.mubr.bf16.mxu0 0
      %1636 = vmatmul.mubr.bf16.gmra.mrb[0].mxu0 %v1453
      %v1637 = vpop.f32.mrb[0].mxu0
      %v1638 = vadd.f32 %v1486, %v1637
      %v1639 = vpop.f32.mrb[0].mxu0
      %v1640 = vadd.f32 %v1490, %v1639
      %v1641 = vpop.f32.mrb[0].mxu0
      %v1642 = vadd.f32 %v1486, %v1641
      %v1643 = vpop.f32.mrb[0].mxu0
      %v1644 = vadd.f32 %v1490, %v1643
      %1645 = vmatprep.mubr.bf16.mxu0 0
      %1646 = vmatmul.mubr.bf16.gmra.mrb[0].mxu0 %v1454
      %v1647 = vpop.f32.mrb[0].mxu0
      %v1648 = vadd.f32 %v1486, %v1647
      %v1649 = vpop.f32.mrb[0].mxu0
      %v1650 = vadd.f32 %v1490, %v1649
      %v1651 = vpop.f32.mrb[0].mxu0
      %v1652 = vadd.f32 %v1486, %v1651
      %v1653 = vpop.f32.mrb[0].mxu0
      %v1654 = vadd.f32 %v1490, %v1653
      %1655 = vmatprep.mubr.bf16.mxu0 0
      %1656 = vmatmul.mubr.bf16.gmra.mrb[0].mxu0 %v1455
      %v1657 = vpop.f32.mrb[0].mxu0
      %v1658 = vadd.f32 %v1486, %v1657
      %v1659 = vpop.f32.mrb[0].mxu0
      %v1660 = vadd.f32 %v1490, %v1659
      %v1661 = vpop.f32.mrb[0].mxu0
      %v1662 = vadd.f32 %v1486, %v1661
      %v1663 = vpop.f32.mrb[0].mxu0
      %v1664 = vadd.f32 %v1490, %v1663
      %1665 = vmatprep.mubr.bf16.mxu0 0
      %1666 = vmatmul.mubr.bf16.gmra.mrb[0].mxu0 %v1456
      %v1667 = vpop.f32.mrb[0].mxu0
      %v1668 = vadd.f32 %v1486, %v1667
      %v1669 = vpop.f32.mrb[0].mxu0
      %v1670 = vadd.f32 %v1490, %v1669
      %v1671 = vpop.f32.mrb[0].mxu0
      %v1672 = vadd.f32 %v1486, %v1671
      %v1673 = vpop.f32.mrb[0].mxu0
      %v1674 = vadd.f32 %v1490, %v1673
      %1675 = vmatprep.mubr.bf16.mxu0 0
      %1676 = vmatmul.mubr.bf16.gmra.mrb[0].mxu0 %v1457
      %v1677 = vpop.f32.mrb[0].mxu0
      %v1678 = vadd.f32 %v1486, %v1677
      %v1679 = vpop.f32.mrb[0].mxu0
      %v1680 = vadd.f32 %v1490, %v1679
      %v1681 = vpop.f32.mrb[0].mxu0
      %v1682 = vadd.f32 %v1486, %v1681
      %v1683 = vpop.f32.mrb[0].mxu0
      %v1684 = vadd.f32 %v1490, %v1683
      %1685 = vmatprep.mubr.bf16.mxu0 0
      %1686 = vmatmul.mubr.bf16.gmra.mrb[0].mxu0 %v1458
      %v1687 = vpop.f32.mrb[0].mxu0
      %v1688 = vadd.f32 %v1486, %v1687
      %v1689 = vpop.f32.mrb[0].mxu0
      %v1690 = vadd.f32 %v1490, %v1689
      %v1691 = vpop.f32.mrb[0].mxu0
      %v1692 = vadd.f32 %v1486, %v1691
      %v1693 = vpop.f32.mrb[0].mxu0
      %v1694 = vadd.f32 %v1490, %v1693
      %1695 = vmatprep.mubr.bf16.mxu0 0
      %1696 = vmatmul.mubr.bf16.gmra.mrb[0].mxu0 %v1459
      %v1697 = vpop.f32.mrb[0].mxu0
      %v1698 = vadd.f32 %v1486, %v1697
      %v1699 = vpop.f32.mrb[0].mxu0
      %v1700 = vadd.f32 %v1490, %v1699
      %v1701 = vpop.f32.mrb[0].mxu0
      %v1702 = vadd.f32 %v1486, %v1701
      %v1703 = vpop.f32.mrb[0].mxu0
      %v1704 = vadd.f32 %v1490, %v1703
      %1705 = vmatprep.mubr.bf16.mxu0 0
      %1706 = vmatmul.mubr.bf16.gmra.mrb[0].mxu0 %v1460
      %v1707 = vpop.f32.mrb[0].mxu0
      %v1708 = vadd.f32 %v1486, %v1707
      %v1709 = vpop.f32.mrb[0].mxu0
      %v1710 = vadd.f32 %v1490, %v1709
      %v1711 = vpop.f32.mrb[0].mxu0
      %v1712 = vadd.f32 %v1486, %v1711
      %v1713 = vpop.f32.mrb[0].mxu0
      %v1714 = vadd.f32 %v1490, %v1713
      %1715 = vmatprep.mubr.bf16.mxu0 0
      %1716 = vmatmul.mubr.bf16.gmra.mrb[0].mxu0 %v1461
      %v1717 = vpop.f32.mrb[0].mxu0
      %v1718 = vadd.f32 %v1486, %v1717
      %v1719 = vpop.f32.mrb[0].mxu0
      %v1720 = vadd.f32 %v1490, %v1719
      %v1721 = vpop.f32.mrb[0].mxu0
      %v1722 = vadd.f32 %v1486, %v1721
      %v1723 = vpop.f32.mrb[0].mxu0
      %v1724 = vadd.f32 %v1490, %v1723
      %1725 = vmatprep.mubr.bf16.mxu0 0
      %1726 = vmatmul.mubr.bf16.gmra.mrb[0].mxu0 %v1462
      %v1727 = vpop.f32.mrb[0].mxu0
      %v1728 = vadd.f32 %v1486, %v1727
      %v1729 = vpop.f32.mrb[0].mxu0
      %v1730 = vadd.f32 %v1490, %v1729
      %v1731 = vpop.f32.mrb[0].mxu0
      %v1732 = vadd.f32 %v1486, %v1731
      %v1733 = vpop.f32.mrb[0].mxu0
      %v1734 = vadd.f32 %v1490, %v1733
      %1735 = vmatprep.mubr.bf16.mxu0 0
      %1736 = vmatmul.mubr.bf16.gmra.mrb[0].mxu0 %v1463
      %v1737 = vpop.f32.mrb[0].mxu0
      %v1738 = vadd.f32 %v1486, %v1737
      %v1739 = vpop.f32.mrb[0].mxu0
      %v1740 = vadd.f32 %v1490, %v1739
      %v1741 = vpop.f32.mrb[0].mxu0
      %v1742 = vadd.f32 %v1486, %v1741
      %v1743 = vpop.f32.mrb[0].mxu0
      %v1744 = vadd.f32 %v1490, %v1743
      %1745 = vmatprep.mubr.bf16.mxu0 0
      %1746 = vmatmul.mubr.bf16.gmra.mrb[0].mxu0 %v1464
      %v1747 = vpop.f32.mrb[0].mxu0
      %v1748 = vadd.f32 %v1486, %v1747
      %v1749 = vpop.f32.mrb[0].mxu0
      %v1750 = vadd.f32 %v1490, %v1749
      %v1751 = vpop.f32.mrb[0].mxu0
      %v1752 = vadd.f32 %v1486, %v1751
      %v1753 = vpop.f32.mrb[0].mxu0
      %v1754 = vadd.f32 %v1490, %v1753
      %1755 = vmatprep.mubr.bf16.mxu0 0
      %1756 = vmatmul.mubr.bf16.gmra.mrb[0].mxu0 %v1465
      %v1757 = vpop.f32.mrb[0].mxu0
      %v1758 = vadd.f32 %v1486, %v1757
      %v1759 = vpop.f32.mrb[0].mxu0
      %v1760 = vadd.f32 %v1490, %v1759
      %v1761 = vpop.f32.mrb[0].mxu0
      %v1762 = vadd.f32 %v1486, %v1761
      %v1763 = vpop.f32.mrb[0].mxu0
      %v1764 = vadd.f32 %v1490, %v1763
      %1765 = vdwg.mxu0
      %vm1766 = vcmp.gt.f32.partialorder %v1608, 0.0
      %vm1767 = vcmp.gt.f32.partialorder %v1610, 0.0
      %vm1768 = vcmp.gt.f32.partialorder %v1612, 0.0
      %vm1769 = vcmp.gt.f32.partialorder %v1614, 0.0
      %vm1770 = vcmp.gt.f32.partialorder %v1618, 0.0
      %vm1771 = vcmp.gt.f32.partialorder %v1620, 0.0
      %vm1772 = vcmp.gt.f32.partialorder %v1622, 0.0
      %vm1773 = vcmp.gt.f32.partialorder %v1624, 0.0
      %vm1774 = vcmp.gt.f32.partialorder %v1628, 0.0
      %vm1775 = vcmp.gt.f32.partialorder %v1630, 0.0
      %vm1776 = vcmp.gt.f32.partialorder %v1632, 0.0
      %vm1777 = vcmp.gt.f32.partialorder %v1634, 0.0
      %vm1778 = vcmp.gt.f32.partialorder %v1638, 0.0
      %vm1779 = vcmp.gt.f32.partialorder %v1640, 0.0
      %vm1780 = vcmp.gt.f32.partialorder %v1642, 0.0
      %vm1781 = vcmp.gt.f32.partialorder %v1644, 0.0
      %vm1782 = vcmp.gt.f32.partialorder %v1648, 0.0
      %vm1783 = vcmp.gt.f32.partialorder %v1650, 0.0
      %vm1784 = vcmp.gt.f32.partialorder %v1652, 0.0
      %vm1785 = vcmp.gt.f32.partialorder %v1654, 0.0
      %vm1786 = vcmp.gt.f32.partialorder %v1658, 0.0
      %vm1787 = vcmp.gt.f32.partialorder %v1660, 0.0
      %vm1788 = vcmp.gt.f32.partialorder %v1662, 0.0
      %vm1789 = vcmp.gt.f32.partialorder %v1664, 0.0
      %vm1790 = vcmp.gt.f32.partialorder %v1668, 0.0
      %vm1791 = vcmp.gt.f32.partialorder %v1670, 0.0
      %vm1792 = vcmp.gt.f32.partialorder %v1672, 0.0
      %vm1793 = vcmp.gt.f32.partialorder %v1674, 0.0
      %vm1794 = vcmp.gt.f32.partialorder %v1678, 0.0
      %vm1795 = vcmp.gt.f32.partialorder %v1680, 0.0
      %vm1796 = vcmp.gt.f32.partialorder %v1682, 0.0
      %vm1797 = vcmp.gt.f32.partialorder %v1684, 0.0
      %vm1798 = vcmp.gt.f32.partialorder %v1688, 0.0
      %vm1799 = vcmp.gt.f32.partialorder %v1690, 0.0
      %vm1800 = vcmp.gt.f32.partialorder %v1692, 0.0
      %vm1801 = vcmp.gt.f32.partialorder %v1694, 0.0
      %vm1802 = vcmp.gt.f32.partialorder %v1698, 0.0
      %vm1803 = vcmp.gt.f32.partialorder %v1700, 0.0
      %vm1804 = vcmp.gt.f32.partialorder %v1702, 0.0
      %vm1805 = vcmp.gt.f32.partialorder %v1704, 0.0
      %vm1806 = vcmp.gt.f32.partialorder %v1708, 0.0
      %vm1807 = vcmp.gt.f32.partialorder %v1710, 0.0
      %vm1808 = vcmp.gt.f32.partialorder %v1712, 0.0
      %vm1809 = vcmp.gt.f32.partialorder %v1714, 0.0
      %vm1810 = vcmp.gt.f32.partialorder %v1718, 0.0
      %vm1811 = vcmp.gt.f32.partialorder %v1720, 0.0
      %vm1812 = vcmp.gt.f32.partialorder %v1722, 0.0
      %vm1813 = vcmp.gt.f32.partialorder %v1724, 0.0
      %vm1814 = vcmp.gt.f32.partialorder %v1728, 0.0
      %vm1815 = vcmp.gt.f32.partialorder %v1730, 0.0
      %vm1816 = vcmp.gt.f32.partialorder %v1732, 0.0
      %vm1817 = vcmp.gt.f32.partialorder %v1734, 0.0
      %vm1818 = vcmp.gt.f32.partialorder %v1738, 0.0
      %vm1819 = vcmp.gt.f32.partialorder %v1740, 0.0
      %vm1820 = vcmp.gt.f32.partialorder %v1742, 0.0
      %vm1821 = vcmp.gt.f32.partialorder %v1744, 0.0
      %vm1822 = vcmp.gt.f32.partialorder %v1748, 0.0
      %vm1823 = vcmp.gt.f32.partialorder %v1750, 0.0
      %vm1824 = vcmp.gt.f32.partialorder %v1752, 0.0
      %vm1825 = vcmp.gt.f32.partialorder %v1754, 0.0
      %vm1826 = vcmp.gt.f32.partialorder %v1758, 0.0
      %vm1827 = vcmp.gt.f32.partialorder %v1760, 0.0
      %vm1828 = vcmp.gt.f32.partialorder %v1762, 0.0
      %vm1829 = vcmp.gt.f32.partialorder %v1764, 0.0
      %v1830 = vmul.f32 %v1608, 0.2
      %v1831 = vmul.f32 %v1610, 0.2
      %v1832 = vmul.f32 %v1612, 0.2
      %v1833 = vmul.f32 %v1614, 0.2
      %v1834 = vmul.f32 %v1618, 0.2
      %v1835 = vmul.f32 %v1620, 0.2
      %v1836 = vmul.f32 %v1622, 0.2
      %v1837 = vmul.f32 %v1624, 0.2
      %v1838 = vmul.f32 %v1628, 0.2
      %v1839 = vmul.f32 %v1630, 0.2
      %v1840 = vmul.f32 %v1632, 0.2
      %v1841 = vmul.f32 %v1634, 0.2
      %v1842 = vmul.f32 %v1638, 0.2
      %v1843 = vmul.f32 %v1640, 0.2
      %v1844 = vmul.f32 %v1642, 0.2
      %v1845 = vmul.f32 %v1644, 0.2
      %v1846 = vmul.f32 %v1648, 0.2
      %v1847 = vmul.f32 %v1650, 0.2
      %v1848 = vmul.f32 %v1652, 0.2
      %v1849 = vmul.f32 %v1654, 0.2
      %v1850 = vmul.f32 %v1658, 0.2
      %v1851 = vmul.f32 %v1660, 0.2
      %v1852 = vmul.f32 %v1662, 0.2
      %v1853 = vmul.f32 %v1664, 0.2
      %v1854 = vmul.f32 %v1668, 0.2
      %v1855 = vmul.f32 %v1670, 0.2
      %v1856 = vmul.f32 %v1672, 0.2
      %v1857 = vmul.f32 %v1674, 0.2
      %v1858 = vmul.f32 %v1678, 0.2
      %v1859 = vmul.f32 %v1680, 0.2
      %v1860 = vmul.f32 %v1682, 0.2
      %v1861 = vmul.f32 %v1684, 0.2
      %v1862 = vmul.f32 %v1688, 0.2
      %v1863 = vmul.f32 %v1690, 0.2
      %v1864 = vmul.f32 %v1692, 0.2
      %v1865 = vmul.f32 %v1694, 0.2
      %v1866 = vmul.f32 %v1698, 0.2
      %v1867 = vmul.f32 %v1700, 0.2
      %v1868 = vmul.f32 %v1702, 0.2
      %v1869 = vmul.f32 %v1704, 0.2
      %v1870 = vmul.f32 %v1708, 0.2
      %v1871 = vmul.f32 %v1710, 0.2
      %v1872 = vmul.f32 %v1712, 0.2
      %v1873 = vmul.f32 %v1714, 0.2
      %v1874 = vmul.f32 %v1718, 0.2
      %v1875 = vmul.f32 %v1720, 0.2
      %v1876 = vmul.f32 %v1722, 0.2
      %v1877 = vmul.f32 %v1724, 0.2
      %v1878 = vmul.f32 %v1728, 0.2
      %v1879 = vmul.f32 %v1730, 0.2
      %v1880 = vmul.f32 %v1732, 0.2
      %v1881 = vmul.f32 %v1734, 0.2
      %v1882 = vmul.f32 %v1738, 0.2
      %v1883 = vmul.f32 %v1740, 0.2
      %v1884 = vmul.f32 %v1742, 0.2
      %v1885 = vmul.f32 %v1744, 0.2
      %v1886 = vmul.f32 %v1748, 0.2
      %v1887 = vmul.f32 %v1750, 0.2
      %v1888 = vmul.f32 %v1752, 0.2
      %v1889 = vmul.f32 %v1754, 0.2
      %v1890 = vmul.f32 %v1758, 0.2
      %v1891 = vmul.f32 %v1760, 0.2
      %v1892 = vmul.f32 %v1762, 0.2
      %v1893 = vmul.f32 %v1764, 0.2
      %v1894 = vsel %vm1766, %v1608, %v1830
      %v1895 = vsel %vm1767, %v1610, %v1831
      %v1896 = vsel %vm1768, %v1612, %v1832
      %v1897 = vsel %vm1769, %v1614, %v1833
      %v1898 = vsel %vm1770, %v1618, %v1834
      %v1899 = vsel %vm1771, %v1620, %v1835
      %v1900 = vsel %vm1772, %v1622, %v1836
      %v1901 = vsel %vm1773, %v1624, %v1837
      %v1902 = vsel %vm1774, %v1628, %v1838
      %v1903 = vsel %vm1775, %v1630, %v1839
      %v1904 = vsel %vm1776, %v1632, %v1840
      %v1905 = vsel %vm1777, %v1634, %v1841
      %v1906 = vsel %vm1778, %v1638, %v1842
      %v1907 = vsel %vm1779, %v1640, %v1843
      %v1908 = vsel %vm1780, %v1642, %v1844
      %v1909 = vsel %vm1781, %v1644, %v1845
      %v1910 = vsel %vm1782, %v1648, %v1846
      %v1911 = vsel %vm1783, %v1650, %v1847
      %v1912 = vsel %vm1784, %v1652, %v1848
      %v1913 = vsel %vm1785, %v1654, %v1849
      %v1914 = vsel %vm1786, %v1658, %v1850
      %v1915 = vsel %vm1787, %v1660, %v1851
      %v1916 = vsel %vm1788, %v1662, %v1852
      %v1917 = vsel %vm1789, %v1664, %v1853
      %v1918 = vsel %vm1790, %v1668, %v1854
      %v1919 = vsel %vm1791, %v1670, %v1855
      %v1920 = vsel %vm1792, %v1672, %v1856
      %v1921 = vsel %vm1793, %v1674, %v1857
      %v1922 = vsel %vm1794, %v1678, %v1858
      %v1923 = vsel %vm1795, %v1680, %v1859
      %v1924 = vsel %vm1796, %v1682, %v1860
      %v1925 = vsel %vm1797, %v1684, %v1861
      %v1926 = vsel %vm1798, %v1688, %v1862
      %v1927 = vsel %vm1799, %v1690, %v1863
      %v1928 = vsel %vm1800, %v1692, %v1864
      %v1929 = vsel %vm1801, %v1694, %v1865
      %v1930 = vsel %vm1802, %v1698, %v1866
      %v1931 = vsel %vm1803, %v1700, %v1867
      %v1932 = vsel %vm1804, %v1702, %v1868
      %v1933 = vsel %vm1805, %v1704, %v1869
      %v1934 = vsel %vm1806, %v1708, %v1870
      %v1935 = vsel %vm1807, %v1710, %v1871
      %v1936 = vsel %vm1808, %v1712, %v1872
      %v1937 = vsel %vm1809, %v1714, %v1873
      %v1938 = vsel %vm1810, %v1718, %v1874
      %v1939 = vsel %vm1811, %v1720, %v1875
      %v1940 = vsel %vm1812, %v1722, %v1876
      %v1941 = vsel %vm1813, %v1724, %v1877
      %v1942 = vsel %vm1814, %v1728, %v1878
      %v1943 = vsel %vm1815, %v1730, %v1879
      %v1944 = vsel %vm1816, %v1732, %v1880
      %v1945 = vsel %vm1817, %v1734, %v1881
      %v1946 = vsel %vm1818, %v1738, %v1882
      %v1947 = vsel %vm1819, %v1740, %v1883
      %v1948 = vsel %vm1820, %v1742, %v1884
      %v1949 = vsel %vm1821, %v1744, %v1885
      %v1950 = vsel %vm1822, %v1748, %v1886
      %v1951 = vsel %vm1823, %v1750, %v1887
      %v1952 = vsel %vm1824, %v1752, %v1888
      %v1953 = vsel %vm1825, %v1754, %v1889
      %v1954 = vsel %vm1826, %v1758, %v1890
      %v1955 = vsel %vm1827, %v1760, %v1891
      %v1956 = vsel %vm1828, %v1762, %v1892
      %v1957 = vsel %vm1829, %v1764, %v1893
      %v1958 = vpack.c.bf16 %v1896, %v1894
      %v1959 = vpack.c.bf16 %v1897, %v1895
      %v1960 = vpack.c.bf16 %v1900, %v1898
      %v1961 = vpack.c.bf16 %v1901, %v1899
      %v1962 = vpack.c.bf16 %v1904, %v1902
      %v1963 = vpack.c.bf16 %v1905, %v1903
      %v1964 = vpack.c.bf16 %v1908, %v1906
      %v1965 = vpack.c.bf16 %v1909, %v1907
      %v1966 = vpack.c.bf16 %v1912, %v1910
      %v1967 = vpack.c.bf16 %v1913, %v1911
      %v1968 = vpack.c.bf16 %v1916, %v1914
      %v1969 = vpack.c.bf16 %v1917, %v1915
      %v1970 = vpack.c.bf16 %v1920, %v1918
      %v1971 = vpack.c.bf16 %v1921, %v1919
      %v1972 = vpack.c.bf16 %v1924, %v1922
      %v1973 = vpack.c.bf16 %v1925, %v1923
      %v1974 = vpack.c.bf16 %v1928, %v1926
      %v1975 = vpack.c.bf16 %v1929, %v1927
      %v1976 = vpack.c.bf16 %v1932, %v1930
      %v1977 = vpack.c.bf16 %v1933, %v1931
      %v1978 = vpack.c.bf16 %v1936, %v1934
      %v1979 = vpack.c.bf16 %v1937, %v1935
      %v1980 = vpack.c.bf16 %v1940, %v1938
      %v1981 = vpack.c.bf16 %v1941, %v1939
      %v1982 = vpack.c.bf16 %v1944, %v1942
      %v1983 = vpack.c.bf16 %v1945, %v1943
      %v1984 = vpack.c.bf16 %v1948, %v1946
      %v1985 = vpack.c.bf16 %v1949, %v1947
      %v1986 = vpack.c.bf16 %v1952, %v1950
      %v1987 = vpack.c.bf16 %v1953, %v1951
      %v1988 = vpack.c.bf16 %v1956, %v1954
      %v1989 = vpack.c.bf16 %v1957, %v1955
      %v1990 = vld [vmem:[%s4] sm:$0xff]
      %v1991 = vld [vmem:[%s4 + $0x8] sm:$0xff]
      %v1992 = vld [vmem:[%s4 + $0x10] sm:$0xff]
      %v1993 = vld [vmem:[%s4 + $0x18] sm:$0xff]
      %v1994 = vld [vmem:[%s4 + $0x20] sm:$0xff]
      %v1995 = vld [vmem:[%s4 + $0x28] sm:$0xff]
      %v1996 = vld [vmem:[%s4 + $0x30] sm:$0xff]
      %v1997 = vld [vmem:[%s4 + $0x38] sm:$0xff]
      %v1998 = vld [vmem:[%s4 + $0x40] sm:$0xff]
      %v1999 = vld [vmem:[%s4 + $0x48] sm:$0xff]
      %v2000 = vld [vmem:[%s4 + $0x50] sm:$0xff]
      %v2001 = vld [vmem:[%s4 + $0x58] sm:$0xff]
      %v2002 = vld [vmem:[%s4 + $0x60] sm:$0xff]
      %v2003 = vld [vmem:[%s4 + $0x68] sm:$0xff]
      %v2004 = vld [vmem:[%s4 + $0x70] sm:$0xff]
      %v2005 = vld [vmem:[%s4 + $0x78] sm:$0xff]
      %v2006 = vld [vmem:[%s4 + $0x80] sm:$0xff]
      %v2007 = vld [vmem:[%s4 + $0x88] sm:$0xff]
      %v2008 = vld [vmem:[%s4 + $0x90] sm:$0xff]
      %v2009 = vld [vmem:[%s4 + $0x98] sm:$0xff]
      %v2010 = vld [vmem:[%s4 + $0xa0] sm:$0xff]
      %v2011 = vld [vmem:[%s4 + $0xa8] sm:$0xff]
      %v2012 = vld [vmem:[%s4 + $0xb0] sm:$0xff]
      %v2013 = vld [vmem:[%s4 + $0xb8] sm:$0xff]
      %v2014 = vld [vmem:[%s4 + $0xc0] sm:$0xff]
      %v2015 = vld [vmem:[%s4 + $0xc8] sm:$0xff]
      %v2016 = vld [vmem:[%s4 + $0xd0] sm:$0xff]
      %v2017 = vld [vmem:[%s4 + $0xd8] sm:$0xff]
      %v2018 = vld [vmem:[%s4 + $0xe0] sm:$0xff]
      %v2019 = vld [vmem:[%s4 + $0xe8] sm:$0xff]
      %v2020 = vld [vmem:[%s4 + $0xf0] sm:$0xff]
      %v2021 = vld [vmem:[%s4 + $0xf8] sm:$0xff]
      %v2023 = vlaneseq
      %v2024 = vshrl.u32 %v2023, 7
      %v2025 = vsub.s32 0, %v2024
      %v2026 = vrot.slane %v507, %v2025
      %v2027 = vlaneseq
      %v2028 = vshrl.u32 %v2027, 7
      %v2029 = vsub.s32 1, %v2028
      %v2030 = vrot.slane %v507, %v2029
      %v2065 = vunpack.c.l.b16 %v1990
      %v2066 = vunpack.c.h.b16 %v1990
      %v2067 = vunpack.c.l.b16 %v1991
      %v2068 = vunpack.c.h.b16 %v1991
      %v2069 = vunpack.c.l.b16 %v1992
      %v2070 = vunpack.c.h.b16 %v1992
      %v2071 = vunpack.c.l.b16 %v1993
      %v2072 = vunpack.c.h.b16 %v1993
      %v2073 = vunpack.c.l.b16 %v1994
      %v2074 = vunpack.c.h.b16 %v1994
      %v2075 = vunpack.c.l.b16 %v1995
      %v2076 = vunpack.c.h.b16 %v1995
      %v2077 = vunpack.c.l.b16 %v1996
      %v2078 = vunpack.c.h.b16 %v1996
      %v2079 = vunpack.c.l.b16 %v1997
      %v2080 = vunpack.c.h.b16 %v1997
      %v2081 = vunpack.c.l.b16 %v1998
      %v2082 = vunpack.c.h.b16 %v1998
      %v2083 = vunpack.c.l.b16 %v1999
      %v2084 = vunpack.c.h.b16 %v1999
      %v2085 = vunpack.c.l.b16 %v2000
      %v2086 = vunpack.c.h.b16 %v2000
      %v2087 = vunpack.c.l.b16 %v2001
      %v2088 = vunpack.c.h.b16 %v2001
      %v2089 = vunpack.c.l.b16 %v2002
      %v2090 = vunpack.c.h.b16 %v2002
      %v2091 = vunpack.c.l.b16 %v2003
      %v2092 = vunpack.c.h.b16 %v2003
      %v2093 = vunpack.c.l.b16 %v2004
      %v2094 = vunpack.c.h.b16 %v2004
      %v2095 = vunpack.c.l.b16 %v2005
      %v2096 = vunpack.c.h.b16 %v2005
      %v2097 = vunpack.c.l.b16 %v2006
      %v2098 = vunpack.c.h.b16 %v2006
      %v2099 = vunpack.c.l.b16 %v2007
      %v2100 = vunpack.c.h.b16 %v2007
      %v2101 = vunpack.c.l.b16 %v2008
      %v2102 = vunpack.c.h.b16 %v2008
      %v2103 = vunpack.c.l.b16 %v2009
      %v2104 = vunpack.c.h.b16 %v2009
      %v2105 = vunpack.c.l.b16 %v2010
      %v2106 = vunpack.c.h.b16 %v2010
      %v2107 = vunpack.c.l.b16 %v2011
      %v2108 = vunpack.c.h.b16 %v2011
      %v2109 = vunpack.c.l.b16 %v2012
      %v2110 = vunpack.c.h.b16 %v2012
      %v2111 = vunpack.c.l.b16 %v2013
      %v2112 = vunpack.c.h.b16 %v2013
      %v2113 = vunpack.c.l.b16 %v2014
      %v2114 = vunpack.c.h.b16 %v2014
      %v2115 = vunpack.c.l.b16 %v2015
      %v2116 = vunpack.c.h.b16 %v2015
      %v2117 = vunpack.c.l.b16 %v2016
      %v2118 = vunpack.c.h.b16 %v2016
      %v2119 = vunpack.c.l.b16 %v2017
      %v2120 = vunpack.c.h.b16 %v2017
      %v2121 = vunpack.c.l.b16 %v2018
      %v2122 = vunpack.c.h.b16 %v2018
      %v2123 = vunpack.c.l.b16 %v2019
      %v2124 = vunpack.c.h.b16 %v2019
      %v2125 = vunpack.c.l.b16 %v2020
      %v2126 = vunpack.c.h.b16 %v2020
      %v2127 = vunpack.c.l.b16 %v2021
      %v2128 = vunpack.c.h.b16 %v2021
      %v2129 = vpack.c.b16 %v2067, %v2065
      %v2130 = vpack.c.b16 %v2068, %v2066
      %v2131 = vpack.c.b16 %v2071, %v2069
      %v2132 = vpack.c.b16 %v2072, %v2070
      %v2133 = vpack.c.b16 %v2075, %v2073
      %v2134 = vpack.c.b16 %v2076, %v2074
      %v2135 = vpack.c.b16 %v2079, %v2077
      %v2136 = vpack.c.b16 %v2080, %v2078
      %v2137 = vpack.c.b16 %v2083, %v2081
      %v2138 = vpack.c.b16 %v2084, %v2082
      %v2139 = vpack.c.b16 %v2087, %v2085
      %v2140 = vpack.c.b16 %v2088, %v2086
      %v2141 = vpack.c.b16 %v2091, %v2089
      %v2142 = vpack.c.b16 %v2092, %v2090
      %v2143 = vpack.c.b16 %v2095, %v2093
      %v2144 = vpack.c.b16 %v2096, %v2094
      %v2145 = vpack.c.b16 %v2099, %v2097
      %v2146 = vpack.c.b16 %v2100, %v2098
      %v2147 = vpack.c.b16 %v2103, %v2101
      %v2148 = vpack.c.b16 %v2104, %v2102
      %v2149 = vpack.c.b16 %v2107, %v2105
      %v2150 = vpack.c.b16 %v2108, %v2106
      %v2151 = vpack.c.b16 %v2111, %v2109
      %v2152 = vpack.c.b16 %v2112, %v2110
      %v2153 = vpack.c.b16 %v2115, %v2113
      %v2154 = vpack.c.b16 %v2116, %v2114
      %v2155 = vpack.c.b16 %v2119, %v2117
      %v2156 = vpack.c.b16 %v2120, %v2118
      %v2157 = vpack.c.b16 %v2123, %v2121
      %v2158 = vpack.c.b16 %v2124, %v2122
      %v2159 = vpack.c.b16 %v2127, %v2125
      %v2160 = vpack.c.b16 %v2128, %v2126
      %2193 = vmatprep.subr.bf16.mxu0 %v2130
      %2194 = vmatpush1.bf16.msra.mxu0 %v2129
      %2195 = vmatprep.subr.bf16.mxu0 %v2132
      %2196 = vmatpush1.bf16.msra.mxu0 %v2131
      %2197 = vmatprep.subr.bf16.mxu0 %v2134
      %2198 = vmatpush1.bf16.msra.mxu0 %v2133
      %2199 = vmatprep.subr.bf16.mxu0 %v2136
      %2200 = vmatpush1.bf16.msra.mxu0 %v2135
      %2201 = vmatprep.subr.bf16.mxu0 %v2138
      %2202 = vmatpush1.bf16.msra.mxu0 %v2137
      %2203 = vmatprep.subr.bf16.mxu0 %v2140
      %2204 = vmatpush1.bf16.msra.mxu0 %v2139
      %2205 = vmatprep.subr.bf16.mxu0 %v2142
      %2206 = vmatpush1.bf16.msra.mxu0 %v2141
      %2207 = vmatprep.subr.bf16.mxu0 %v2144
      %2208 = vmatpush1.bf16.msra.mxu0 %v2143
      %2209 = vmatprep.subr.bf16.mxu0 %v2146
      %2210 = vmatpush1.bf16.msra.mxu0 %v2145
      %2211 = vmatprep.subr.bf16.mxu0 %v2148
      %2212 = vmatpush1.bf16.msra.mxu0 %v2147
      %2213 = vmatprep.subr.bf16.mxu0 %v2150
      %2214 = vmatpush1.bf16.msra.mxu0 %v2149
      %2215 = vmatprep.subr.bf16.mxu0 %v2152
      %2216 = vmatpush1.bf16.msra.mxu0 %v2151
      %2217 = vmatprep.subr.bf16.mxu0 %v2154
      %2218 = vmatpush1.bf16.msra.mxu0 %v2153
      %2219 = vmatprep.subr.bf16.mxu0 %v2156
      %2220 = vmatpush1.bf16.msra.mxu0 %v2155
      %2221 = vmatprep.subr.bf16.mxu0 %v2158
      %2222 = vmatpush1.bf16.msra.mxu0 %v2157
      %2223 = vmatprep.subr.bf16.mxu0 %v2160
      %2224 = vmatpush1.bf16.msra.mxu0 %v2159
      %2225 = vmatprep.mubr.bf16.mxu0 %v1959
      %2226 = vmatmul.mubr.bf16.gmra.mrb[0].mxu0 %v1958
      %v2227 = vpop.f32.mrb[0].mxu0
      %v2228 = vadd.f32 %v2026, %v2227
      %v2229 = vpop.f32.mrb[0].mxu0
      %v2230 = vadd.f32 %v2030, %v2229
      %v2231 = vpop.f32.mrb[0].mxu0
      %v2232 = vadd.f32 %v2026, %v2231
      %v2233 = vpop.f32.mrb[0].mxu0
      %v2234 = vadd.f32 %v2030, %v2233
      %2235 = vmatprep.mubr.bf16.mxu0 %v1961
      %2236 = vmatmul.mubr.bf16.gmra.mrb[0].mxu0 %v1960
      %v2237 = vpop.f32.mrb[0].mxu0
      %v2238 = vadd.f32 %v2026, %v2237
      %v2239 = vpop.f32.mrb[0].mxu0
      %v2240 = vadd.f32 %v2030, %v2239
      %v2241 = vpop.f32.mrb[0].mxu0
      %v2242 = vadd.f32 %v2026, %v2241
      %v2243 = vpop.f32.mrb[0].mxu0
      %v2244 = vadd.f32 %v2030, %v2243
      %2245 = vmatprep.mubr.bf16.mxu0 %v1963
      %2246 = vmatmul.mubr.bf16.gmra.mrb[0].mxu0 %v1962
      %v2247 = vpop.f32.mrb[0].mxu0
      %v2248 = vadd.f32 %v2026, %v2247
      %v2249 = vpop.f32.mrb[0].mxu0
      %v2250 = vadd.f32 %v2030, %v2249
      %v2251 = vpop.f32.mrb[0].mxu0
      %v2252 = vadd.f32 %v2026, %v2251
      %v2253 = vpop.f32.mrb[0].mxu0
      %v2254 = vadd.f32 %v2030, %v2253
      %2255 = vmatprep.mubr.bf16.mxu0 %v1965
      %2256 = vmatmul.mubr.bf16.gmra.mrb[0].mxu0 %v1964
      %v2257 = vpop.f32.mrb[0].mxu0
      %v2258 = vadd.f32 %v2026, %v2257
      %v2259 = vpop.f32.mrb[0].mxu0
      %v2260 = vadd.f32 %v2030, %v2259
      %v2261 = vpop.f32.mrb[0].mxu0
      %v2262 = vadd.f32 %v2026, %v2261
      %v2263 = vpop.f32.mrb[0].mxu0
      %v2264 = vadd.f32 %v2030, %v2263
      %2265 = vmatprep.mubr.bf16.mxu0 %v1967
      %2266 = vmatmul.mubr.bf16.gmra.mrb[0].mxu0 %v1966
      %v2267 = vpop.f32.mrb[0].mxu0
      %v2268 = vadd.f32 %v2026, %v2267
      %v2269 = vpop.f32.mrb[0].mxu0
      %v2270 = vadd.f32 %v2030, %v2269
      %v2271 = vpop.f32.mrb[0].mxu0
      %v2272 = vadd.f32 %v2026, %v2271
      %v2273 = vpop.f32.mrb[0].mxu0
      %v2274 = vadd.f32 %v2030, %v2273
      %2275 = vmatprep.mubr.bf16.mxu0 %v1969
      %2276 = vmatmul.mubr.bf16.gmra.mrb[0].mxu0 %v1968
      %v2277 = vpop.f32.mrb[0].mxu0
      %v2278 = vadd.f32 %v2026, %v2277
      %v2279 = vpop.f32.mrb[0].mxu0
      %v2280 = vadd.f32 %v2030, %v2279
      %v2281 = vpop.f32.mrb[0].mxu0
      %v2282 = vadd.f32 %v2026, %v2281
      %v2283 = vpop.f32.mrb[0].mxu0
      %v2284 = vadd.f32 %v2030, %v2283
      %2285 = vmatprep.mubr.bf16.mxu0 %v1971
      %2286 = vmatmul.mubr.bf16.gmra.mrb[0].mxu0 %v1970
      %v2287 = vpop.f32.mrb[0].mxu0
      %v2288 = vadd.f32 %v2026, %v2287
      %v2289 = vpop.f32.mrb[0].mxu0
      %v2290 = vadd.f32 %v2030, %v2289
      %v2291 = vpop.f32.mrb[0].mxu0
      %v2292 = vadd.f32 %v2026, %v2291
      %v2293 = vpop.f32.mrb[0].mxu0
      %v2294 = vadd.f32 %v2030, %v2293
      %2295 = vmatprep.mubr.bf16.mxu0 %v1973
      %2296 = vmatmul.mubr.bf16.gmra.mrb[0].mxu0 %v1972
      %v2297 = vpop.f32.mrb[0].mxu0
      %v2298 = vadd.f32 %v2026, %v2297
      %v2299 = vpop.f32.mrb[0].mxu0
      %v2300 = vadd.f32 %v2030, %v2299
      %v2301 = vpop.f32.mrb[0].mxu0
      %v2302 = vadd.f32 %v2026, %v2301
      %v2303 = vpop.f32.mrb[0].mxu0
      %v2304 = vadd.f32 %v2030, %v2303
      %2305 = vmatprep.mubr.bf16.mxu0 %v1975
      %2306 = vmatmul.mubr.bf16.gmra.mrb[0].mxu0 %v1974
      %v2307 = vpop.f32.mrb[0].mxu0
      %v2308 = vadd.f32 %v2026, %v2307
      %v2309 = vpop.f32.mrb[0].mxu0
      %v2310 = vadd.f32 %v2030, %v2309
      %v2311 = vpop.f32.mrb[0].mxu0
      %v2312 = vadd.f32 %v2026, %v2311
      %v2313 = vpop.f32.mrb[0].mxu0
      %v2314 = vadd.f32 %v2030, %v2313
      %2315 = vmatprep.mubr.bf16.mxu0 %v1977
      %2316 = vmatmul.mubr.bf16.gmra.mrb[0].mxu0 %v1976
      %v2317 = vpop.f32.mrb[0].mxu0
      %v2318 = vadd.f32 %v2026, %v2317
      %v2319 = vpop.f32.mrb[0].mxu0
      %v2320 = vadd.f32 %v2030, %v2319
      %v2321 = vpop.f32.mrb[0].mxu0
      %v2322 = vadd.f32 %v2026, %v2321
      %v2323 = vpop.f32.mrb[0].mxu0
      %v2324 = vadd.f32 %v2030, %v2323
      %2325 = vmatprep.mubr.bf16.mxu0 %v1979
      %2326 = vmatmul.mubr.bf16.gmra.mrb[0].mxu0 %v1978
      %v2327 = vpop.f32.mrb[0].mxu0
      %v2328 = vadd.f32 %v2026, %v2327
      %v2329 = vpop.f32.mrb[0].mxu0
      %v2330 = vadd.f32 %v2030, %v2329
      %v2331 = vpop.f32.mrb[0].mxu0
      %v2332 = vadd.f32 %v2026, %v2331
      %v2333 = vpop.f32.mrb[0].mxu0
      %v2334 = vadd.f32 %v2030, %v2333
      %2335 = vmatprep.mubr.bf16.mxu0 %v1981
      %2336 = vmatmul.mubr.bf16.gmra.mrb[0].mxu0 %v1980
      %v2337 = vpop.f32.mrb[0].mxu0
      %v2338 = vadd.f32 %v2026, %v2337
      %v2339 = vpop.f32.mrb[0].mxu0
      %v2340 = vadd.f32 %v2030, %v2339
      %v2341 = vpop.f32.mrb[0].mxu0
      %v2342 = vadd.f32 %v2026, %v2341
      %v2343 = vpop.f32.mrb[0].mxu0
      %v2344 = vadd.f32 %v2030, %v2343
      %2345 = vmatprep.mubr.bf16.mxu0 %v1983
      %2346 = vmatmul.mubr.bf16.gmra.mrb[0].mxu0 %v1982
      %v2347 = vpop.f32.mrb[0].mxu0
      %v2348 = vadd.f32 %v2026, %v2347
      %v2349 = vpop.f32.mrb[0].mxu0
      %v2350 = vadd.f32 %v2030, %v2349
      %v2351 = vpop.f32.mrb[0].mxu0
      %v2352 = vadd.f32 %v2026, %v2351
      %v2353 = vpop.f32.mrb[0].mxu0
      %v2354 = vadd.f32 %v2030, %v2353
      %2355 = vmatprep.mubr.bf16.mxu0 %v1985
      %2356 = vmatmul.mubr.bf16.gmra.mrb[0].mxu0 %v1984
      %v2357 = vpop.f32.mrb[0].mxu0
      %v2358 = vadd.f32 %v2026, %v2357
      %v2359 = vpop.f32.mrb[0].mxu0
      %v2360 = vadd.f32 %v2030, %v2359
      %v2361 = vpop.f32.mrb[0].mxu0
      %v2362 = vadd.f32 %v2026, %v2361
      %v2363 = vpop.f32.mrb[0].mxu0
      %v2364 = vadd.f32 %v2030, %v2363
      %2365 = vmatprep.mubr.bf16.mxu0 %v1987
      %2366 = vmatmul.mubr.bf16.gmra.mrb[0].mxu0 %v1986
      %v2367 = vpop.f32.mrb[0].mxu0
      %v2368 = vadd.f32 %v2026, %v2367
      %v2369 = vpop.f32.mrb[0].mxu0
      %v2370 = vadd.f32 %v2030, %v2369
      %v2371 = vpop.f32.mrb[0].mxu0
      %v2372 = vadd.f32 %v2026, %v2371
      %v2373 = vpop.f32.mrb[0].mxu0
      %v2374 = vadd.f32 %v2030, %v2373
      %2375 = vmatprep.mubr.bf16.mxu0 %v1989
      %2376 = vmatmul.mubr.bf16.gmra.mrb[0].mxu0 %v1988
      %v2377 = vpop.f32.mrb[0].mxu0
      %v2378 = vadd.f32 %v2026, %v2377
      %v2379 = vpop.f32.mrb[0].mxu0
      %v2380 = vadd.f32 %v2030, %v2379
      %v2381 = vpop.f32.mrb[0].mxu0
      %v2382 = vadd.f32 %v2026, %v2381
      %v2383 = vpop.f32.mrb[0].mxu0
      %v2384 = vadd.f32 %v2030, %v2383
      %2385 = vdwg.mxu0
      %vm2386 = vcmp.gt.f32.partialorder %v2228, 0.0
      %vm2387 = vcmp.gt.f32.partialorder %v2230, 0.0
      %vm2388 = vcmp.gt.f32.partialorder %v2232, 0.0
      %vm2389 = vcmp.gt.f32.partialorder %v2234, 0.0
      %vm2390 = vcmp.gt.f32.partialorder %v2238, 0.0
      %vm2391 = vcmp.gt.f32.partialorder %v2240, 0.0
      %vm2392 = vcmp.gt.f32.partialorder %v2242, 0.0
      %vm2393 = vcmp.gt.f32.partialorder %v2244, 0.0
      %vm2394 = vcmp.gt.f32.partialorder %v2248, 0.0
      %vm2395 = vcmp.gt.f32.partialorder %v2250, 0.0
      %vm2396 = vcmp.gt.f32.partialorder %v2252, 0.0
      %vm2397 = vcmp.gt.f32.partialorder %v2254, 0.0
      %vm2398 = vcmp.gt.f32.partialorder %v2258, 0.0
      %vm2399 = vcmp.gt.f32.partialorder %v2260, 0.0
      %vm2400 = vcmp.gt.f32.partialorder %v2262, 0.0
      %vm2401 = vcmp.gt.f32.partialorder %v2264, 0.0
      %vm2402 = vcmp.gt.f32.partialorder %v2268, 0.0
      %vm2403 = vcmp.gt.f32.partialorder %v2270, 0.0
      %vm2404 = vcmp.gt.f32.partialorder %v2272, 0.0
      %vm2405 = vcmp.gt.f32.partialorder %v2274, 0.0
      %vm2406 = vcmp.gt.f32.partialorder %v2278, 0.0
      %vm2407 = vcmp.gt.f32.partialorder %v2280, 0.0
      %vm2408 = vcmp.gt.f32.partialorder %v2282, 0.0
      %vm2409 = vcmp.gt.f32.partialorder %v2284, 0.0
      %vm2410 = vcmp.gt.f32.partialorder %v2288, 0.0
      %vm2411 = vcmp.gt.f32.partialorder %v2290, 0.0
      %vm2412 = vcmp.gt.f32.partialorder %v2292, 0.0
      %vm2413 = vcmp.gt.f32.partialorder %v2294, 0.0
      %vm2414 = vcmp.gt.f32.partialorder %v2298, 0.0
      %vm2415 = vcmp.gt.f32.partialorder %v2300, 0.0
      %vm2416 = vcmp.gt.f32.partialorder %v2302, 0.0
      %vm2417 = vcmp.gt.f32.partialorder %v2304, 0.0
      %vm2418 = vcmp.gt.f32.partialorder %v2308, 0.0
      %vm2419 = vcmp.gt.f32.partialorder %v2310, 0.0
      %vm2420 = vcmp.gt.f32.partialorder %v2312, 0.0
      %vm2421 = vcmp.gt.f32.partialorder %v2314, 0.0
      %vm2422 = vcmp.gt.f32.partialorder %v2318, 0.0
      %vm2423 = vcmp.gt.f32.partialorder %v2320, 0.0
      %vm2424 = vcmp.gt.f32.partialorder %v2322, 0.0
      %vm2425 = vcmp.gt.f32.partialorder %v2324, 0.0
      %vm2426 = vcmp.gt.f32.partialorder %v2328, 0.0
      %vm2427 = vcmp.gt.f32.partialorder %v2330, 0.0
      %vm2428 = vcmp.gt.f32.partialorder %v2332, 0.0
      %vm2429 = vcmp.gt.f32.partialorder %v2334, 0.0
      %vm2430 = vcmp.gt.f32.partialorder %v2338, 0.0
      %vm2431 = vcmp.gt.f32.partialorder %v2340, 0.0
      %vm2432 = vcmp.gt.f32.partialorder %v2342, 0.0
      %vm2433 = vcmp.gt.f32.partialorder %v2344, 0.0
      %vm2434 = vcmp.gt.f32.partialorder %v2348, 0.0
      %vm2435 = vcmp.gt.f32.partialorder %v2350, 0.0
      %vm2436 = vcmp.gt.f32.partialorder %v2352, 0.0
      %vm2437 = vcmp.gt.f32.partialorder %v2354, 0.0
      %vm2438 = vcmp.gt.f32.partialorder %v2358, 0.0
      %vm2439 = vcmp.gt.f32.partialorder %v2360, 0.0
      %vm2440 = vcmp.gt.f32.partialorder %v2362, 0.0
      %vm2441 = vcmp.gt.f32.partialorder %v2364, 0.0
      %vm2442 = vcmp.gt.f32.partialorder %v2368, 0.0
      %vm2443 = vcmp.gt.f32.partialorder %v2370, 0.0
      %vm2444 = vcmp.gt.f32.partialorder %v2372, 0.0
      %vm2445 = vcmp.gt.f32.partialorder %v2374, 0.0
      %vm2446 = vcmp.gt.f32.partialorder %v2378, 0.0
      %vm2447 = vcmp.gt.f32.partialorder %v2380, 0.0
      %vm2448 = vcmp.gt.f32.partialorder %v2382, 0.0
      %vm2449 = vcmp.gt.f32.partialorder %v2384, 0.0
      %v2450 = vmul.f32 %v2228, 0.2
      %v2451 = vmul.f32 %v2230, 0.2
      %v2452 = vmul.f32 %v2232, 0.2
      %v2453 = vmul.f32 %v2234, 0.2
      %v2454 = vmul.f32 %v2238, 0.2
      %v2455 = vmul.f32 %v2240, 0.2
      %v2456 = vmul.f32 %v2242, 0.2
      %v2457 = vmul.f32 %v2244, 0.2
      %v2458 = vmul.f32 %v2248, 0.2
      %v2459 = vmul.f32 %v2250, 0.2
      %v2460 = vmul.f32 %v2252, 0.2
      %v2461 = vmul.f32 %v2254, 0.2
      %v2462 = vmul.f32 %v2258, 0.2
      %v2463 = vmul.f32 %v2260, 0.2
      %v2464 = vmul.f32 %v2262, 0.2
      %v2465 = vmul.f32 %v2264, 0.2
      %v2466 = vmul.f32 %v2268, 0.2
      %v2467 = vmul.f32 %v2270, 0.2
      %v2468 = vmul.f32 %v2272, 0.2
      %v2469 = vmul.f32 %v2274, 0.2
      %v2470 = vmul.f32 %v2278, 0.2
      %v2471 = vmul.f32 %v2280, 0.2
      %v2472 = vmul.f32 %v2282, 0.2
      %v2473 = vmul.f32 %v2284, 0.2
      %v2474 = vmul.f32 %v2288, 0.2
      %v2475 = vmul.f32 %v2290, 0.2
      %v2476 = vmul.f32 %v2292, 0.2
      %v2477 = vmul.f32 %v2294, 0.2
      %v2478 = vmul.f32 %v2298, 0.2
      %v2479 = vmul.f32 %v2300, 0.2
      %v2480 = vmul.f32 %v2302, 0.2
      %v2481 = vmul.f32 %v2304, 0.2
      %v2482 = vmul.f32 %v2308, 0.2
      %v2483 = vmul.f32 %v2310, 0.2
      %v2484 = vmul.f32 %v2312, 0.2
      %v2485 = vmul.f32 %v2314, 0.2
      %v2486 = vmul.f32 %v2318, 0.2
      %v2487 = vmul.f32 %v2320, 0.2
      %v2488 = vmul.f32 %v2322, 0.2
      %v2489 = vmul.f32 %v2324, 0.2
      %v2490 = vmul.f32 %v2328, 0.2
      %v2491 = vmul.f32 %v2330, 0.2
      %v2492 = vmul.f32 %v2332, 0.2
      %v2493 = vmul.f32 %v2334, 0.2
      %v2494 = vmul.f32 %v2338, 0.2
      %v2495 = vmul.f32 %v2340, 0.2
      %v2496 = vmul.f32 %v2342, 0.2
      %v2497 = vmul.f32 %v2344, 0.2
      %v2498 = vmul.f32 %v2348, 0.2
      %v2499 = vmul.f32 %v2350, 0.2
      %v2500 = vmul.f32 %v2352, 0.2
      %v2501 = vmul.f32 %v2354, 0.2
      %v2502 = vmul.f32 %v2358, 0.2
      %v2503 = vmul.f32 %v2360, 0.2
      %v2504 = vmul.f32 %v2362, 0.2
      %v2505 = vmul.f32 %v2364, 0.2
      %v2506 = vmul.f32 %v2368, 0.2
      %v2507 = vmul.f32 %v2370, 0.2
      %v2508 = vmul.f32 %v2372, 0.2
      %v2509 = vmul.f32 %v2374, 0.2
      %v2510 = vmul.f32 %v2378, 0.2
      %v2511 = vmul.f32 %v2380, 0.2
      %v2512 = vmul.f32 %v2382, 0.2
      %v2513 = vmul.f32 %v2384, 0.2
      %v2514 = vsel %vm2386, %v2228, %v2450
      %v2515 = vsel %vm2387, %v2230, %v2451
      %v2516 = vsel %vm2388, %v2232, %v2452
      %v2517 = vsel %vm2389, %v2234, %v2453
      %v2518 = vsel %vm2390, %v2238, %v2454
      %v2519 = vsel %vm2391, %v2240, %v2455
      %v2520 = vsel %vm2392, %v2242, %v2456
      %v2521 = vsel %vm2393, %v2244, %v2457
      %v2522 = vsel %vm2394, %v2248, %v2458
      %v2523 = vsel %vm2395, %v2250, %v2459
      %v2524 = vsel %vm2396, %v2252, %v2460
      %v2525 = vsel %vm2397, %v2254, %v2461
      %v2526 = vsel %vm2398, %v2258, %v2462
      %v2527 = vsel %vm2399, %v2260, %v2463
      %v2528 = vsel %vm2400, %v2262, %v2464
      %v2529 = vsel %vm2401, %v2264, %v2465
      %v2530 = vsel %vm2402, %v2268, %v2466
      %v2531 = vsel %vm2403, %v2270, %v2467
      %v2532 = vsel %vm2404, %v2272, %v2468
      %v2533 = vsel %vm2405, %v2274, %v2469
      %v2534 = vsel %vm2406, %v2278, %v2470
      %v2535 = vsel %vm2407, %v2280, %v2471
      %v2536 = vsel %vm2408, %v2282, %v2472
      %v2537 = vsel %vm2409, %v2284, %v2473
      %v2538 = vsel %vm2410, %v2288, %v2474
      %v2539 = vsel %vm2411, %v2290, %v2475
      %v2540 = vsel %vm2412, %v2292, %v2476
      %v2541 = vsel %vm2413, %v2294, %v2477
      %v2542 = vsel %vm2414, %v2298, %v2478
      %v2543 = vsel %vm2415, %v2300, %v2479
      %v2544 = vsel %vm2416, %v2302, %v2480
      %v2545 = vsel %vm2417, %v2304, %v2481
      %v2546 = vsel %vm2418, %v2308, %v2482
      %v2547 = vsel %vm2419, %v2310, %v2483
      %v2548 = vsel %vm2420, %v2312, %v2484
      %v2549 = vsel %vm2421, %v2314, %v2485
      %v2550 = vsel %vm2422, %v2318, %v2486
      %v2551 = vsel %vm2423, %v2320, %v2487
      %v2552 = vsel %vm2424, %v2322, %v2488
      %v2553 = vsel %vm2425, %v2324, %v2489
      %v2554 = vsel %vm2426, %v2328, %v2490
      %v2555 = vsel %vm2427, %v2330, %v2491
      %v2556 = vsel %vm2428, %v2332, %v2492
      %v2557 = vsel %vm2429, %v2334, %v2493
      %v2558 = vsel %vm2430, %v2338, %v2494
      %v2559 = vsel %vm2431, %v2340, %v2495
      %v2560 = vsel %vm2432, %v2342, %v2496
      %v2561 = vsel %vm2433, %v2344, %v2497
      %v2562 = vsel %vm2434, %v2348, %v2498
      %v2563 = vsel %vm2435, %v2350, %v2499
      %v2564 = vsel %vm2436, %v2352, %v2500
      %v2565 = vsel %vm2437, %v2354, %v2501
      %v2566 = vsel %vm2438, %v2358, %v2502
      %v2567 = vsel %vm2439, %v2360, %v2503
      %v2568 = vsel %vm2440, %v2362, %v2504
      %v2569 = vsel %vm2441, %v2364, %v2505
      %v2570 = vsel %vm2442, %v2368, %v2506
      %v2571 = vsel %vm2443, %v2370, %v2507
      %v2572 = vsel %vm2444, %v2372, %v2508
      %v2573 = vsel %vm2445, %v2374, %v2509
      %v2574 = vsel %vm2446, %v2378, %v2510
      %v2575 = vsel %vm2447, %v2380, %v2511
      %v2576 = vsel %vm2448, %v2382, %v2512
      %v2577 = vsel %vm2449, %v2384, %v2513
      %2578 = vst [vmem:[%s387] sm:$0xff] %v2514
      %2579 = vst [vmem:[%s387 + $0x8] sm:$0xff] %v2515
      %2580 = vst [vmem:[%s387 + $0x10] sm:$0xff] %v2516
      %2581 = vst [vmem:[%s387 + $0x18] sm:$0xff] %v2517
      %2582 = vst [vmem:[%s387 + $0x20] sm:$0xff] %v2518
      %2583 = vst [vmem:[%s387 + $0x28] sm:$0xff] %v2519
      %2584 = vst [vmem:[%s387 + $0x30] sm:$0xff] %v2520
      %2585 = vst [vmem:[%s387 + $0x38] sm:$0xff] %v2521
      %2586 = vst [vmem:[%s387 + $0x40] sm:$0xff] %v2522
      %2587 = vst [vmem:[%s387 + $0x48] sm:$0xff] %v2523
      %2588 = vst [vmem:[%s387 + $0x50] sm:$0xff] %v2524
      %2589 = vst [vmem:[%s387 + $0x58] sm:$0xff] %v2525
      %2590 = vst [vmem:[%s387 + $0x60] sm:$0xff] %v2526
      %2591 = vst [vmem:[%s387 + $0x68] sm:$0xff] %v2527
      %2592 = vst [vmem:[%s387 + $0x70] sm:$0xff] %v2528
      %2593 = vst [vmem:[%s387 + $0x78] sm:$0xff] %v2529
      %2594 = vst [vmem:[%s387 + $0x80] sm:$0xff] %v2530
      %2595 = vst [vmem:[%s387 + $0x88] sm:$0xff] %v2531
      %2596 = vst [vmem:[%s387 + $0x90] sm:$0xff] %v2532
      %2597 = vst [vmem:[%s387 + $0x98] sm:$0xff] %v2533
      %2598 = vst [vmem:[%s387 + $0xa0] sm:$0xff] %v2534
      %2599 = vst [vmem:[%s387 + $0xa8] sm:$0xff] %v2535
      %2600 = vst [vmem:[%s387 + $0xb0] sm:$0xff] %v2536
      %2601 = vst [vmem:[%s387 + $0xb8] sm:$0xff] %v2537
      %2602 = vst [vmem:[%s387 + $0xc0] sm:$0xff] %v2538
      %2603 = vst [vmem:[%s387 + $0xc8] sm:$0xff] %v2539
      %2604 = vst [vmem:[%s387 + $0xd0] sm:$0xff] %v2540
      %2605 = vst [vmem:[%s387 + $0xd8] sm:$0xff] %v2541
      %2606 = vst [vmem:[%s387 + $0xe0] sm:$0xff] %v2542
      %2607 = vst [vmem:[%s387 + $0xe8] sm:$0xff] %v2543
      %2608 = vst [vmem:[%s387 + $0xf0] sm:$0xff] %v2544
      %2609 = vst [vmem:[%s387 + $0xf8] sm:$0xff] %v2545
      %2610 = vst [vmem:[%s387 + $0x100] sm:$0xff] %v2546
      %2611 = vst [vmem:[%s387 + $0x108] sm:$0xff] %v2547
      %2612 = vst [vmem:[%s387 + $0x110] sm:$0xff] %v2548
      %2613 = vst [vmem:[%s387 + $0x118] sm:$0xff] %v2549
      %2614 = vst [vmem:[%s387 + $0x120] sm:$0xff] %v2550
      %2615 = vst [vmem:[%s387 + $0x128] sm:$0xff] %v2551
      %2616 = vst [vmem:[%s387 + $0x130] sm:$0xff] %v2552
      %2617 = vst [vmem:[%s387 + $0x138] sm:$0xff] %v2553
      %2618 = vst [vmem:[%s387 + $0x140] sm:$0xff] %v2554
      %2619 = vst [vmem:[%s387 + $0x148] sm:$0xff] %v2555
      %2620 = vst [vmem:[%s387 + $0x150] sm:$0xff] %v2556
      %2621 = vst [vmem:[%s387 + $0x158] sm:$0xff] %v2557
      %2622 = vst [vmem:[%s387 + $0x160] sm:$0xff] %v2558
      %2623 = vst [vmem:[%s387 + $0x168] sm:$0xff] %v2559
      %2624 = vst [vmem:[%s387 + $0x170] sm:$0xff] %v2560
      %2625 = vst [vmem:[%s387 + $0x178] sm:$0xff] %v2561
      %2626 = vst [vmem:[%s387 + $0x180] sm:$0xff] %v2562
      %2627 = vst [vmem:[%s387 + $0x188] sm:$0xff] %v2563
      %2628 = vst [vmem:[%s387 + $0x190] sm:$0xff] %v2564
      %2629 = vst [vmem:[%s387 + $0x198] sm:$0xff] %v2565
      %2630 = vst [vmem:[%s387 + $0x1a0] sm:$0xff] %v2566
      %2631 = vst [vmem:[%s387 + $0x1a8] sm:$0xff] %v2567
      %2632 = vst [vmem:[%s387 + $0x1b0] sm:$0xff] %v2568
      %2633 = vst [vmem:[%s387 + $0x1b8] sm:$0xff] %v2569
      %2634 = vst [vmem:[%s387 + $0x1c0] sm:$0xff] %v2570
      %2635 = vst [vmem:[%s387 + $0x1c8] sm:$0xff] %v2571
      %2636 = vst [vmem:[%s387 + $0x1d0] sm:$0xff] %v2572
      %2637 = vst [vmem:[%s387 + $0x1d8] sm:$0xff] %v2573
      %2638 = vst [vmem:[%s387 + $0x1e0] sm:$0xff] %v2574
      %2639 = vst [vmem:[%s387 + $0x1e8] sm:$0xff] %v2575
      %2640 = vst [vmem:[%s387 + $0x1f0] sm:$0xff] %v2576
      %2641 = vst [vmem:[%s387 + $0x1f8] sm:$0xff] %v2577
      %v2642 = vld [vmem:[%s5] sm:$0xf]
      %v2643 = vld [vmem:[%s5 + $0x4] sm:$0xf]
      %v2644 = vld [vmem:[%s5 + $0x8] sm:$0xf]
      %v2645 = vld [vmem:[%s5 + $0xc] sm:$0xf]
      %v2646 = vld [vmem:[%s5 + $0x10] sm:$0xf]
      %v2647 = vld [vmem:[%s5 + $0x14] sm:$0xf]
      %v2648 = vld [vmem:[%s5 + $0x18] sm:$0xf]
      %v2649 = vld [vmem:[%s5 + $0x1c] sm:$0xf]
      %v2650 = vld [vmem:[%s5 + $0x20] sm:$0xf]
      %v2651 = vld [vmem:[%s5 + $0x24] sm:$0xf]
      %v2652 = vld [vmem:[%s5 + $0x28] sm:$0xf]
      %v2653 = vld [vmem:[%s5 + $0x2c] sm:$0xf]
      %v2654 = vld [vmem:[%s5 + $0x30] sm:$0xf]
      %v2655 = vld [vmem:[%s5 + $0x34] sm:$0xf]
      %v2656 = vld [vmem:[%s5 + $0x38] sm:$0xf]
      %v2657 = vld [vmem:[%s5 + $0x3c] sm:$0xf]
      %v2674 = vunpack.c.l.b16 %v2642
      %v2675 = vunpack.c.l.b16 %v2643
      %v2676 = vunpack.c.l.b16 %v2644
      %v2677 = vunpack.c.l.b16 %v2645
      %v2678 = vunpack.c.l.b16 %v2646
      %v2679 = vunpack.c.l.b16 %v2647
      %v2680 = vunpack.c.l.b16 %v2648
      %v2681 = vunpack.c.l.b16 %v2649
      %v2682 = vunpack.c.l.b16 %v2650
      %v2683 = vunpack.c.l.b16 %v2651
      %v2684 = vunpack.c.l.b16 %v2652
      %v2685 = vunpack.c.l.b16 %v2653
      %v2686 = vunpack.c.l.b16 %v2654
      %v2687 = vunpack.c.l.b16 %v2655
      %v2688 = vunpack.c.l.b16 %v2656
      %v2689 = vunpack.c.l.b16 %v2657
      %v2690 = vpack.c.b16 %v2675, %v2674
      %v2691 = vpack.c.b16 %v2677, %v2676
      %v2692 = vpack.c.b16 %v2679, %v2678
      %v2693 = vpack.c.b16 %v2681, %v2680
      %v2694 = vpack.c.b16 %v2683, %v2682
      %v2695 = vpack.c.b16 %v2685, %v2684
      %v2696 = vpack.c.b16 %v2687, %v2686
      %v2697 = vpack.c.b16 %v2689, %v2688
      %2706 = vmatprep.subr.bf16.mxu0 0
      %2707 = vmatpush1.bf16.msra.mxu0 %v2690
      %2708 = vmatprep.subr.bf16.mxu0 0
      %2709 = vmatpush1.bf16.msra.mxu0 %v2691
      %2710 = vmatprep.subr.bf16.mxu0 0
      %2711 = vmatpush1.bf16.msra.mxu0 %v2692
      %2712 = vmatprep.subr.bf16.mxu0 0
      %2713 = vmatpush1.bf16.msra.mxu0 %v2693
      %2714 = vmatprep.subr.bf16.mxu0 0
      %2715 = vmatpush1.bf16.msra.mxu0 %v2694
      %2716 = vmatprep.subr.bf16.mxu0 0
      %2717 = vmatpush1.bf16.msra.mxu0 %v2695
      %2718 = vmatprep.subr.bf16.mxu0 0
      %2719 = vmatpush1.bf16.msra.mxu0 %v2696
      %2720 = vmatprep.subr.bf16.mxu0 0
      %2721 = vmatpush1.bf16.msra.mxu0 %v2697
      %2722 = vmatprep.subr.bf16.mxu0 0
      %2723 = vmatpush1.bf16.msra.mxu0 0
      %2724 = vmatprep.subr.bf16.mxu0 0
      %2725 = vmatpush1.bf16.msra.mxu0 0
      %2726 = vmatprep.subr.bf16.mxu0 0
      %2727 = vmatpush1.bf16.msra.mxu0 0
      %2728 = vmatprep.subr.bf16.mxu0 0
      %2729 = vmatpush1.bf16.msra.mxu0 0
      %2730 = vmatprep.subr.bf16.mxu0 0
      %2731 = vmatpush1.bf16.msra.mxu0 0
      %2732 = vmatprep.subr.bf16.mxu0 0
      %2733 = vmatpush1.bf16.msra.mxu0 0
      %2734 = vmatprep.subr.bf16.mxu0 0
      %2735 = vmatpush1.bf16.msra.mxu0 0
      %2736 = vmatprep.subr.bf16.mxu0 0
      %2737 = vmatpush1.bf16.msra.mxu0 0
      %2738 = vmatprep.mubr.bf16.mxu0 0
      %2739 = vmatmul.mubr.bf16.gmra.mrb[0].mxu0 %v1450
      %v2740 = vpop.f32.mrb[0].mxu0
      %v2741 = vadd.f32 %v508, %v2740
      %v2742 = vpop.f32.mrb[0].mxu0
      %v2743 = vpop.f32.mrb[0].mxu0
      %v2744 = vadd.f32 %v508, %v2743
      %v2745 = vpop.f32.mrb[0].mxu0
      %2746 = vmatprep.mubr.bf16.mxu0 0
      %2747 = vmatmul.mubr.bf16.gmra.mrb[0].mxu0 %v1451
      %v2748 = vpop.f32.mrb[0].mxu0
      %v2749 = vadd.f32 %v508, %v2748
      %v2750 = vpop.f32.mrb[0].mxu0
      %v2751 = vpop.f32.mrb[0].mxu0
      %v2752 = vadd.f32 %v508, %v2751
      %v2753 = vpop.f32.mrb[0].mxu0
      %2754 = vmatprep.mubr.bf16.mxu0 0
      %2755 = vmatmul.mubr.bf16.gmra.mrb[0].mxu0 %v1452
      %v2756 = vpop.f32.mrb[0].mxu0
      %v2757 = vadd.f32 %v508, %v2756
      %v2758 = vpop.f32.mrb[0].mxu0
      %v2759 = vpop.f32.mrb[0].mxu0
      %v2760 = vadd.f32 %v508, %v2759
      %v2761 = vpop.f32.mrb[0].mxu0
      %2762 = vmatprep.mubr.bf16.mxu0 0
      %2763 = vmatmul.mubr.bf16.gmra.mrb[0].mxu0 %v1453
      %v2764 = vpop.f32.mrb[0].mxu0
      %v2765 = vadd.f32 %v508, %v2764
      %v2766 = vpop.f32.mrb[0].mxu0
      %v2767 = vpop.f32.mrb[0].mxu0
      %v2768 = vadd.f32 %v508, %v2767
      %v2769 = vpop.f32.mrb[0].mxu0
      %2770 = vmatprep.mubr.bf16.mxu0 0
      %2771 = vmatmul.mubr.bf16.gmra.mrb[0].mxu0 %v1454
      %v2772 = vpop.f32.mrb[0].mxu0
      %v2773 = vadd.f32 %v508, %v2772
      %v2774 = vpop.f32.mrb[0].mxu0
      %v2775 = vpop.f32.mrb[0].mxu0
      %v2776 = vadd.f32 %v508, %v2775
      %v2777 = vpop.f32.mrb[0].mxu0
      %2778 = vmatprep.mubr.bf16.mxu0 0
      %2779 = vmatmul.mubr.bf16.gmra.mrb[0].mxu0 %v1455
      %v2780 = vpop.f32.mrb[0].mxu0
      %v2781 = vadd.f32 %v508, %v2780
      %v2782 = vpop.f32.mrb[0].mxu0
      %v2783 = vpop.f32.mrb[0].mxu0
      %v2784 = vadd.f32 %v508, %v2783
      %v2785 = vpop.f32.mrb[0].mxu0
      %2786 = vmatprep.mubr.bf16.mxu0 0
      %2787 = vmatmul.mubr.bf16.gmra.mrb[0].mxu0 %v1456
      %v2788 = vpop.f32.mrb[0].mxu0
      %v2789 = vadd.f32 %v508, %v2788
      %v2790 = vpop.f32.mrb[0].mxu0
      %v2791 = vpop.f32.mrb[0].mxu0
      %v2792 = vadd.f32 %v508, %v2791
      %v2793 = vpop.f32.mrb[0].mxu0
      %2794 = vmatprep.mubr.bf16.mxu0 0
      %2795 = vmatmul.mubr.bf16.gmra.mrb[0].mxu0 %v1457
      %v2796 = vpop.f32.mrb[0].mxu0
      %v2797 = vadd.f32 %v508, %v2796
      %v2798 = vpop.f32.mrb[0].mxu0
      %v2799 = vpop.f32.mrb[0].mxu0
      %v2800 = vadd.f32 %v508, %v2799
      %v2801 = vpop.f32.mrb[0].mxu0
      %2802 = vmatprep.mubr.bf16.mxu0 0
      %2803 = vmatmul.mubr.bf16.gmra.mrb[0].mxu0 %v1458
      %v2804 = vpop.f32.mrb[0].mxu0
      %v2805 = vadd.f32 %v508, %v2804
      %v2806 = vpop.f32.mrb[0].mxu0
      %v2807 = vpop.f32.mrb[0].mxu0
      %v2808 = vadd.f32 %v508, %v2807
      %v2809 = vpop.f32.mrb[0].mxu0
      %2810 = vmatprep.mubr.bf16.mxu0 0
      %2811 = vmatmul.mubr.bf16.gmra.mrb[0].mxu0 %v1459
      %v2812 = vpop.f32.mrb[0].mxu0
      %v2813 = vadd.f32 %v508, %v2812
      %v2814 = vpop.f32.mrb[0].mxu0
      %v2815 = vpop.f32.mrb[0].mxu0
      %v2816 = vadd.f32 %v508, %v2815
      %v2817 = vpop.f32.mrb[0].mxu0
      %2818 = vmatprep.mubr.bf16.mxu0 0
      %2819 = vmatmul.mubr.bf16.gmra.mrb[0].mxu0 %v1460
      %v2820 = vpop.f32.mrb[0].mxu0
      %v2821 = vadd.f32 %v508, %v2820
      %v2822 = vpop.f32.mrb[0].mxu0
      %v2823 = vpop.f32.mrb[0].mxu0
      %v2824 = vadd.f32 %v508, %v2823
      %v2825 = vpop.f32.mrb[0].mxu0
      %2826 = vmatprep.mubr.bf16.mxu0 0
      %2827 = vmatmul.mubr.bf16.gmra.mrb[0].mxu0 %v1461
      %v2828 = vpop.f32.mrb[0].mxu0
      %v2829 = vadd.f32 %v508, %v2828
      %v2830 = vpop.f32.mrb[0].mxu0
      %v2831 = vpop.f32.mrb[0].mxu0
      %v2832 = vadd.f32 %v508, %v2831
      %v2833 = vpop.f32.mrb[0].mxu0
      %2834 = vmatprep.mubr.bf16.mxu0 0
      %2835 = vmatmul.mubr.bf16.gmra.mrb[0].mxu0 %v1462
      %v2836 = vpop.f32.mrb[0].mxu0
      %v2837 = vadd.f32 %v508, %v2836
      %v2838 = vpop.f32.mrb[0].mxu0
      %v2839 = vpop.f32.mrb[0].mxu0
      %v2840 = vadd.f32 %v508, %v2839
      %v2841 = vpop.f32.mrb[0].mxu0
      %2842 = vmatprep.mubr.bf16.mxu0 0
      %2843 = vmatmul.mubr.bf16.gmra.mrb[0].mxu0 %v1463
      %v2844 = vpop.f32.mrb[0].mxu0
      %v2845 = vadd.f32 %v508, %v2844
      %v2846 = vpop.f32.mrb[0].mxu0
      %v2847 = vpop.f32.mrb[0].mxu0
      %v2848 = vadd.f32 %v508, %v2847
      %v2849 = vpop.f32.mrb[0].mxu0
      %2850 = vmatprep.mubr.bf16.mxu0 0
      %2851 = vmatmul.mubr.bf16.gmra.mrb[0].mxu0 %v1464
      %v2852 = vpop.f32.mrb[0].mxu0
      %v2853 = vadd.f32 %v508, %v2852
      %v2854 = vpop.f32.mrb[0].mxu0
      %v2855 = vpop.f32.mrb[0].mxu0
      %v2856 = vadd.f32 %v508, %v2855
      %v2857 = vpop.f32.mrb[0].mxu0
      %2858 = vmatprep.mubr.bf16.mxu0 0
      %2859 = vmatmul.mubr.bf16.gmra.mrb[0].mxu0 %v1465
      %v2860 = vpop.f32.mrb[0].mxu0
      %v2861 = vadd.f32 %v508, %v2860
      %v2862 = vpop.f32.mrb[0].mxu0
      %v2863 = vpop.f32.mrb[0].mxu0
      %v2864 = vadd.f32 %v508, %v2863
      %v2865 = vpop.f32.mrb[0].mxu0
      %2866 = vdwg.mxu0
      %vm2867 = vcmp.gt.f32.partialorder %v2741, 0.0
      %vm2868 = vcmp.gt.f32.partialorder %v2744, 0.0
      %vm2869 = vcmp.gt.f32.partialorder %v2749, 0.0
      %vm2870 = vcmp.gt.f32.partialorder %v2752, 0.0
      %vm2871 = vcmp.gt.f32.partialorder %v2757, 0.0
      %vm2872 = vcmp.gt.f32.partialorder %v2760, 0.0
      %vm2873 = vcmp.gt.f32.partialorder %v2765, 0.0
      %vm2874 = vcmp.gt.f32.partialorder %v2768, 0.0
      %vm2875 = vcmp.gt.f32.partialorder %v2773, 0.0
      %vm2876 = vcmp.gt.f32.partialorder %v2776, 0.0
      %vm2877 = vcmp.gt.f32.partialorder %v2781, 0.0
      %vm2878 = vcmp.gt.f32.partialorder %v2784, 0.0
      %vm2879 = vcmp.gt.f32.partialorder %v2789, 0.0
      %vm2880 = vcmp.gt.f32.partialorder %v2792, 0.0
      %vm2881 = vcmp.gt.f32.partialorder %v2797, 0.0
      %vm2882 = vcmp.gt.f32.partialorder %v2800, 0.0
      %vm2883 = vcmp.gt.f32.partialorder %v2805, 0.0
      %vm2884 = vcmp.gt.f32.partialorder %v2808, 0.0
      %vm2885 = vcmp.gt.f32.partialorder %v2813, 0.0
      %vm2886 = vcmp.gt.f32.partialorder %v2816, 0.0
      %vm2887 = vcmp.gt.f32.partialorder %v2821, 0.0
      %vm2888 = vcmp.gt.f32.partialorder %v2824, 0.0
      %vm2889 = vcmp.gt.f32.partialorder %v2829, 0.0
      %vm2890 = vcmp.gt.f32.partialorder %v2832, 0.0
      %vm2891 = vcmp.gt.f32.partialorder %v2837, 0.0
      %vm2892 = vcmp.gt.f32.partialorder %v2840, 0.0
      %vm2893 = vcmp.gt.f32.partialorder %v2845, 0.0
      %vm2894 = vcmp.gt.f32.partialorder %v2848, 0.0
      %vm2895 = vcmp.gt.f32.partialorder %v2853, 0.0
      %vm2896 = vcmp.gt.f32.partialorder %v2856, 0.0
      %vm2897 = vcmp.gt.f32.partialorder %v2861, 0.0
      %vm2898 = vcmp.gt.f32.partialorder %v2864, 0.0
      %v2899 = vmul.f32 %v2741, 0.2
      %v2900 = vmul.f32 %v2744, 0.2
      %v2901 = vmul.f32 %v2749, 0.2
      %v2902 = vmul.f32 %v2752, 0.2
      %v2903 = vmul.f32 %v2757, 0.2
      %v2904 = vmul.f32 %v2760, 0.2
      %v2905 = vmul.f32 %v2765, 0.2
      %v2906 = vmul.f32 %v2768, 0.2
      %v2907 = vmul.f32 %v2773, 0.2
      %v2908 = vmul.f32 %v2776, 0.2
      %v2909 = vmul.f32 %v2781, 0.2
      %v2910 = vmul.f32 %v2784, 0.2
      %v2911 = vmul.f32 %v2789, 0.2
      %v2912 = vmul.f32 %v2792, 0.2
      %v2913 = vmul.f32 %v2797, 0.2
      %v2914 = vmul.f32 %v2800, 0.2
      %v2915 = vmul.f32 %v2805, 0.2
      %v2916 = vmul.f32 %v2808, 0.2
      %v2917 = vmul.f32 %v2813, 0.2
      %v2918 = vmul.f32 %v2816, 0.2
      %v2919 = vmul.f32 %v2821, 0.2
      %v2920 = vmul.f32 %v2824, 0.2
      %v2921 = vmul.f32 %v2829, 0.2
      %v2922 = vmul.f32 %v2832, 0.2
      %v2923 = vmul.f32 %v2837, 0.2
      %v2924 = vmul.f32 %v2840, 0.2
      %v2925 = vmul.f32 %v2845, 0.2
      %v2926 = vmul.f32 %v2848, 0.2
      %v2927 = vmul.f32 %v2853, 0.2
      %v2928 = vmul.f32 %v2856, 0.2
      %v2929 = vmul.f32 %v2861, 0.2
      %v2930 = vmul.f32 %v2864, 0.2
      %v2931 = vsel %vm2867, %v2741, %v2899
      %v2932 = vsel %vm2868, %v2744, %v2900
      %v2933 = vsel %vm2869, %v2749, %v2901
      %v2934 = vsel %vm2870, %v2752, %v2902
      %v2935 = vsel %vm2871, %v2757, %v2903
      %v2936 = vsel %vm2872, %v2760, %v2904
      %v2937 = vsel %vm2873, %v2765, %v2905
      %v2938 = vsel %vm2874, %v2768, %v2906
      %v2939 = vsel %vm2875, %v2773, %v2907
      %v2940 = vsel %vm2876, %v2776, %v2908
      %v2941 = vsel %vm2877, %v2781, %v2909
      %v2942 = vsel %vm2878, %v2784, %v2910
      %v2943 = vsel %vm2879, %v2789, %v2911
      %v2944 = vsel %vm2880, %v2792, %v2912
      %v2945 = vsel %vm2881, %v2797, %v2913
      %v2946 = vsel %vm2882, %v2800, %v2914
      %v2947 = vsel %vm2883, %v2805, %v2915
      %v2948 = vsel %vm2884, %v2808, %v2916
      %v2949 = vsel %vm2885, %v2813, %v2917
      %v2950 = vsel %vm2886, %v2816, %v2918
      %v2951 = vsel %vm2887, %v2821, %v2919
      %v2952 = vsel %vm2888, %v2824, %v2920
      %v2953 = vsel %vm2889, %v2829, %v2921
      %v2954 = vsel %vm2890, %v2832, %v2922
      %v2955 = vsel %vm2891, %v2837, %v2923
      %v2956 = vsel %vm2892, %v2840, %v2924
      %v2957 = vsel %vm2893, %v2845, %v2925
      %v2958 = vsel %vm2894, %v2848, %v2926
      %v2959 = vsel %vm2895, %v2853, %v2927
      %v2960 = vsel %vm2896, %v2856, %v2928
      %v2961 = vsel %vm2897, %v2861, %v2929
      %v2962 = vsel %vm2898, %v2864, %v2930
      %v2963 = vpack.c.bf16 %v2932, %v2931
      %v2964 = vpack.c.bf16 %v2934, %v2933
      %v2965 = vpack.c.bf16 %v2936, %v2935
      %v2966 = vpack.c.bf16 %v2938, %v2937
      %v2967 = vpack.c.bf16 %v2940, %v2939
      %v2968 = vpack.c.bf16 %v2942, %v2941
      %v2969 = vpack.c.bf16 %v2944, %v2943
      %v2970 = vpack.c.bf16 %v2946, %v2945
      %v2971 = vpack.c.bf16 %v2948, %v2947
      %v2972 = vpack.c.bf16 %v2950, %v2949
      %v2973 = vpack.c.bf16 %v2952, %v2951
      %v2974 = vpack.c.bf16 %v2954, %v2953
      %v2975 = vpack.c.bf16 %v2956, %v2955
      %v2976 = vpack.c.bf16 %v2958, %v2957
      %v2977 = vpack.c.bf16 %v2960, %v2959
      %v2978 = vpack.c.bf16 %v2962, %v2961
      %v2995 = vunpack.c.l.b16 %v2963
      %v2996 = vunpack.c.h.b16 %v2963
      %v2997 = vunpack.c.l.b16 %v2964
      %v2998 = vunpack.c.h.b16 %v2964
      %v2999 = vunpack.c.l.b16 %v2965
      %v3000 = vunpack.c.h.b16 %v2965
      %v3001 = vunpack.c.l.b16 %v2966
      %v3002 = vunpack.c.h.b16 %v2966
      %v3003 = vunpack.c.l.b16 %v2967
      %v3004 = vunpack.c.h.b16 %v2967
      %v3005 = vunpack.c.l.b16 %v2968
      %v3006 = vunpack.c.h.b16 %v2968
      %v3007 = vunpack.c.l.b16 %v2969
      %v3008 = vunpack.c.h.b16 %v2969
      %v3009 = vunpack.c.l.b16 %v2970
      %v3010 = vunpack.c.h.b16 %v2970
      %v3011 = vunpack.c.l.b16 %v2971
      %v3012 = vunpack.c.h.b16 %v2971
      %v3013 = vunpack.c.l.b16 %v2972
      %v3014 = vunpack.c.h.b16 %v2972
      %v3015 = vunpack.c.l.b16 %v2973
      %v3016 = vunpack.c.h.b16 %v2973
      %v3017 = vunpack.c.l.b16 %v2974
      %v3018 = vunpack.c.h.b16 %v2974
      %v3019 = vunpack.c.l.b16 %v2975
      %v3020 = vunpack.c.h.b16 %v2975
      %v3021 = vunpack.c.l.b16 %v2976
      %v3022 = vunpack.c.h.b16 %v2976
      %v3023 = vunpack.c.l.b16 %v2977
      %v3024 = vunpack.c.h.b16 %v2977
      %v3025 = vunpack.c.l.b16 %v2978
      %v3026 = vunpack.c.h.b16 %v2978
      %v3027 = vpack.c.b16 %v2995, %v2995
      %v3028 = vpack.c.b16 %v2996, %v2996
      %v3029 = vpack.c.b16 %v2997, %v2997
      %v3030 = vpack.c.b16 %v2998, %v2998
      %v3031 = vpack.c.b16 %v2999, %v2999
      %v3032 = vpack.c.b16 %v3000, %v3000
      %v3033 = vpack.c.b16 %v3001, %v3001
      %v3034 = vpack.c.b16 %v3002, %v3002
      %v3035 = vpack.c.b16 %v3003, %v3003
      %v3036 = vpack.c.b16 %v3004, %v3004
      %v3037 = vpack.c.b16 %v3005, %v3005
      %v3038 = vpack.c.b16 %v3006, %v3006
      %v3039 = vpack.c.b16 %v3007, %v3007
      %v3040 = vpack.c.b16 %v3008, %v3008
      %v3041 = vpack.c.b16 %v3009, %v3009
      %v3042 = vpack.c.b16 %v3010, %v3010
      %v3043 = vpack.c.b16 %v3011, %v3011
      %v3044 = vpack.c.b16 %v3012, %v3012
      %v3045 = vpack.c.b16 %v3013, %v3013
      %v3046 = vpack.c.b16 %v3014, %v3014
      %v3047 = vpack.c.b16 %v3015, %v3015
      %v3048 = vpack.c.b16 %v3016, %v3016
      %v3049 = vpack.c.b16 %v3017, %v3017
      %v3050 = vpack.c.b16 %v3018, %v3018
      %v3051 = vpack.c.b16 %v3019, %v3019
      %v3052 = vpack.c.b16 %v3020, %v3020
      %v3053 = vpack.c.b16 %v3021, %v3021
      %v3054 = vpack.c.b16 %v3022, %v3022
      %v3055 = vpack.c.b16 %v3023, %v3023
      %v3056 = vpack.c.b16 %v3024, %v3024
      %v3057 = vpack.c.b16 %v3025, %v3025
      %v3058 = vpack.c.b16 %v3026, %v3026
      %3091 = vst [vmem:[%s399] sm:$0xf] %v3027
      %3092 = vst [vmem:[%s399 + $0x4] sm:$0xf] %v3028
      %3093 = vst [vmem:[%s399 + $0x8] sm:$0xf] %v3029
      %3094 = vst [vmem:[%s399 + $0xc] sm:$0xf] %v3030
      %3095 = vst [vmem:[%s399 + $0x10] sm:$0xf] %v3031
      %3096 = vst [vmem:[%s399 + $0x14] sm:$0xf] %v3032
      %3097 = vst [vmem:[%s399 + $0x18] sm:$0xf] %v3033
      %3098 = vst [vmem:[%s399 + $0x1c] sm:$0xf] %v3034
      %3099 = vst [vmem:[%s399 + $0x20] sm:$0xf] %v3035
      %3100 = vst [vmem:[%s399 + $0x24] sm:$0xf] %v3036
      %3101 = vst [vmem:[%s399 + $0x28] sm:$0xf] %v3037
      %3102 = vst [vmem:[%s399 + $0x2c] sm:$0xf] %v3038
      %3103 = vst [vmem:[%s399 + $0x30] sm:$0xf] %v3039
      %3104 = vst [vmem:[%s399 + $0x34] sm:$0xf] %v3040
      %3105 = vst [vmem:[%s399 + $0x38] sm:$0xf] %v3041
      %3106 = vst [vmem:[%s399 + $0x3c] sm:$0xf] %v3042
      %3107 = vst [vmem:[%s399 + $0x40] sm:$0xf] %v3043
      %3108 = vst [vmem:[%s399 + $0x44] sm:$0xf] %v3044
      %3109 = vst [vmem:[%s399 + $0x48] sm:$0xf] %v3045
      %3110 = vst [vmem:[%s399 + $0x4c] sm:$0xf] %v3046
      %3111 = vst [vmem:[%s399 + $0x50] sm:$0xf] %v3047
      %3112 = vst [vmem:[%s399 + $0x54] sm:$0xf] %v3048
      %3113 = vst [vmem:[%s399 + $0x58] sm:$0xf] %v3049
      %3114 = vst [vmem:[%s399 + $0x5c] sm:$0xf] %v3050
      %3115 = vst [vmem:[%s399 + $0x60] sm:$0xf] %v3051
      %3116 = vst [vmem:[%s399 + $0x64] sm:$0xf] %v3052
      %3117 = vst [vmem:[%s399 + $0x68] sm:$0xf] %v3053
      %3118 = vst [vmem:[%s399 + $0x6c] sm:$0xf] %v3054
      %3119 = vst [vmem:[%s399 + $0x70] sm:$0xf] %v3055
      %3120 = vst [vmem:[%s399 + $0x74] sm:$0xf] %v3056
      %3121 = vst [vmem:[%s399 + $0x78] sm:$0xf] %v3057
      %3122 = vst [vmem:[%s399 + $0x7c] sm:$0xf] %v3058
      %s3123 = smul.u32 %s22, 256
      %v3124 = vlaneseq
      %v3125 = vshrl.u32 %v3124, 7
      %v3126 = vadd.s32 %v3125, 8
      %v3127 = vadd.s32 %v3125, 16
      %v3128 = vadd.s32 %v3125, 24
      %v3129 = vadd.s32 %v3125, 32
      %v3130 = vadd.s32 %v3125, 40
      %v3131 = vadd.s32 %v3125, 48
      %v3132 = vadd.s32 %v3125, 56
      %v3133 = vadd.s32 %v3125, 64
      %v3134 = vadd.s32 %v3125, 72
      %v3135 = vadd.s32 %v3125, 80
      %v3136 = vadd.s32 %v3125, 88
      %v3137 = vadd.s32 %v3125, 96
      %v3138 = vadd.s32 %v3125, 104
      %v3139 = vadd.s32 %v3125, 112
      %v3140 = vadd.s32 %v3125, 120
      %v3141 = vadd.s32 %v3125, 128
      %v3142 = vadd.s32 %v3125, 136
      %v3143 = vadd.s32 %v3125, 144
      %v3144 = vadd.s32 %v3125, 152
      %v3145 = vadd.s32 %v3125, 160
      %v3146 = vadd.s32 %v3125, 168
      %v3147 = vadd.s32 %v3125, 176
      %v3148 = vadd.s32 %v3125, 184
      %v3149 = vadd.s32 %v3125, 192
      %v3150 = vadd.s32 %v3125, 200
      %v3151 = vadd.s32 %v3125, 208
      %v3152 = vadd.s32 %v3125, 216
      %v3153 = vadd.s32 %v3125, 224
      %v3154 = vadd.s32 %v3125, 232
      %v3155 = vadd.s32 %v3125, 240
      %v3156 = vadd.s32 %v3125, 248
      %v3157 = vstv %s3123
      %v3158 = vadd.s32 %v3157, %v3125
      %v3159 = vadd.s32 %v3157, %v3126
      %v3160 = vadd.s32 %v3157, %v3127
      %v3161 = vadd.s32 %v3157, %v3128
      %v3162 = vadd.s32 %v3157, %v3129
      %v3163 = vadd.s32 %v3157, %v3130
      %v3164 = vadd.s32 %v3157, %v3131
      %v3165 = vadd.s32 %v3157, %v3132
      %v3166 = vadd.s32 %v3157, %v3133
      %v3167 = vadd.s32 %v3157, %v3134
      %v3168 = vadd.s32 %v3157, %v3135
      %v3169 = vadd.s32 %v3157, %v3136
      %v3170 = vadd.s32 %v3157, %v3137
      %v3171 = vadd.s32 %v3157, %v3138
      %v3172 = vadd.s32 %v3157, %v3139
      %v3173 = vadd.s32 %v3157, %v3140
      %v3174 = vadd.s32 %v3157, %v3141
      %v3175 = vadd.s32 %v3157, %v3142
      %v3176 = vadd.s32 %v3157, %v3143
      %v3177 = vadd.s32 %v3157, %v3144
      %v3178 = vadd.s32 %v3157, %v3145
      %v3179 = vadd.s32 %v3157, %v3146
      %v3180 = vadd.s32 %v3157, %v3147
      %v3181 = vadd.s32 %v3157, %v3148
      %v3182 = vadd.s32 %v3157, %v3149
      %v3183 = vadd.s32 %v3157, %v3150
      %v3184 = vadd.s32 %v3157, %v3151
      %v3185 = vadd.s32 %v3157, %v3152
      %v3186 = vadd.s32 %v3157, %v3153
      %v3187 = vadd.s32 %v3157, %v3154
      %v3188 = vadd.s32 %v3157, %v3155
      %v3189 = vadd.s32 %v3157, %v3156
      %vm3190 = vcmp.lt.s32.totalorder %v3158, 384
      %vm3191 = vcmp.lt.s32.totalorder %v3159, 384
      %vm3192 = vcmp.lt.s32.totalorder %v3160, 384
      %vm3193 = vcmp.lt.s32.totalorder %v3161, 384
      %vm3194 = vcmp.lt.s32.totalorder %v3162, 384
      %vm3195 = vcmp.lt.s32.totalorder %v3163, 384
      %vm3196 = vcmp.lt.s32.totalorder %v3164, 384
      %vm3197 = vcmp.lt.s32.totalorder %v3165, 384
      %vm3198 = vcmp.lt.s32.totalorder %v3166, 384
      %vm3199 = vcmp.lt.s32.totalorder %v3167, 384
      %vm3200 = vcmp.lt.s32.totalorder %v3168, 384
      %vm3201 = vcmp.lt.s32.totalorder %v3169, 384
      %vm3202 = vcmp.lt.s32.totalorder %v3170, 384
      %vm3203 = vcmp.lt.s32.totalorder %v3171, 384
      %vm3204 = vcmp.lt.s32.totalorder %v3172, 384
      %vm3205 = vcmp.lt.s32.totalorder %v3173, 384
      %vm3206 = vcmp.lt.s32.totalorder %v3174, 384
      %vm3207 = vcmp.lt.s32.totalorder %v3175, 384
      %vm3208 = vcmp.lt.s32.totalorder %v3176, 384
      %vm3209 = vcmp.lt.s32.totalorder %v3177, 384
      %vm3210 = vcmp.lt.s32.totalorder %v3178, 384
      %vm3211 = vcmp.lt.s32.totalorder %v3179, 384
      %vm3212 = vcmp.lt.s32.totalorder %v3180, 384
      %vm3213 = vcmp.lt.s32.totalorder %v3181, 384
      %vm3214 = vcmp.lt.s32.totalorder %v3182, 384
      %vm3215 = vcmp.lt.s32.totalorder %v3183, 384
      %vm3216 = vcmp.lt.s32.totalorder %v3184, 384
      %vm3217 = vcmp.lt.s32.totalorder %v3185, 384
      %vm3218 = vcmp.lt.s32.totalorder %v3186, 384
      %vm3219 = vcmp.lt.s32.totalorder %v3187, 384
      %vm3220 = vcmp.lt.s32.totalorder %v3188, 384
      %vm3221 = vcmp.lt.s32.totalorder %v3189, 384
      %v3222 = vsel %vm3190, 1, 0
      %v3223 = vsel %vm3191, 1, 0
      %v3224 = vsel %vm3192, 1, 0
      %v3225 = vsel %vm3193, 1, 0
      %v3226 = vsel %vm3194, 1, 0
      %v3227 = vsel %vm3195, 1, 0
      %v3228 = vsel %vm3196, 1, 0
      %v3229 = vsel %vm3197, 1, 0
      %v3230 = vsel %vm3198, 1, 0
      %v3231 = vsel %vm3199, 1, 0
      %v3232 = vsel %vm3200, 1, 0
      %v3233 = vsel %vm3201, 1, 0
      %v3234 = vsel %vm3202, 1, 0
      %v3235 = vsel %vm3203, 1, 0
      %v3236 = vsel %vm3204, 1, 0
      %v3237 = vsel %vm3205, 1, 0
      %v3238 = vsel %vm3206, 1, 0
      %v3239 = vsel %vm3207, 1, 0
      %v3240 = vsel %vm3208, 1, 0
      %v3241 = vsel %vm3209, 1, 0
      %v3242 = vsel %vm3210, 1, 0
      %v3243 = vsel %vm3211, 1, 0
      %v3244 = vsel %vm3212, 1, 0
      %v3245 = vsel %vm3213, 1, 0
      %v3246 = vsel %vm3214, 1, 0
      %v3247 = vsel %vm3215, 1, 0
      %v3248 = vsel %vm3216, 1, 0
      %v3249 = vsel %vm3217, 1, 0
      %v3250 = vsel %vm3218, 1, 0
      %v3251 = vsel %vm3219, 1, 0
      %v3252 = vsel %vm3220, 1, 0
      %v3253 = vsel %vm3221, 1, 0
      %v3254 = vcvt.s32.f32 %v3222
      %v3255 = vcvt.s32.f32 %v3223
      %v3256 = vcvt.s32.f32 %v3224
      %v3257 = vcvt.s32.f32 %v3225
      %v3258 = vcvt.s32.f32 %v3226
      %v3259 = vcvt.s32.f32 %v3227
      %v3260 = vcvt.s32.f32 %v3228
      %v3261 = vcvt.s32.f32 %v3229
      %v3262 = vcvt.s32.f32 %v3230
      %v3263 = vcvt.s32.f32 %v3231
      %v3264 = vcvt.s32.f32 %v3232
      %v3265 = vcvt.s32.f32 %v3233
      %v3266 = vcvt.s32.f32 %v3234
      %v3267 = vcvt.s32.f32 %v3235
      %v3268 = vcvt.s32.f32 %v3236
      %v3269 = vcvt.s32.f32 %v3237
      %v3270 = vcvt.s32.f32 %v3238
      %v3271 = vcvt.s32.f32 %v3239
      %v3272 = vcvt.s32.f32 %v3240
      %v3273 = vcvt.s32.f32 %v3241
      %v3274 = vcvt.s32.f32 %v3242
      %v3275 = vcvt.s32.f32 %v3243
      %v3276 = vcvt.s32.f32 %v3244
      %v3277 = vcvt.s32.f32 %v3245
      %v3278 = vcvt.s32.f32 %v3246
      %v3279 = vcvt.s32.f32 %v3247
      %v3280 = vcvt.s32.f32 %v3248
      %v3281 = vcvt.s32.f32 %v3249
      %v3282 = vcvt.s32.f32 %v3250
      %v3283 = vcvt.s32.f32 %v3251
      %v3284 = vcvt.s32.f32 %v3252
      %v3285 = vcvt.s32.f32 %v3253
      %v3286 = vunpack.c.l.bf16 %v2963
      %v3287 = vunpack.c.h.bf16 %v2963
      %v3288 = vunpack.c.l.bf16 %v2964
      %v3289 = vunpack.c.h.bf16 %v2964
      %v3290 = vunpack.c.l.bf16 %v2965
      %v3291 = vunpack.c.h.bf16 %v2965
      %v3292 = vunpack.c.l.bf16 %v2966
      %v3293 = vunpack.c.h.bf16 %v2966
      %v3294 = vunpack.c.l.bf16 %v2967
      %v3295 = vunpack.c.h.bf16 %v2967
      %v3296 = vunpack.c.l.bf16 %v2968
      %v3297 = vunpack.c.h.bf16 %v2968
      %v3298 = vunpack.c.l.bf16 %v2969
      %v3299 = vunpack.c.h.bf16 %v2969
      %v3300 = vunpack.c.l.bf16 %v2970
      %v3301 = vunpack.c.h.bf16 %v2970
      %v3302 = vunpack.c.l.bf16 %v2971
      %v3303 = vunpack.c.h.bf16 %v2971
      %v3304 = vunpack.c.l.bf16 %v2972
      %v3305 = vunpack.c.h.bf16 %v2972
      %v3306 = vunpack.c.l.bf16 %v2973
      %v3307 = vunpack.c.h.bf16 %v2973
      %v3308 = vunpack.c.l.bf16 %v2974
      %v3309 = vunpack.c.h.bf16 %v2974
      %v3310 = vunpack.c.l.bf16 %v2975
      %v3311 = vunpack.c.h.bf16 %v2975
      %v3312 = vunpack.c.l.bf16 %v2976
      %v3313 = vunpack.c.h.bf16 %v2976
      %v3314 = vunpack.c.l.bf16 %v2977
      %v3315 = vunpack.c.h.bf16 %v2977
      %v3316 = vunpack.c.l.bf16 %v2978
      %v3317 = vunpack.c.h.bf16 %v2978
      %v3318 = vmul.f32 %v3286, %v3254
      %v3319 = vmul.f32 %v3287, %v3255
      %v3320 = vmul.f32 %v3288, %v3256
      %v3321 = vmul.f32 %v3289, %v3257
      %v3322 = vmul.f32 %v3290, %v3258
      %v3323 = vmul.f32 %v3291, %v3259
      %v3324 = vmul.f32 %v3292, %v3260
      %v3325 = vmul.f32 %v3293, %v3261
      %v3326 = vmul.f32 %v3294, %v3262
      %v3327 = vmul.f32 %v3295, %v3263
      %v3328 = vmul.f32 %v3296, %v3264
      %v3329 = vmul.f32 %v3297, %v3265
      %v3330 = vmul.f32 %v3298, %v3266
      %v3331 = vmul.f32 %v3299, %v3267
      %v3332 = vmul.f32 %v3300, %v3268
      %v3333 = vmul.f32 %v3301, %v3269
      %v3334 = vmul.f32 %v3302, %v3270
      %v3335 = vmul.f32 %v3303, %v3271
      %v3336 = vmul.f32 %v3304, %v3272
      %v3337 = vmul.f32 %v3305, %v3273
      %v3338 = vmul.f32 %v3306, %v3274
      %v3339 = vmul.f32 %v3307, %v3275
      %v3340 = vmul.f32 %v3308, %v3276
      %v3341 = vmul.f32 %v3309, %v3277
      %v3342 = vmul.f32 %v3310, %v3278
      %v3343 = vmul.f32 %v3311, %v3279
      %v3344 = vmul.f32 %v3312, %v3280
      %v3345 = vmul.f32 %v3313, %v3281
      %v3346 = vmul.f32 %v3314, %v3282
      %v3347 = vmul.f32 %v3315, %v3283
      %v3348 = vmul.f32 %v3316, %v3284
      %v3349 = vmul.f32 %v3317, %v3285
      %v3350 = vadd.f32 %v3318, %v3319
      %v3351 = vadd.f32 %v3350, %v3320
      %v3352 = vadd.f32 %v3351, %v3321
      %v3353 = vadd.f32 %v3352, %v3322
      %v3354 = vadd.f32 %v3353, %v3323
      %v3355 = vadd.f32 %v3354, %v3324
      %v3356 = vadd.f32 %v3355, %v3325
      %v3357 = vadd.f32 %v3356, %v3326
      %v3358 = vadd.f32 %v3357, %v3327
      %v3359 = vadd.f32 %v3358, %v3328
      %v3360 = vadd.f32 %v3359, %v3329
      %v3361 = vadd.f32 %v3360, %v3330
      %v3362 = vadd.f32 %v3361, %v3331
      %v3363 = vadd.f32 %v3362, %v3332
      %v3364 = vadd.f32 %v3363, %v3333
      %v3365 = vadd.f32 %v3364, %v3334
      %v3366 = vadd.f32 %v3365, %v3335
      %v3367 = vadd.f32 %v3366, %v3336
      %v3368 = vadd.f32 %v3367, %v3337
      %v3369 = vadd.f32 %v3368, %v3338
      %v3370 = vadd.f32 %v3369, %v3339
      %v3371 = vadd.f32 %v3370, %v3340
      %v3372 = vadd.f32 %v3371, %v3341
      %v3373 = vadd.f32 %v3372, %v3342
      %v3374 = vadd.f32 %v3373, %v3343
      %v3375 = vadd.f32 %v3374, %v3344
      %v3376 = vadd.f32 %v3375, %v3345
      %v3377 = vadd.f32 %v3376, %v3346
      %v3378 = vadd.f32 %v3377, %v3347
      %v3379 = vadd.f32 %v3378, %v3348
      %v3380 = vadd.f32 %v3379, %v3349
      %v3381 = vrot.slane %v3380, 4
      %v3382 = vadd.f32 %v3380, %v3381
      %v3383 = vrot.slane %v3382, 2
      %v3384 = vadd.f32 %v3382, %v3383
      %v3385 = vrot.slane %v3384, 1
      %v3386 = vadd.f32 %v3384, %v3385
      %v3387 = vmul.f32 %v3318, %v3318
      %v3388 = vmul.f32 %v3319, %v3319
      %v3389 = vmul.f32 %v3320, %v3320
      %v3390 = vmul.f32 %v3321, %v3321
      %v3391 = vmul.f32 %v3322, %v3322
      %v3392 = vmul.f32 %v3323, %v3323
      %v3393 = vmul.f32 %v3324, %v3324
      %v3394 = vmul.f32 %v3325, %v3325
      %v3395 = vmul.f32 %v3326, %v3326
      %v3396 = vmul.f32 %v3327, %v3327
      %v3397 = vmul.f32 %v3328, %v3328
      %v3398 = vmul.f32 %v3329, %v3329
      %v3399 = vmul.f32 %v3330, %v3330
      %v3400 = vmul.f32 %v3331, %v3331
      %v3401 = vmul.f32 %v3332, %v3332
      %v3402 = vmul.f32 %v3333, %v3333
      %v3403 = vmul.f32 %v3334, %v3334
      %v3404 = vmul.f32 %v3335, %v3335
      %v3405 = vmul.f32 %v3336, %v3336
      %v3406 = vmul.f32 %v3337, %v3337
      %v3407 = vmul.f32 %v3338, %v3338
      %v3408 = vmul.f32 %v3339, %v3339
      %v3409 = vmul.f32 %v3340, %v3340
      %v3410 = vmul.f32 %v3341, %v3341
      %v3411 = vmul.f32 %v3342, %v3342
      %v3412 = vmul.f32 %v3343, %v3343
      %v3413 = vmul.f32 %v3344, %v3344
      %v3414 = vmul.f32 %v3345, %v3345
      %v3415 = vmul.f32 %v3346, %v3346
      %v3416 = vmul.f32 %v3347, %v3347
      %v3417 = vmul.f32 %v3348, %v3348
      %v3418 = vmul.f32 %v3349, %v3349
      %v3419 = vadd.f32 %v3387, %v3388
      %v3420 = vadd.f32 %v3419, %v3389
      %v3421 = vadd.f32 %v3420, %v3390
      %v3422 = vadd.f32 %v3421, %v3391
      %v3423 = vadd.f32 %v3422, %v3392
      %v3424 = vadd.f32 %v3423, %v3393
      %v3425 = vadd.f32 %v3424, %v3394
      %v3426 = vadd.f32 %v3425, %v3395
      %v3427 = vadd.f32 %v3426, %v3396
      %v3428 = vadd.f32 %v3427, %v3397
      %v3429 = vadd.f32 %v3428, %v3398
      %v3430 = vadd.f32 %v3429, %v3399
      %v3431 = vadd.f32 %v3430, %v3400
      %v3432 = vadd.f32 %v3431, %v3401
      %v3433 = vadd.f32 %v3432, %v3402
      %v3434 = vadd.f32 %v3433, %v3403
      %v3435 = vadd.f32 %v3434, %v3404
      %v3436 = vadd.f32 %v3435, %v3405
      %v3437 = vadd.f32 %v3436, %v3406
      %v3438 = vadd.f32 %v3437, %v3407
      %v3439 = vadd.f32 %v3438, %v3408
      %v3440 = vadd.f32 %v3439, %v3409
      %v3441 = vadd.f32 %v3440, %v3410
      %v3442 = vadd.f32 %v3441, %v3411
      %v3443 = vadd.f32 %v3442, %v3412
      %v3444 = vadd.f32 %v3443, %v3413
      %v3445 = vadd.f32 %v3444, %v3414
      %v3446 = vadd.f32 %v3445, %v3415
      %v3447 = vadd.f32 %v3446, %v3416
      %v3448 = vadd.f32 %v3447, %v3417
      %v3449 = vadd.f32 %v3448, %v3418
      %v3450 = vrot.slane %v3449, 4
      %v3451 = vadd.f32 %v3449, %v3450
      %v3452 = vrot.slane %v3451, 2
      %v3453 = vadd.f32 %v3451, %v3452
      %v3454 = vrot.slane %v3453, 1
      %v3455 = vadd.f32 %v3453, %v3454
      %vm3456 = vcmask 1040384
      %v3457 = vsel %vm3456, %v3386, %v3455
      %vm3458 = vcmask 1041408
      %v3459 = vsel %vm3458, %v3457, 0.0
      %3460 = vst [vmem:[%s404] sm:$0xff] %v3459
      %s3461 = smul.u32 32, %s22
      %p3462 = scmp.lt.s32.totalorder %s3461, 63
      %s3463 = scalar_select %p3462, %s3461, 63
      %s3464 = smul.addr %s3463, 2
      %s3465 = smul.addr %s3464, 8
      %s3466 = scalar_lea.vmem %s7, %s3465
      %s3467 = smul.u32 32, %s22
      %p3468 = scmp.lt.s32.totalorder %s3467, 63
      %s3469 = scalar_select %p3468, %s3467, 63
      %s3470 = smul.addr %s3469, 8
      %s3471 = scalar_lea.vmem %s8, %s3470
      %s3472 = smul.u32 32, %s22
      %p3473 = scmp.lt.s32.totalorder %s3472, 63
      %s3474 = scalar_select %p3473, %s3472, 63
      %s3475 = smul.addr %s3474, 4
      %s3476 = scalar_lea.vmem %s9, %s3475
      %p3477 = scmp.lt.s32.totalorder %s22, 1
      %s3478 = scalar_select %p3477, %s22, 1
      %s3479 = smul.addr %s3478, 8
      %s3480 = scalar_lea.vmem %s10, %s3479
      // Predicated region
      $region49: #{deepae_forward.2} parent=47 // pred_check
        %p3481 = pneg %p192
      $region50: #{deepae_forward.2} parent=47 // pred_check_branch
        %3483 = sbr.rel (%p3481) target = $region52
      $region51: #{deepae_forward.2} parent=47 // pred_region
        %s3484 = smul.u32 32, %s22
      $region52: #{deepae_forward.2} parent=47 // pred_fallthru
        _
      // Predicated region
      $region53: #{deepae_forward.2} parent=47 // pred_check
        %p3485 = pneg %p218
      $region54: #{deepae_forward.2} parent=47 // pred_check_branch
        %3487 = sbr.rel (%p3485) target = $region56
      $region55: #{deepae_forward.2} parent=47 // pred_region
        %s3488 = smul.u32 32, %s22
      $region56: #{deepae_forward.2} parent=47 // pred_fallthru
        _
      // Predicated region
      $region57: #{deepae_forward.2} parent=47 // pred_check
        %p3489 = pneg %p244
      $region58: #{deepae_forward.2} parent=47 // pred_check_branch
        %3491 = sbr.rel (%p3489) target = $region60
      $region59: #{deepae_forward.2} parent=47 // pred_region
        %s3492 = smul.u32 32, %s22
      $region60: #{deepae_forward.2} parent=47 // pred_fallthru
        _
      // Predicated region
      $region61: #{deepae_forward.2} parent=47 // pred_check
        %p3493 = pneg %p270
      $region62: #{deepae_forward.2} parent=47 // pred_check_branch
        %3495 = sbr.rel (%p3493) target = $region64
      $region63: #{deepae_forward.2} parent=47 // pred_region
        _
      $region64: #{deepae_forward.2} parent=47 // pred_fallthru
        _
    $region48: #{deepae_forward.2} parent=5 // pred_fallthru
      _
    %p3496 = scmp.le.s32.totalorder 2, %s17
    // Predicated region
    $region65: #{deepae_forward.2} parent=5 // pred_check
      %p3497 = pneg %p3496
    $region66: #{deepae_forward.2} parent=5 // pred_check_branch
      %3499 = sbr.rel (%p3497) target = $region68
    $region67: #{deepae_forward.2} parent=5 // pred_region
      %s3500 = ssub.s32 %s17, 2
      // Predicated region
      $region69: #{deepae_forward.2} parent=67 // pred_check
        %p3501 = pneg %p198
      $region70: #{deepae_forward.2} parent=67 // pred_check_branch
        %3503 = sbr.rel (%p3501) target = $region72
      $region71: #{deepae_forward.2} parent=67 // pred_region
        %s3504 = smul.u32 32, %s23
        %p3505 = scmp.lt.s32.totalorder %s3504, 63
        %s3506 = scalar_select %p3505, %s3504, 63
        %s3507 = smul.addr %s3506, 2
        %s3508 = smul.addr %s3507, 8
        %s3509 = scalar_lea.vmem %s7, %s3508
      $region72: #{deepae_forward.2} parent=67 // pred_fallthru
        _
      // Predicated region
      $region73: #{deepae_forward.2} parent=67 // pred_check
        %p3510 = pneg %p224
      $region74: #{deepae_forward.2} parent=67 // pred_check_branch
        %3512 = sbr.rel (%p3510) target = $region76
      $region75: #{deepae_forward.2} parent=67 // pred_region
        %s3513 = smul.u32 32, %s23
        %p3514 = scmp.lt.s32.totalorder %s3513, 63
        %s3515 = scalar_select %p3514, %s3513, 63
        %s3516 = smul.addr %s3515, 8
        %s3517 = scalar_lea.vmem %s8, %s3516
      $region76: #{deepae_forward.2} parent=67 // pred_fallthru
        _
      // Predicated region
      $region77: #{deepae_forward.2} parent=67 // pred_check
        %p3518 = pneg %p250
      $region78: #{deepae_forward.2} parent=67 // pred_check_branch
        %3520 = sbr.rel (%p3518) target = $region80
      $region79: #{deepae_forward.2} parent=67 // pred_region
        %s3521 = smul.u32 32, %s23
        %p3522 = scmp.lt.s32.totalorder %s3521, 63
        %s3523 = scalar_select %p3522, %s3521, 63
        %s3524 = smul.addr %s3523, 4
        %s3525 = scalar_lea.vmem %s9, %s3524
      $region80: #{deepae_forward.2} parent=67 // pred_fallthru
        _
      // Predicated region
      $region81: #{deepae_forward.2} parent=67 // pred_check
        %p3526 = pneg %p276
      $region82: #{deepae_forward.2} parent=67 // pred_check_branch
        %3528 = sbr.rel (%p3526) target = $region84
      $region83: #{deepae_forward.2} parent=67 // pred_region
        %p3529 = scmp.lt.s32.totalorder %s23, 1
        %s3530 = scalar_select %p3529, %s23, 1
        %s3531 = smul.addr %s3530, 8
        %s3532 = scalar_lea.vmem %s10, %s3531
      $region84: #{deepae_forward.2} parent=67 // pred_fallthru
        _
    $region68: #{deepae_forward.2} parent=5 // pred_fallthru
      _
  $region6: #{deepae_forward.2} parent=0 // loop_footer
    %s21 = sadd.s32 1, %s17
  $region7: #{deepae_forward.2} parent=0 // loop_footer_branch
    %16 = sbr.rel target = $region3
  $region8: #{deepae_forward.2} parent=0 // loop_exit
    _

</llo_original>
